<compile_context>
chip_gen: v6e
topology: v6e:2x2x1
jax: 0.10.0
libtpu: 0.0.40
codegen_flags: <defaults>
</compile_context>

<pallas_src>
import functools

import jax
import jax.numpy as jnp
import numpy as np
from jax import lax
from jax.experimental import pallas as pl
from jax.experimental.pallas import tpu as pltpu


def _round_up(v, m):
    return ((v + m - 1) // m) * m


def _silu_kernel(v):
    # exp on the EUP; approx reciprocal also on the EUP (vrcp) -> frees VALU.
    return v * pl.reciprocal(1.0 + jnp.exp(-v), approx=True)


def _silu_ref(v):
    return v * (1.0 / (1.0 + jnp.exp(-v)))


# ------------------------------- Pallas kernel -------------------------------

def ghostconv_kernel(x_main_ref,   # (tile_h, W+4, c1p) bf16, rows rt*th .. of padded input
                     x_halo_ref,   # (4, W+4, c1p)      bf16, next 4 rows (bottom halo)
                     w1_ref,       # (c1p, cp)          bf16, cv1 1x1 weights (BN folded)
                     b1_ref,       # (1, cp)            f32,  cv1 folded BN offset
                     dw_ref,       # (25, cp)           f32,  cv2 depthwise 5x5 (BN folded)
                     b2_ref,       # (1, cp)            f32,  cv2 folded BN offset
                     out_ref,      # (tile_h, W, 2*cp)  bf16, concat([y, cv2(y)])
                     y_scr,        # VMEM (tile_h+4, W+4, cp) bf16
                     *, img_h):
    th, w4, c1p = x_main_ref.shape
    halo = x_halo_ref.shape[0]
    th4 = th + halo
    w = w4 - 4
    cp = w1_ref.shape[1]

    # Image row corresponding to extended-window row 0 (window = main ++ halo).
    row0 = pl.program_id(1) * th - 2

    def cv1(x_block, e0):
        """1x1 conv + folded BN + SiLU on one row block of the extended window."""
        n_rows = x_block.shape[0]
        y = jnp.dot(x_block.reshape(n_rows * w4, c1p), w1_ref[...],
                    preferred_element_type=jnp.float32) + b1_ref[0]
        y = _silu_kernel(y).reshape(n_rows, w4, cp)
        # cv2's zero 'SAME' padding: rows outside the image must be zero.
        # Row-only mask (n_rows,1,1); halo columns are zeroed statically below.
        rows = lax.broadcasted_iota(jnp.int32, (n_rows, 1, 1), 0) + (row0 + e0)
        return jnp.where((rows >= 0) & (rows < img_h), y, 0.0)

    # cv1 recomputed over the 2-row halos; scratch fully overwritten each step.
    y_scr[:th] = cv1(x_main_ref[...], 0).astype(y_scr.dtype)
    y_scr[th:] = cv1(x_halo_ref[...], th).astype(y_scr.dtype)
    # Static zeroing of the +-2 halo columns (compile-time-static slices).
    y_scr[:, :2, :] = jnp.zeros((th4, 2, cp), y_scr.dtype)
    y_scr[:, w4 - 2:, :] = jnp.zeros((th4, 2, cp), y_scr.dtype)

    # cv2: 5x5 depthwise conv + folded BN + SiLU (no channel contraction).
    # One full-width window load per dy, dx taps as value slices, 5 independent
    # per-dy accumulators tree-summed at the end (f32 accumulation).
    accs = []
    for dy in range(5):
        ywin = y_scr[dy:dy + th, :, :]                 # (th, W+4, cp) bf16
        a = ywin[:, 0:w, :] * dw_ref[dy * 5]           # bf16 * f32 -> f32
        for dx in range(1, 5):
            a = a + ywin[:, dx:dx + w, :] * dw_ref[dy * 5 + dx]
        accs.append(a)
    acc = (accs[0] + accs[1]) + (accs[2] + accs[3]) + accs[4]
    y2 = _silu_kernel(acc + b2_ref[0])

    # GhostConv output: concat([y, cv2(y)], channel). 2*cp lanes -> unmasked vst.
    out_ref[:, :, :cp] = y_scr[2:2 + th, 2:2 + w, :]
    out_ref[:, :, cp:] = y2.astype(out_ref.dtype)


# --------------------------------- wrapper -----------------------------------

def ghost_conv(x_nchw, p, *, tile_h=32):
    """x_nchw: (N, c1, H, W) -> (N, c2, H, W) bf16."""
    c1p, cp, c_ = p['c1p'], p['cp'], p['c_']

    # NCHW -> NHWC; cast to bf16 immediately (before padding) to halve every
    # downstream wrapper HBM pass.
    x = jnp.transpose(x_nchw, (0, 2, 3, 1)).astype(jnp.bfloat16)
    N, H, W, c1 = x.shape

    assert tile_h % 4 == 0, "tile_h must be a multiple of 4 (halo block indexing)"
    tile_h = max(4, min(tile_h, _round_up(H, 4)))
    n_tiles = -(-H // tile_h)
    Hp = n_tiles * tile_h

    # Single padded NHWC tensor stays in HBM (no row-overlapped tile copies):
    # +-2 halo columns, 2 halo rows on top, (Hp - H + 2) rows bottom, lane-pad
    # channels to c1p (padded lanes are zero and never leak into real channels).
    xp = jnp.pad(x, ((0, 0), (2, Hp - H + 2), (2, 2), (0, c1p - c1)))

    # The 2-row halo is expressed with TWO BlockSpecs over the SAME padded array:
    # a tile_h-row main block at block index rt, plus a 4-row bottom-halo block
    # at element offset (rt+1)*tile_h (block index (rt+1)*tile_h/4).
    halo_idx = tile_h // 4

    kernel = functools.partial(ghostconv_kernel, img_h=H)

    # Explicit per-step VMEM budget (double-buffered ins/outs + scratch); cap
    # below v7x's 64 MiB physical VMEM so larger tile_h stays safe per gen.
    est = (2 * tile_h * (W + 4) * c1p * 2          # main input, bf16, 2 buffers
           + 2 * 4 * (W + 4) * c1p * 2             # halo input, bf16, 2 buffers
           + 2 * (c1p * cp * 2 + 27 * cp * 4)      # weights / offsets
           + 2 * tile_h * W * 2 * cp * 2           # output, bf16, 2 buffers
           + (tile_h + 4) * (W + 4) * cp * 2)      # bf16 activation scratch
    vmem_limit = int(min(max(est + (8 << 20), 32 << 20), 56 << 20))

    out = pl.pallas_call(
        kernel,
        out_shape=jax.ShapeDtypeStruct((N, Hp, W, 2 * cp), jnp.bfloat16),
        grid_spec=pltpu.PrefetchScalarGridSpec(
            num_scalar_prefetch=0,
            grid=(N, n_tiles),
            in_specs=[
                pl.BlockSpec((None, tile_h, W + 4, c1p),
                             lambda n, rt: (n, rt, 0, 0)),
                pl.BlockSpec((None, 4, W + 4, c1p),
                             lambda n, rt: (n, (rt + 1) * halo_idx, 0, 0)),
                pl.BlockSpec((c1p, cp), lambda n, rt: (0, 0)),
                pl.BlockSpec((1, cp), lambda n, rt: (0, 0)),
                pl.BlockSpec((25, cp), lambda n, rt: (0, 0)),
                pl.BlockSpec((1, cp), lambda n, rt: (0, 0)),
            ],
            out_specs=pl.BlockSpec((None, tile_h, W, 2 * cp),
                                   lambda n, rt: (n, rt, 0, 0)),
            scratch_shapes=[pltpu.VMEM((tile_h + 4, W + 4, cp), jnp.bfloat16)],
        ),
        compiler_params=pltpu.CompilerParams(
            dimension_semantics=("parallel", "parallel"),
            vmem_limit_bytes=vmem_limit),
    )(xp, xp, p['w1'], p['b1'], p['dw'], p['b2'])

    if Hp > H:
        out = out[:, :H]                      # drop bottom row padding
    if cp == c_:
        res = out                             # no padded lanes -> already [y, y2]
    else:
        res = jnp.concatenate([out[..., :c_], out[..., cp:cp + c_]], axis=-1)
    # NHWC -> NCHW to match the PyTorch module (skip if feeding an NHWC kernel).
    return jnp.transpose(res, (0, 3, 1, 2))


# ------------------------ parameter construction (glue) ----------------------

def _fold_bn(gamma, beta, mean, var, eps=1e-5):
    s = gamma / jnp.sqrt(var + eps)
    return s, beta - mean * s


def make_params(key, c1, c2, lane=128):
    """GhostConv(c1, c2, k=1, s=1): cv1 = Conv(c1, c_, 1); cv2 = Conv(c_, c_, 5, g=c_)."""
    c_ = c2 // 2
    c1p = _round_up(c1, lane)
    cp = _round_up(c_, lane)
    ks = jax.random.split(key, 4)

    def bn(k, c):
        k1, k2, k3, k4 = jax.random.split(k, 4)
        gamma = (1.0 + 0.1 * jax.random.normal(k1, (c,))).astype(jnp.float32)
        beta = (0.1 * jax.random.normal(k2, (c,))).astype(jnp.float32)
        mean = (0.1 * jax.random.normal(k3, (c,))).astype(jnp.float32)
        var = jax.random.uniform(k4, (c,), minval=0.5, maxval=1.5).astype(jnp.float32)
        return gamma, beta, mean, var

    # cv1: 1x1 conv (no bias) + BN  -> fold into (c1, c_) weight + offset.
    w1 = (0.3 * jax.random.normal(ks[0], (c1, c_))).astype(jnp.float32)
    s1, b1 = _fold_bn(*bn(ks[1], c_))
    w1f = w1 * s1[None, :]

    # cv2: 5x5 depthwise conv (groups=c_, no bias) + BN -> fold into (5,5,c_) + offset.
    dw = (0.3 * jax.random.normal(ks[2], (5, 5, c_))).astype(jnp.float32)
    s2, b2 = _fold_bn(*bn(ks[3], c_))
    dwf = dw * s2[None, None, :]

    # NOTE: padding c_=8 to cp=128 means most lanes are zero padding for this
    # small test shape; real deployments should pack heads/columns into lanes.
    return {
        'c_': c_, 'cp': cp, 'c1p': c1p,
        'w1': jnp.pad(w1f, ((0, c1p - c1), (0, cp - c_))).astype(jnp.bfloat16),
        'b1': jnp.pad(b1, (0, cp - c_))[None, :].astype(jnp.float32),
        'dw': jnp.pad(dwf.reshape(25, c_), ((0, 0), (0, cp - c_))).astype(jnp.float32),
        'b2': jnp.pad(b2, (0, cp - c_))[None, :].astype(jnp.float32),
        # unpadded f32 copies for the pure-JAX reference
        'ref_w1': w1f, 'ref_b1': b1, 'ref_dw': dwf, 'ref_b2': b2,
    }


# ------------------------------ pure-JAX reference ---------------------------

def reference_forward(x_nchw, p):
    x = jnp.transpose(x_nchw, (0, 2, 3, 1)).astype(jnp.float32)
    # Mirror the kernel's deliberate precision choices (bf16 MXU operands and a
    # bf16 activation between cv1 and cv2) so the comparison isolates
    # kernel-structure errors from the precision design.
    xq = x.astype(jnp.bfloat16).astype(jnp.float32)
    wq = p['ref_w1'].astype(jnp.bfloat16).astype(jnp.float32)
    y = _silu_ref(jnp.einsum('nhwc,cd->nhwd', xq, wq,
                             precision=lax.Precision.HIGHEST) + p['ref_b1'])
    y = y.astype(jnp.bfloat16).astype(jnp.float32)         # bf16 scratch mirror
    # cv2: 5x5 depthwise conv (groups = c_), zero 'SAME' padding, f32.
    rhs = p['ref_dw'].reshape(5, 5, 1, -1)                  # HWIO with I = 1
    conv = lax.conv_general_dilated(
        y, rhs, (1, 1), 'SAME',
        dimension_numbers=('NHWC', 'HWIO', 'NHWC'),
        feature_group_count=p['c_'],
        precision=lax.Precision.HIGHEST)
    y2 = _silu_ref(conv + p['ref_b2'])
    out = jnp.concatenate([y, y2], axis=-1)
    return jnp.transpose(out, (0, 3, 1, 2))


if __name__ == "__main__":
    key = jax.random.PRNGKey(0)
    kx, kp = jax.random.split(key)

    # GhostConv(c1=8, c2=16) -> c_ = 8; tile_h=8 gives 2 row tiles so the
    # cross-tile halo BlockSpec path is actually exercised.
    N, c1, c2, H, W = 2, 8, 16, 16, 16
    x = jax.random.normal(kx, (N, c1, H, W), dtype=jnp.float32)
    params = make_params(kp, c1, c2)

    out = jax.block_until_ready(ghost_conv(x, params, tile_h=8))
    ref = jax.block_until_ready(reference_forward(x, params))

    # Tolerance covers the bf16 output/scratch rounding and the EUP approx
    # reciprocal in SiLU (both deliberate performance choices).
    np.testing.assert_allclose(np.asarray(out.astype(jnp.float32)),
                               np.asarray(ref), atol=3e-2, rtol=3e-2)
    print("KERNEL_OK")
</pallas_src>

<mosaic_0001>
module attributes {stable_mosaic.version = 11 : i64} {
  func.func @ghostconv_kernel(%arg0: i32, %arg1: i32, %arg2: memref<1x8x20x128xbf16, #tpu.memory_space<vmem>>, %arg3: memref<1x4x20x128xbf16, #tpu.memory_space<vmem>>, %arg4: memref<128x128xbf16, #tpu.memory_space<vmem>>, %arg5: memref<1x128xf32, #tpu.memory_space<vmem>>, %arg6: memref<25x128xf32, #tpu.memory_space<vmem>>, %arg7: memref<1x128xf32, #tpu.memory_space<vmem>>, %arg8: memref<1x8x16x256xbf16, #tpu.memory_space<vmem>>, %arg9: memref<12x20x128xbf16, #tpu.memory_space<vmem>>) attributes {dimension_semantics = [#tpu.dimension_semantics<parallel>, #tpu.dimension_semantics<parallel>], iteration_bounds = array<i64: 2, 2>, scalar_prefetch = 0 : i64, scratch_operands = 1 : i64, tpu.core_type = #tpu.core_type<tc>, window_params = [{transform_indices = @transform_0, window_bounds = array<i64: 1, 8, 20, 128>}, {transform_indices = @transform_1, window_bounds = array<i64: 1, 4, 20, 128>}, {pipeline_mode = #tpu.pipeline_mode<synchronous>, transform_indices = @transform_2, window_bounds = array<i64: 128, 128>}, {pipeline_mode = #tpu.pipeline_mode<synchronous>, transform_indices = @transform_3, window_bounds = array<i64: 1, 128>}, {pipeline_mode = #tpu.pipeline_mode<synchronous>, transform_indices = @transform_4, window_bounds = array<i64: 25, 128>}, {pipeline_mode = #tpu.pipeline_mode<synchronous>, transform_indices = @transform_5, window_bounds = array<i64: 1, 128>}, {transform_indices = @transform_6, window_bounds = array<i64: 1, 8, 16, 256>}]} {
    %c8_i32 = arith.constant 8 : i32
    %0 = arith.muli %arg1, %c8_i32 : i32
    %c2_i32 = arith.constant 2 : i32
    %1 = arith.subi %0, %c2_i32 : i32
    %c0 = arith.constant 0 : index
    %c0_0 = arith.constant 0 : index
    %c0_1 = arith.constant 0 : index
    %c0_2 = arith.constant 0 : index
    %2 = vector.load %arg2[%c0, %c0_0, %c0_1, %c0_2] : memref<1x8x20x128xbf16, #tpu.memory_space<vmem>>, vector<1x8x20x128xbf16>
    %3 = vector.shape_cast %2 : vector<1x8x20x128xbf16> to vector<8x20x128xbf16>
    %4 = vector.shape_cast %3 : vector<8x20x128xbf16> to vector<160x128xbf16>
    %c0_3 = arith.constant 0 : index
    %c0_4 = arith.constant 0 : index
    %5 = vector.load %arg4[%c0_3, %c0_4] : memref<128x128xbf16, #tpu.memory_space<vmem>>, vector<128x128xbf16>
    %cst = arith.constant dense<0.000000e+00> : vector<160x128xf32>
    %6 = tpu.matmul %4, %5, %cst {dimension_numbers = #tpu.dot_dimension_numbers<[1], [0], [0], [1], [0, 0, 1, 1], [], []>} : vector<160x128xbf16>, vector<128x128xbf16>, vector<160x128xf32> -> vector<160x128xf32>
    %c0_5 = arith.constant 0 : index
    %c0_6 = arith.constant 0 : index
    %7 = vector.load %arg5[%c0_5, %c0_6] : memref<1x128xf32, #tpu.memory_space<vmem>>, vector<1x128xf32>
    %8 = vector.shape_cast %7 : vector<1x128xf32> to vector<128xf32>
    %9 = vector.shape_cast %8 : vector<128xf32> to vector<1x128xf32>
    %10 = vector.broadcast %9 : vector<1x128xf32> to vector<160x128xf32>
    %11 = arith.addf %6, %10 : vector<160x128xf32>
    %cst_7 = arith.constant 0.000000e+00 : f32
    %12 = vector.broadcast %cst_7 : f32 to vector<160x128xf32>
    %13 = arith.subf %12, %11 : vector<160x128xf32>
    %14 = math.exp %13 : vector<160x128xf32>
    %cst_8 = arith.constant 1.000000e+00 : f32
    %15 = vector.broadcast %cst_8 : f32 to vector<160x128xf32>
    %16 = arith.addf %15, %14 : vector<160x128xf32>
    %17 = tpu.reciprocal %16 {approx = true} : vector<160x128xf32> -> vector<160x128xf32>
    %18 = arith.mulf %11, %17 : vector<160x128xf32>
    %19 = vector.shape_cast %18 : vector<160x128xf32> to vector<8x20x128xf32>
    %20 = tpu.iota {dimensions = array<i32: 0>} : vector<8x1x1xi32>
    %c0_i32 = arith.constant 0 : i32
    %21 = arith.addi %1, %c0_i32 : i32
    %22 = vector.broadcast %21 : i32 to vector<8x1x1xi32>
    %23 = arith.addi %20, %22 : vector<8x1x1xi32>
    %c0_i32_9 = arith.constant 0 : i32
    %24 = vector.broadcast %c0_i32_9 : i32 to vector<8x1x1xi32>
    %25 = arith.cmpi sge, %23, %24 : vector<8x1x1xi32>
    %c16_i32 = arith.constant 16 : i32
    %26 = vector.broadcast %c16_i32 : i32 to vector<8x1x1xi32>
    %27 = arith.cmpi slt, %23, %26 : vector<8x1x1xi32>
    %28 = arith.andi %25, %27 : vector<8x1x1xi1>
    %cst_10 = arith.constant 0.000000e+00 : f32
    %29 = vector.shape_cast %28 : vector<8x1x1xi1> to vector<8x1x1xi1>
    %30 = vector.broadcast %29 : vector<8x1x1xi1> to vector<8x20x128xi1>
    %31 = vector.broadcast %cst_10 : f32 to vector<8x20x128xf32>
    %32 = arith.select %30, %19, %31 : vector<8x20x128xi1>, vector<8x20x128xf32>
    %33 = arith.truncf %32 : vector<8x20x128xf32> to vector<8x20x128xbf16>
    %c0_11 = arith.constant 0 : index
    %c0_12 = arith.constant 0 : index
    %c0_13 = arith.constant 0 : index
    %34 = vector.load %arg9[%c0_11, %c0_12, %c0_13] : memref<12x20x128xbf16, #tpu.memory_space<vmem>>, vector<8x20x128xbf16>
    tpu.vector_store %arg9[%c0_11, %c0_12, %c0_13], %33 {strides = array<i32>} : memref<12x20x128xbf16, #tpu.memory_space<vmem>>, vector<8x20x128xbf16>,
    %c0_14 = arith.constant 0 : index
    %c0_15 = arith.constant 0 : index
    %c0_16 = arith.constant 0 : index
    %c0_17 = arith.constant 0 : index
    %35 = vector.load %arg3[%c0_14, %c0_15, %c0_16, %c0_17] : memref<1x4x20x128xbf16, #tpu.memory_space<vmem>>, vector<1x4x20x128xbf16>
    %36 = vector.shape_cast %35 : vector<1x4x20x128xbf16> to vector<4x20x128xbf16>
    %37 = vector.shape_cast %36 : vector<4x20x128xbf16> to vector<80x128xbf16>
    %c0_18 = arith.constant 0 : index
    %c0_19 = arith.constant 0 : index
    %38 = vector.load %arg4[%c0_18, %c0_19] : memref<128x128xbf16, #tpu.memory_space<vmem>>, vector<128x128xbf16>
    %cst_20 = arith.constant dense<0.000000e+00> : vector<80x128xf32>
    %39 = tpu.matmul %37, %38, %cst_20 {dimension_numbers = #tpu.dot_dimension_numbers<[1], [0], [0], [1], [0, 0, 1, 1], [], []>} : vector<80x128xbf16>, vector<128x128xbf16>, vector<80x128xf32> -> vector<80x128xf32>
    %c0_21 = arith.constant 0 : index
    %c0_22 = arith.constant 0 : index
    %40 = vector.load %arg5[%c0_21, %c0_22] : memref<1x128xf32, #tpu.memory_space<vmem>>, vector<1x128xf32>
    %41 = vector.shape_cast %40 : vector<1x128xf32> to vector<128xf32>
    %42 = vector.shape_cast %41 : vector<128xf32> to vector<1x128xf32>
    %43 = vector.broadcast %42 : vector<1x128xf32> to vector<80x128xf32>
    %44 = arith.addf %39, %43 : vector<80x128xf32>
    %cst_23 = arith.constant 0.000000e+00 : f32
    %45 = vector.broadcast %cst_23 : f32 to vector<80x128xf32>
    %46 = arith.subf %45, %44 : vector<80x128xf32>
    %47 = math.exp %46 : vector<80x128xf32>
    %cst_24 = arith.constant 1.000000e+00 : f32
    %48 = vector.broadcast %cst_24 : f32 to vector<80x128xf32>
    %49 = arith.addf %48, %47 : vector<80x128xf32>
    %50 = tpu.reciprocal %49 {approx = true} : vector<80x128xf32> -> vector<80x128xf32>
    %51 = arith.mulf %44, %50 : vector<80x128xf32>
    %52 = vector.shape_cast %51 : vector<80x128xf32> to vector<4x20x128xf32>
    %53 = tpu.iota {dimensions = array<i32: 0>} : vector<4x1x1xi32>
    %c8_i32_25 = arith.constant 8 : i32
    %54 = arith.addi %1, %c8_i32_25 : i32
    %55 = vector.broadcast %54 : i32 to vector<4x1x1xi32>
    %56 = arith.addi %53, %55 : vector<4x1x1xi32>
    %c0_i32_26 = arith.constant 0 : i32
    %57 = vector.broadcast %c0_i32_26 : i32 to vector<4x1x1xi32>
    %58 = arith.cmpi sge, %56, %57 : vector<4x1x1xi32>
    %c16_i32_27 = arith.constant 16 : i32
    %59 = vector.broadcast %c16_i32_27 : i32 to vector<4x1x1xi32>
    %60 = arith.cmpi slt, %56, %59 : vector<4x1x1xi32>
    %61 = arith.andi %58, %60 : vector<4x1x1xi1>
    %cst_28 = arith.constant 0.000000e+00 : f32
    %62 = vector.shape_cast %61 : vector<4x1x1xi1> to vector<4x1x1xi1>
    %63 = vector.broadcast %62 : vector<4x1x1xi1> to vector<4x20x128xi1>
    %64 = vector.broadcast %cst_28 : f32 to vector<4x20x128xf32>
    %65 = arith.select %63, %52, %64 : vector<4x20x128xi1>, vector<4x20x128xf32>
    %66 = arith.truncf %65 : vector<4x20x128xf32> to vector<4x20x128xbf16>
    %c8 = arith.constant 8 : index
    %c0_29 = arith.constant 0 : index
    %c0_30 = arith.constant 0 : index
    %67 = vector.load %arg9[%c8, %c0_29, %c0_30] : memref<12x20x128xbf16, #tpu.memory_space<vmem>>, vector<4x20x128xbf16>
    tpu.vector_store %arg9[%c8, %c0_29, %c0_30], %66 {strides = array<i32>} : memref<12x20x128xbf16, #tpu.memory_space<vmem>>, vector<4x20x128xbf16>,
    %cst_31 = arith.constant 0.000000e+00 : bf16
    %68 = vector.broadcast %cst_31 : bf16 to vector<12x2x128xbf16>
    %c0_32 = arith.constant 0 : index
    %c0_33 = arith.constant 0 : index
    %c0_34 = arith.constant 0 : index
    %69 = vector.load %arg9[%c0_32, %c0_33, %c0_34] : memref<12x20x128xbf16, #tpu.memory_space<vmem>>, vector<12x2x128xbf16>
    tpu.vector_store %arg9[%c0_32, %c0_33, %c0_34], %68 {strides = array<i32>} : memref<12x20x128xbf16, #tpu.memory_space<vmem>>, vector<12x2x128xbf16>,
    %cst_35 = arith.constant 0.000000e+00 : bf16
    %70 = vector.broadcast %cst_35 : bf16 to vector<12x2x128xbf16>
    %c0_36 = arith.constant 0 : index
    %c18 = arith.constant 18 : index
    %c0_37 = arith.constant 0 : index
    %71 = vector.load %arg9[%c0_36, %c18, %c0_37] : memref<12x20x128xbf16, #tpu.memory_space<vmem>>, vector<12x2x128xbf16>
    tpu.vector_store %arg9[%c0_36, %c18, %c0_37], %70 {strides = array<i32>} : memref<12x20x128xbf16, #tpu.memory_space<vmem>>, vector<12x2x128xbf16>,
    %c0_38 = arith.constant 0 : index
    %c0_39 = arith.constant 0 : index
    %c0_40 = arith.constant 0 : index
    %72 = vector.load %arg9[%c0_38, %c0_39, %c0_40] : memref<12x20x128xbf16, #tpu.memory_space<vmem>>, vector<8x20x128xbf16>
    %73 = vector.extract_strided_slice %72 {offsets = [0, 0, 0], sizes = [8, 16, 128], strides = [1, 1, 1]} : vector<8x20x128xbf16> to vector<8x16x128xbf16>
    %c0_41 = arith.constant 0 : index
    %c0_42 = arith.constant 0 : index
    %74 = vector.load %arg6[%c0_41, %c0_42] : memref<25x128xf32, #tpu.memory_space<vmem>>, vector<1x128xf32>
    %75 = vector.shape_cast %74 : vector<1x128xf32> to vector<128xf32>
    %76 = arith.extf %73 : vector<8x16x128xbf16> to vector<8x16x128xf32>
    %77 = vector.shape_cast %75 : vector<128xf32> to vector<1x1x128xf32>
    %78 = vector.broadcast %77 : vector<1x1x128xf32> to vector<8x16x128xf32>
    %79 = arith.mulf %76, %78 : vector<8x16x128xf32>
    %80 = vector.extract_strided_slice %72 {offsets = [0, 1, 0], sizes = [8, 16, 128], strides = [1, 1, 1]} : vector<8x20x128xbf16> to vector<8x16x128xbf16>
    %c1 = arith.constant 1 : index
    %c0_43 = arith.constant 0 : index
    %81 = vector.load %arg6[%c1, %c0_43] : memref<25x128xf32, #tpu.memory_space<vmem>>, vector<1x128xf32>
    %82 = vector.shape_cast %81 : vector<1x128xf32> to vector<128xf32>
    %83 = arith.extf %80 : vector<8x16x128xbf16> to vector<8x16x128xf32>
    %84 = vector.shape_cast %82 : vector<128xf32> to vector<1x1x128xf32>
    %85 = vector.broadcast %84 : vector<1x1x128xf32> to vector<8x16x128xf32>
    %86 = arith.mulf %83, %85 : vector<8x16x128xf32>
    %87 = arith.addf %79, %86 : vector<8x16x128xf32>
    %88 = vector.extract_strided_slice %72 {offsets = [0, 2, 0], sizes = [8, 16, 128], strides = [1, 1, 1]} : vector<8x20x128xbf16> to vector<8x16x128xbf16>
    %c2 = arith.constant 2 : index
    %c0_44 = arith.constant 0 : index
    %89 = vector.load %arg6[%c2, %c0_44] : memref<25x128xf32, #tpu.memory_space<vmem>>, vector<1x128xf32>
    %90 = vector.shape_cast %89 : vector<1x128xf32> to vector<128xf32>
    %91 = arith.extf %88 : vector<8x16x128xbf16> to vector<8x16x128xf32>
    %92 = vector.shape_cast %90 : vector<128xf32> to vector<1x1x128xf32>
    %93 = vector.broadcast %92 : vector<1x1x128xf32> to vector<8x16x128xf32>
    %94 = arith.mulf %91, %93 : vector<8x16x128xf32>
    %95 = arith.addf %87, %94 : vector<8x16x128xf32>
    %96 = vector.extract_strided_slice %72 {offsets = [0, 3, 0], sizes = [8, 16, 128], strides = [1, 1, 1]} : vector<8x20x128xbf16> to vector<8x16x128xbf16>
    %c3 = arith.constant 3 : index
    %c0_45 = arith.constant 0 : index
    %97 = vector.load %arg6[%c3, %c0_45] : memref<25x128xf32, #tpu.memory_space<vmem>>, vector<1x128xf32>
    %98 = vector.shape_cast %97 : vector<1x128xf32> to vector<128xf32>
    %99 = arith.extf %96 : vector<8x16x128xbf16> to vector<8x16x128xf32>
    %100 = vector.shape_cast %98 : vector<128xf32> to vector<1x1x128xf32>
    %101 = vector.broadcast %100 : vector<1x1x128xf32> to vector<8x16x128xf32>
    %102 = arith.mulf %99, %101 : vector<8x16x128xf32>
    %103 = arith.addf %95, %102 : vector<8x16x128xf32>
    %104 = vector.extract_strided_slice %72 {offsets = [0, 4, 0], sizes = [8, 16, 128], strides = [1, 1, 1]} : vector<8x20x128xbf16> to vector<8x16x128xbf16>
    %c4 = arith.constant 4 : index
    %c0_46 = arith.constant 0 : index
    %105 = vector.load %arg6[%c4, %c0_46] : memref<25x128xf32, #tpu.memory_space<vmem>>, vector<1x128xf32>
    %106 = vector.shape_cast %105 : vector<1x128xf32> to vector<128xf32>
    %107 = arith.extf %104 : vector<8x16x128xbf16> to vector<8x16x128xf32>
    %108 = vector.shape_cast %106 : vector<128xf32> to vector<1x1x128xf32>
    %109 = vector.broadcast %108 : vector<1x1x128xf32> to vector<8x16x128xf32>
    %110 = arith.mulf %107, %109 : vector<8x16x128xf32>
    %111 = arith.addf %103, %110 : vector<8x16x128xf32>
    %c1_47 = arith.constant 1 : index
    %c0_48 = arith.constant 0 : index
    %c0_49 = arith.constant 0 : index
    %112 = vector.load %arg9[%c1_47, %c0_48, %c0_49] : memref<12x20x128xbf16, #tpu.memory_space<vmem>>, vector<8x20x128xbf16>
    %113 = vector.extract_strided_slice %112 {offsets = [0, 0, 0], sizes = [8, 16, 128], strides = [1, 1, 1]} : vector<8x20x128xbf16> to vector<8x16x128xbf16>
    %c5 = arith.constant 5 : index
    %c0_50 = arith.constant 0 : index
    %114 = vector.load %arg6[%c5, %c0_50] : memref<25x128xf32, #tpu.memory_space<vmem>>, vector<1x128xf32>
    %115 = vector.shape_cast %114 : vector<1x128xf32> to vector<128xf32>
    %116 = arith.extf %113 : vector<8x16x128xbf16> to vector<8x16x128xf32>
    %117 = vector.shape_cast %115 : vector<128xf32> to vector<1x1x128xf32>
    %118 = vector.broadcast %117 : vector<1x1x128xf32> to vector<8x16x128xf32>
    %119 = arith.mulf %116, %118 : vector<8x16x128xf32>
    %120 = vector.extract_strided_slice %112 {offsets = [0, 1, 0], sizes = [8, 16, 128], strides = [1, 1, 1]} : vector<8x20x128xbf16> to vector<8x16x128xbf16>
    %c6 = arith.constant 6 : index
    %c0_51 = arith.constant 0 : index
    %121 = vector.load %arg6[%c6, %c0_51] : memref<25x128xf32, #tpu.memory_space<vmem>>, vector<1x128xf32>
    %122 = vector.shape_cast %121 : vector<1x128xf32> to vector<128xf32>
    %123 = arith.extf %120 : vector<8x16x128xbf16> to vector<8x16x128xf32>
    %124 = vector.shape_cast %122 : vector<128xf32> to vector<1x1x128xf32>
    %125 = vector.broadcast %124 : vector<1x1x128xf32> to vector<8x16x128xf32>
    %126 = arith.mulf %123, %125 : vector<8x16x128xf32>
    %127 = arith.addf %119, %126 : vector<8x16x128xf32>
    %128 = vector.extract_strided_slice %112 {offsets = [0, 2, 0], sizes = [8, 16, 128], strides = [1, 1, 1]} : vector<8x20x128xbf16> to vector<8x16x128xbf16>
    %c7 = arith.constant 7 : index
    %c0_52 = arith.constant 0 : index
    %129 = vector.load %arg6[%c7, %c0_52] : memref<25x128xf32, #tpu.memory_space<vmem>>, vector<1x128xf32>
    %130 = vector.shape_cast %129 : vector<1x128xf32> to vector<128xf32>
    %131 = arith.extf %128 : vector<8x16x128xbf16> to vector<8x16x128xf32>
    %132 = vector.shape_cast %130 : vector<128xf32> to vector<1x1x128xf32>
    %133 = vector.broadcast %132 : vector<1x1x128xf32> to vector<8x16x128xf32>
    %134 = arith.mulf %131, %133 : vector<8x16x128xf32>
    %135 = arith.addf %127, %134 : vector<8x16x128xf32>
    %136 = vector.extract_strided_slice %112 {offsets = [0, 3, 0], sizes = [8, 16, 128], strides = [1, 1, 1]} : vector<8x20x128xbf16> to vector<8x16x128xbf16>
    %c8_53 = arith.constant 8 : index
    %c0_54 = arith.constant 0 : index
    %137 = vector.load %arg6[%c8_53, %c0_54] : memref<25x128xf32, #tpu.memory_space<vmem>>, vector<1x128xf32>
    %138 = vector.shape_cast %137 : vector<1x128xf32> to vector<128xf32>
    %139 = arith.extf %136 : vector<8x16x128xbf16> to vector<8x16x128xf32>
    %140 = vector.shape_cast %138 : vector<128xf32> to vector<1x1x128xf32>
    %141 = vector.broadcast %140 : vector<1x1x128xf32> to vector<8x16x128xf32>
    %142 = arith.mulf %139, %141 : vector<8x16x128xf32>
    %143 = arith.addf %135, %142 : vector<8x16x128xf32>
    %144 = vector.extract_strided_slice %112 {offsets = [0, 4, 0], sizes = [8, 16, 128], strides = [1, 1, 1]} : vector<8x20x128xbf16> to vector<8x16x128xbf16>
    %c9 = arith.constant 9 : index
    %c0_55 = arith.constant 0 : index
    %145 = vector.load %arg6[%c9, %c0_55] : memref<25x128xf32, #tpu.memory_space<vmem>>, vector<1x128xf32>
    %146 = vector.shape_cast %145 : vector<1x128xf32> to vector<128xf32>
    %147 = arith.extf %144 : vector<8x16x128xbf16> to vector<8x16x128xf32>
    %148 = vector.shape_cast %146 : vector<128xf32> to vector<1x1x128xf32>
    %149 = vector.broadcast %148 : vector<1x1x128xf32> to vector<8x16x128xf32>
    %150 = arith.mulf %147, %149 : vector<8x16x128xf32>
    %151 = arith.addf %143, %150 : vector<8x16x128xf32>
    %c2_56 = arith.constant 2 : index
    %c0_57 = arith.constant 0 : index
    %c0_58 = arith.constant 0 : index
    %152 = vector.load %arg9[%c2_56, %c0_57, %c0_58] : memref<12x20x128xbf16, #tpu.memory_space<vmem>>, vector<8x20x128xbf16>
    %153 = vector.extract_strided_slice %152 {offsets = [0, 0, 0], sizes = [8, 16, 128], strides = [1, 1, 1]} : vector<8x20x128xbf16> to vector<8x16x128xbf16>
    %c10 = arith.constant 10 : index
    %c0_59 = arith.constant 0 : index
    %154 = vector.load %arg6[%c10, %c0_59] : memref<25x128xf32, #tpu.memory_space<vmem>>, vector<1x128xf32>
    %155 = vector.shape_cast %154 : vector<1x128xf32> to vector<128xf32>
    %156 = arith.extf %153 : vector<8x16x128xbf16> to vector<8x16x128xf32>
    %157 = vector.shape_cast %155 : vector<128xf32> to vector<1x1x128xf32>
    %158 = vector.broadcast %157 : vector<1x1x128xf32> to vector<8x16x128xf32>
    %159 = arith.mulf %156, %158 : vector<8x16x128xf32>
    %160 = vector.extract_strided_slice %152 {offsets = [0, 1, 0], sizes = [8, 16, 128], strides = [1, 1, 1]} : vector<8x20x128xbf16> to vector<8x16x128xbf16>
    %c11 = arith.constant 11 : index
    %c0_60 = arith.constant 0 : index
    %161 = vector.load %arg6[%c11, %c0_60] : memref<25x128xf32, #tpu.memory_space<vmem>>, vector<1x128xf32>
    %162 = vector.shape_cast %161 : vector<1x128xf32> to vector<128xf32>
    %163 = arith.extf %160 : vector<8x16x128xbf16> to vector<8x16x128xf32>
    %164 = vector.shape_cast %162 : vector<128xf32> to vector<1x1x128xf32>
    %165 = vector.broadcast %164 : vector<1x1x128xf32> to vector<8x16x128xf32>
    %166 = arith.mulf %163, %165 : vector<8x16x128xf32>
    %167 = arith.addf %159, %166 : vector<8x16x128xf32>
    %168 = vector.extract_strided_slice %152 {offsets = [0, 2, 0], sizes = [8, 16, 128], strides = [1, 1, 1]} : vector<8x20x128xbf16> to vector<8x16x128xbf16>
    %c12 = arith.constant 12 : index
    %c0_61 = arith.constant 0 : index
    %169 = vector.load %arg6[%c12, %c0_61] : memref<25x128xf32, #tpu.memory_space<vmem>>, vector<1x128xf32>
    %170 = vector.shape_cast %169 : vector<1x128xf32> to vector<128xf32>
    %171 = arith.extf %168 : vector<8x16x128xbf16> to vector<8x16x128xf32>
    %172 = vector.shape_cast %170 : vector<128xf32> to vector<1x1x128xf32>
    %173 = vector.broadcast %172 : vector<1x1x128xf32> to vector<8x16x128xf32>
    %174 = arith.mulf %171, %173 : vector<8x16x128xf32>
    %175 = arith.addf %167, %174 : vector<8x16x128xf32>
    %176 = vector.extract_strided_slice %152 {offsets = [0, 3, 0], sizes = [8, 16, 128], strides = [1, 1, 1]} : vector<8x20x128xbf16> to vector<8x16x128xbf16>
    %c13 = arith.constant 13 : index
    %c0_62 = arith.constant 0 : index
    %177 = vector.load %arg6[%c13, %c0_62] : memref<25x128xf32, #tpu.memory_space<vmem>>, vector<1x128xf32>
    %178 = vector.shape_cast %177 : vector<1x128xf32> to vector<128xf32>
    %179 = arith.extf %176 : vector<8x16x128xbf16> to vector<8x16x128xf32>
    %180 = vector.shape_cast %178 : vector<128xf32> to vector<1x1x128xf32>
    %181 = vector.broadcast %180 : vector<1x1x128xf32> to vector<8x16x128xf32>
    %182 = arith.mulf %179, %181 : vector<8x16x128xf32>
    %183 = arith.addf %175, %182 : vector<8x16x128xf32>
    %184 = vector.extract_strided_slice %152 {offsets = [0, 4, 0], sizes = [8, 16, 128], strides = [1, 1, 1]} : vector<8x20x128xbf16> to vector<8x16x128xbf16>
    %c14 = arith.constant 14 : index
    %c0_63 = arith.constant 0 : index
    %185 = vector.load %arg6[%c14, %c0_63] : memref<25x128xf32, #tpu.memory_space<vmem>>, vector<1x128xf32>
    %186 = vector.shape_cast %185 : vector<1x128xf32> to vector<128xf32>
    %187 = arith.extf %184 : vector<8x16x128xbf16> to vector<8x16x128xf32>
    %188 = vector.shape_cast %186 : vector<128xf32> to vector<1x1x128xf32>
    %189 = vector.broadcast %188 : vector<1x1x128xf32> to vector<8x16x128xf32>
    %190 = arith.mulf %187, %189 : vector<8x16x128xf32>
    %191 = arith.addf %183, %190 : vector<8x16x128xf32>
    %c3_64 = arith.constant 3 : index
    %c0_65 = arith.constant 0 : index
    %c0_66 = arith.constant 0 : index
    %192 = vector.load %arg9[%c3_64, %c0_65, %c0_66] : memref<12x20x128xbf16, #tpu.memory_space<vmem>>, vector<8x20x128xbf16>
    %193 = vector.extract_strided_slice %192 {offsets = [0, 0, 0], sizes = [8, 16, 128], strides = [1, 1, 1]} : vector<8x20x128xbf16> to vector<8x16x128xbf16>
    %c15 = arith.constant 15 : index
    %c0_67 = arith.constant 0 : index
    %194 = vector.load %arg6[%c15, %c0_67] : memref<25x128xf32, #tpu.memory_space<vmem>>, vector<1x128xf32>
    %195 = vector.shape_cast %194 : vector<1x128xf32> to vector<128xf32>
    %196 = arith.extf %193 : vector<8x16x128xbf16> to vector<8x16x128xf32>
    %197 = vector.shape_cast %195 : vector<128xf32> to vector<1x1x128xf32>
    %198 = vector.broadcast %197 : vector<1x1x128xf32> to vector<8x16x128xf32>
    %199 = arith.mulf %196, %198 : vector<8x16x128xf32>
    %200 = vector.extract_strided_slice %192 {offsets = [0, 1, 0], sizes = [8, 16, 128], strides = [1, 1, 1]} : vector<8x20x128xbf16> to vector<8x16x128xbf16>
    %c16 = arith.constant 16 : index
    %c0_68 = arith.constant 0 : index
    %201 = vector.load %arg6[%c16, %c0_68] : memref<25x128xf32, #tpu.memory_space<vmem>>, vector<1x128xf32>
    %202 = vector.shape_cast %201 : vector<1x128xf32> to vector<128xf32>
    %203 = arith.extf %200 : vector<8x16x128xbf16> to vector<8x16x128xf32>
    %204 = vector.shape_cast %202 : vector<128xf32> to vector<1x1x128xf32>
    %205 = vector.broadcast %204 : vector<1x1x128xf32> to vector<8x16x128xf32>
    %206 = arith.mulf %203, %205 : vector<8x16x128xf32>
    %207 = arith.addf %199, %206 : vector<8x16x128xf32>
    %208 = vector.extract_strided_slice %192 {offsets = [0, 2, 0], sizes = [8, 16, 128], strides = [1, 1, 1]} : vector<8x20x128xbf16> to vector<8x16x128xbf16>
    %c17 = arith.constant 17 : index
    %c0_69 = arith.constant 0 : index
    %209 = vector.load %arg6[%c17, %c0_69] : memref<25x128xf32, #tpu.memory_space<vmem>>, vector<1x128xf32>
    %210 = vector.shape_cast %209 : vector<1x128xf32> to vector<128xf32>
    %211 = arith.extf %208 : vector<8x16x128xbf16> to vector<8x16x128xf32>
    %212 = vector.shape_cast %210 : vector<128xf32> to vector<1x1x128xf32>
    %213 = vector.broadcast %212 : vector<1x1x128xf32> to vector<8x16x128xf32>
    %214 = arith.mulf %211, %213 : vector<8x16x128xf32>
    %215 = arith.addf %207, %214 : vector<8x16x128xf32>
    %216 = vector.extract_strided_slice %192 {offsets = [0, 3, 0], sizes = [8, 16, 128], strides = [1, 1, 1]} : vector<8x20x128xbf16> to vector<8x16x128xbf16>
    %c18_70 = arith.constant 18 : index
    %c0_71 = arith.constant 0 : index
    %217 = vector.load %arg6[%c18_70, %c0_71] : memref<25x128xf32, #tpu.memory_space<vmem>>, vector<1x128xf32>
    %218 = vector.shape_cast %217 : vector<1x128xf32> to vector<128xf32>
    %219 = arith.extf %216 : vector<8x16x128xbf16> to vector<8x16x128xf32>
    %220 = vector.shape_cast %218 : vector<128xf32> to vector<1x1x128xf32>
    %221 = vector.broadcast %220 : vector<1x1x128xf32> to vector<8x16x128xf32>
    %222 = arith.mulf %219, %221 : vector<8x16x128xf32>
    %223 = arith.addf %215, %222 : vector<8x16x128xf32>
    %224 = vector.extract_strided_slice %192 {offsets = [0, 4, 0], sizes = [8, 16, 128], strides = [1, 1, 1]} : vector<8x20x128xbf16> to vector<8x16x128xbf16>
    %c19 = arith.constant 19 : index
    %c0_72 = arith.constant 0 : index
    %225 = vector.load %arg6[%c19, %c0_72] : memref<25x128xf32, #tpu.memory_space<vmem>>, vector<1x128xf32>
    %226 = vector.shape_cast %225 : vector<1x128xf32> to vector<128xf32>
    %227 = arith.extf %224 : vector<8x16x128xbf16> to vector<8x16x128xf32>
    %228 = vector.shape_cast %226 : vector<128xf32> to vector<1x1x128xf32>
    %229 = vector.broadcast %228 : vector<1x1x128xf32> to vector<8x16x128xf32>
    %230 = arith.mulf %227, %229 : vector<8x16x128xf32>
    %231 = arith.addf %223, %230 : vector<8x16x128xf32>
    %c4_73 = arith.constant 4 : index
    %c0_74 = arith.constant 0 : index
    %c0_75 = arith.constant 0 : index
    %232 = vector.load %arg9[%c4_73, %c0_74, %c0_75] : memref<12x20x128xbf16, #tpu.memory_space<vmem>>, vector<8x20x128xbf16>
    %233 = vector.extract_strided_slice %232 {offsets = [0, 0, 0], sizes = [8, 16, 128], strides = [1, 1, 1]} : vector<8x20x128xbf16> to vector<8x16x128xbf16>
    %c20 = arith.constant 20 : index
    %c0_76 = arith.constant 0 : index
    %234 = vector.load %arg6[%c20, %c0_76] : memref<25x128xf32, #tpu.memory_space<vmem>>, vector<1x128xf32>
    %235 = vector.shape_cast %234 : vector<1x128xf32> to vector<128xf32>
    %236 = arith.extf %233 : vector<8x16x128xbf16> to vector<8x16x128xf32>
    %237 = vector.shape_cast %235 : vector<128xf32> to vector<1x1x128xf32>
    %238 = vector.broadcast %237 : vector<1x1x128xf32> to vector<8x16x128xf32>
    %239 = arith.mulf %236, %238 : vector<8x16x128xf32>
    %240 = vector.extract_strided_slice %232 {offsets = [0, 1, 0], sizes = [8, 16, 128], strides = [1, 1, 1]} : vector<8x20x128xbf16> to vector<8x16x128xbf16>
    %c21 = arith.constant 21 : index
    %c0_77 = arith.constant 0 : index
    %241 = vector.load %arg6[%c21, %c0_77] : memref<25x128xf32, #tpu.memory_space<vmem>>, vector<1x128xf32>
    %242 = vector.shape_cast %241 : vector<1x128xf32> to vector<128xf32>
    %243 = arith.extf %240 : vector<8x16x128xbf16> to vector<8x16x128xf32>
    %244 = vector.shape_cast %242 : vector<128xf32> to vector<1x1x128xf32>
    %245 = vector.broadcast %244 : vector<1x1x128xf32> to vector<8x16x128xf32>
    %246 = arith.mulf %243, %245 : vector<8x16x128xf32>
    %247 = arith.addf %239, %246 : vector<8x16x128xf32>
    %248 = vector.extract_strided_slice %232 {offsets = [0, 2, 0], sizes = [8, 16, 128], strides = [1, 1, 1]} : vector<8x20x128xbf16> to vector<8x16x128xbf16>
    %c22 = arith.constant 22 : index
    %c0_78 = arith.constant 0 : index
    %249 = vector.load %arg6[%c22, %c0_78] : memref<25x128xf32, #tpu.memory_space<vmem>>, vector<1x128xf32>
    %250 = vector.shape_cast %249 : vector<1x128xf32> to vector<128xf32>
    %251 = arith.extf %248 : vector<8x16x128xbf16> to vector<8x16x128xf32>
    %252 = vector.shape_cast %250 : vector<128xf32> to vector<1x1x128xf32>
    %253 = vector.broadcast %252 : vector<1x1x128xf32> to vector<8x16x128xf32>
    %254 = arith.mulf %251, %253 : vector<8x16x128xf32>
    %255 = arith.addf %247, %254 : vector<8x16x128xf32>
    %256 = vector.extract_strided_slice %232 {offsets = [0, 3, 0], sizes = [8, 16, 128], strides = [1, 1, 1]} : vector<8x20x128xbf16> to vector<8x16x128xbf16>
    %c23 = arith.constant 23 : index
    %c0_79 = arith.constant 0 : index
    %257 = vector.load %arg6[%c23, %c0_79] : memref<25x128xf32, #tpu.memory_space<vmem>>, vector<1x128xf32>
    %258 = vector.shape_cast %257 : vector<1x128xf32> to vector<128xf32>
    %259 = arith.extf %256 : vector<8x16x128xbf16> to vector<8x16x128xf32>
    %260 = vector.shape_cast %258 : vector<128xf32> to vector<1x1x128xf32>
    %261 = vector.broadcast %260 : vector<1x1x128xf32> to vector<8x16x128xf32>
    %262 = arith.mulf %259, %261 : vector<8x16x128xf32>
    %263 = arith.addf %255, %262 : vector<8x16x128xf32>
    %264 = vector.extract_strided_slice %232 {offsets = [0, 4, 0], sizes = [8, 16, 128], strides = [1, 1, 1]} : vector<8x20x128xbf16> to vector<8x16x128xbf16>
    %c24 = arith.constant 24 : index
    %c0_80 = arith.constant 0 : index
    %265 = vector.load %arg6[%c24, %c0_80] : memref<25x128xf32, #tpu.memory_space<vmem>>, vector<1x128xf32>
    %266 = vector.shape_cast %265 : vector<1x128xf32> to vector<128xf32>
    %267 = arith.extf %264 : vector<8x16x128xbf16> to vector<8x16x128xf32>
    %268 = vector.shape_cast %266 : vector<128xf32> to vector<1x1x128xf32>
    %269 = vector.broadcast %268 : vector<1x1x128xf32> to vector<8x16x128xf32>
    %270 = arith.mulf %267, %269 : vector<8x16x128xf32>
    %271 = arith.addf %263, %270 : vector<8x16x128xf32>
    %272 = arith.addf %111, %151 : vector<8x16x128xf32>
    %273 = arith.addf %191, %231 : vector<8x16x128xf32>
    %274 = arith.addf %272, %273 : vector<8x16x128xf32>
    %275 = arith.addf %274, %271 : vector<8x16x128xf32>
    %c0_81 = arith.constant 0 : index
    %c0_82 = arith.constant 0 : index
    %276 = vector.load %arg7[%c0_81, %c0_82] : memref<1x128xf32, #tpu.memory_space<vmem>>, vector<1x128xf32>
    %277 = vector.shape_cast %276 : vector<1x128xf32> to vector<128xf32>
    %278 = vector.shape_cast %277 : vector<128xf32> to vector<1x1x128xf32>
    %279 = vector.broadcast %278 : vector<1x1x128xf32> to vector<8x16x128xf32>
    %280 = arith.addf %275, %279 : vector<8x16x128xf32>
    %cst_83 = arith.constant 0.000000e+00 : f32
    %281 = vector.broadcast %cst_83 : f32 to vector<8x16x128xf32>
    %282 = arith.subf %281, %280 : vector<8x16x128xf32>
    %283 = math.exp %282 : vector<8x16x128xf32>
    %cst_84 = arith.constant 1.000000e+00 : f32
    %284 = vector.broadcast %cst_84 : f32 to vector<8x16x128xf32>
    %285 = arith.addf %284, %283 : vector<8x16x128xf32>
    %286 = tpu.reciprocal %285 {approx = true} : vector<8x16x128xf32> -> vector<8x16x128xf32>
    %287 = arith.mulf %280, %286 : vector<8x16x128xf32>
    %c2_85 = arith.constant 2 : index
    %c2_86 = arith.constant 2 : index
    %c0_87 = arith.constant 0 : index
    %288 = vector.load %arg9[%c2_85, %c2_86, %c0_87] : memref<12x20x128xbf16, #tpu.memory_space<vmem>>, vector<8x16x128xbf16>
    %c0_88 = arith.constant 0 : index
    %c0_89 = arith.constant 0 : index
    %c0_90 = arith.constant 0 : index
    %c0_91 = arith.constant 0 : index
    %289 = vector.load %arg8[%c0_88, %c0_89, %c0_90, %c0_91] : memref<1x8x16x256xbf16, #tpu.memory_space<vmem>>, vector<1x8x16x128xbf16>
    %290 = vector.shape_cast %289 : vector<1x8x16x128xbf16> to vector<8x16x128xbf16>
    %291 = vector.shape_cast %288 : vector<8x16x128xbf16> to vector<1x8x16x128xbf16>
    tpu.vector_store %arg8[%c0_88, %c0_89, %c0_90, %c0_91], %291 {strides = array<i32>} : memref<1x8x16x256xbf16, #tpu.memory_space<vmem>>, vector<1x8x16x128xbf16>,
    %292 = arith.truncf %287 : vector<8x16x128xf32> to vector<8x16x128xbf16>
    %c0_92 = arith.constant 0 : index
    %c0_93 = arith.constant 0 : index
    %c0_94 = arith.constant 0 : index
    %c128 = arith.constant 128 : index
    %293 = vector.load %arg8[%c0_92, %c0_93, %c0_94, %c128] : memref<1x8x16x256xbf16, #tpu.memory_space<vmem>>, vector<1x8x16x128xbf16>
    %294 = vector.shape_cast %293 : vector<1x8x16x128xbf16> to vector<8x16x128xbf16>
    %295 = vector.shape_cast %292 : vector<8x16x128xbf16> to vector<1x8x16x128xbf16>
    tpu.vector_store %arg8[%c0_92, %c0_93, %c0_94, %c128], %295 {strides = array<i32>} : memref<1x8x16x256xbf16, #tpu.memory_space<vmem>>, vector<1x8x16x128xbf16>,
    return
  }
  func.func @transform_0(%arg0: i32, %arg1: i32) -> (i32, i32, i32, i32) {
    %c0_i32 = arith.constant 0 : i32
    %c0_i32_0 = arith.constant 0 : i32
    %c0_i32_1 = arith.constant 0 : i32
    return %arg0, %arg1, %c0_i32, %c0_i32_0 : i32, i32, i32, i32
  }
  func.func @transform_1(%arg0: i32, %arg1: i32) -> (i32, i32, i32, i32) {
    %c1_i32 = arith.constant 1 : i32
    %0 = arith.addi %arg1, %c1_i32 : i32
    %c2_i32 = arith.constant 2 : i32
    %1 = arith.muli %0, %c2_i32 : i32
    %c0_i32 = arith.constant 0 : i32
    %c0_i32_0 = arith.constant 0 : i32
    %c0_i32_1 = arith.constant 0 : i32
    return %arg0, %1, %c0_i32, %c0_i32_0 : i32, i32, i32, i32
  }
  func.func @transform_2(%arg0: i32, %arg1: i32) -> (i32, i32) {
    %c0_i32 = arith.constant 0 : i32
    %c0_i32_0 = arith.constant 0 : i32
    %c0_i32_1 = arith.constant 0 : i32
    return %c0_i32, %c0_i32_0 : i32, i32
  }
  func.func @transform_3(%arg0: i32, %arg1: i32) -> (i32, i32) {
    %c0_i32 = arith.constant 0 : i32
    %c0_i32_0 = arith.constant 0 : i32
    %c0_i32_1 = arith.constant 0 : i32
    return %c0_i32, %c0_i32_0 : i32, i32
  }
  func.func @transform_4(%arg0: i32, %arg1: i32) -> (i32, i32) {
    %c0_i32 = arith.constant 0 : i32
    %c0_i32_0 = arith.constant 0 : i32
    %c0_i32_1 = arith.constant 0 : i32
    return %c0_i32, %c0_i32_0 : i32, i32
  }
  func.func @transform_5(%arg0: i32, %arg1: i32) -> (i32, i32) {
    %c0_i32 = arith.constant 0 : i32
    %c0_i32_0 = arith.constant 0 : i32
    %c0_i32_1 = arith.constant 0 : i32
    return %c0_i32, %c0_i32_0 : i32, i32
  }
  func.func @transform_6(%arg0: i32, %arg1: i32) -> (i32, i32, i32, i32) {
    %c0_i32 = arith.constant 0 : i32
    %c0_i32_0 = arith.constant 0 : i32
    %c0_i32_1 = arith.constant 0 : i32
    return %arg0, %arg1, %c0_i32, %c0_i32_0 : i32, i32, i32, i32
  }
}

</mosaic_0001>

<llo_original>
// kernel: tpu_custom_call.1
$region0: #{tpu_custom_call.1}
  #allocation0 [shape = 'u32[]', space=smem, size = 0x4, offset = 0x4, fixed_abs, tag = 'smem constant byte address 0x4 - core index']
  #allocation1 [shape = 'u32[144,128]{1,0:T(1,128)}', space=vmem, size = 0x12000, scoped, tag = 'internal scratch']
  #allocation2 [shape = 'bf16[12,20,128]{2,1,0:T(8,128)(2,1)}', space=vmem, size = 0x12000, scoped, tag = 'scratch operand']
  %s0 = inlined_call_operand.vmem [shape: bf16[2,20,20,128], index: 0, kind: input, shape index: {}]
  %s1 = inlined_call_operand.vmem [shape: bf16[2,20,20,128], index: 1, kind: input, shape index: {}]
  %s2 = inlined_call_operand.vmem [shape: bf16[128,128], index: 2, kind: input, shape index: {}]
  %s3 = inlined_call_operand.vmem [shape: f32[1,128], index: 3, kind: input, shape index: {}]
  %s4 = inlined_call_operand.vmem [shape: f32[25,128], index: 4, kind: input, shape index: {}]
  %s5 = inlined_call_operand.vmem [shape: f32[1,128], index: 5, kind: input, shape index: {}]
  %s6 = inlined_call_operand.hbm [shape: bf16[2,16,16,256], index: 6, kind: output, shape index: {}]
  %s7 = sld [smem:[#allocation0]]
  $region57: #{tpu_custom_call.1} parent=0
    _
  %s9 = ssub.s32 1, %s7
  %s10 = scalar_select 0, %s9, %s7
  $region1: #{tpu_custom_call.1} parent=0
    #allocation3 [shape = 'u8[131072]{0}', space=vmem, size = 0x20000, scoped, tag = 'output window, operand 0']
    #allocation4 [shape = 's32[2]{0}', space=sflag, size = 0x8, scoped, tag = 'scoped memory for tpu_custom_call.1']
    %11 = vsyncpa [#allocation4], 0
    %s12 = scalar_lea.sflag [#allocation4], 1
    %13 = vsyncpa %s12, 0
    loop: start=0, step=1, limit=6
    $region2: #{tpu_custom_call.1} parent=1 // loop_pre_header
      _
    $region3: #{tpu_custom_call.1} parent=1 // loop_header
      %s15 = sphi 0, %s19
      %p16 = scmp.ge.s32.totalorder %s15, 6
      %s22 = sphi 0, %s34
      %s23 = sphi 0, %s30
      %s24 = sphi 0, %s22
      %s25 = sphi 0, %s23
      %s26 = sphi 0, %s24
      %s27 = sphi 0, %s25
      %s39 = sphi 0, %s41
      %s42 = sphi 0, %s39
      %s43 = sphi 0, %s42
      %s59 = sphi 0, %s43
      %s71 = sphi 0, %s73
      %s74 = sphi 0, %s71
      %s75 = sphi 0, %s74
      %s91 = sphi 0, %s75
      %s95 = sphi 0, %s95
      %s97 = sphi 0, %s95
      %s98 = sphi 0, %s97
      %s112 = sphi 0, %s98
      %s116 = sphi 0, %s116
      %s118 = sphi 0, %s116
      %s119 = sphi 0, %s118
      %s133 = sphi 0, %s119
      %s137 = sphi 0, %s137
      %s139 = sphi 0, %s137
      %s140 = sphi 0, %s139
      %s154 = sphi 0, %s140
      %s158 = sphi 0, %s158
      %s160 = sphi 0, %s158
      %s161 = sphi 0, %s160
      %s175 = sphi 0, %s161
      %s183 = sphi 0, %s185
      %s186 = sphi 0, %s183
      %s187 = sphi 0, %s186
      %s203 = sphi 0, %s187
    $region4: #{tpu_custom_call.1} parent=1 // loop_header_branch
      %18 = sbr.rel (%p16) target = $region8
    $region5: #{tpu_custom_call.1} parent=1 // loop_body
      %s20 = ssub.s32 %s15, 1
      %s21 = ssub.s32 %s15, 2
      %s28 = sadd.s32 1, %s23
      %p29 = scmp.ge.s32.totalorder %s28, 2
      %s30 = scalar_select %p29, 0, %s28
      %s31 = sadd.s32 1, %s22
      %s32 = scalar_select %p29, %s31, %s22
      %p33 = scmp.ge.s32.totalorder %s32, 2
      %s34 = scalar_select %p33, 0, %s32
      %s35 = ssub.s32 %s22, %s34
      %s36 = ssub.s32 %s23, %s30
      %s37 = sor.u32 %s35, %s36
      %p38 = scmp.eq.s32.totalorder %s37, 0
      %s40 = sadd.s32 %s39, 1
      %s41 = scalar_select %p38, %s39, %s40
      %p44 = pneg %p38
      %p45 = scmp.eq.s32.totalorder %s15, 3
      %p46 = por %p44, %p45
      %p47 = scmp.ne.s32.totalorder %s39, %s42
      %p48 = scmp.eq.s32.totalorder %s15, 0
      %p49 = por %p47, %p48
      %p50 = scmp.ne.s32.totalorder %s39, %s42
      %p51 = scmp.eq.s32.totalorder %s20, 3
      %p52 = por %p50, %p51
      %p53 = scmp.ne.s32.totalorder %s42, %s43
      %p54 = scmp.eq.s32.totalorder %s20, 0
      %p55 = por %p53, %p54
      %p56 = scmp.ne.s32.totalorder %s42, %s43
      %p57 = scmp.eq.s32.totalorder %s21, 3
      %p58 = por %p56, %p57
      %p60 = scmp.ne.s32.totalorder %s43, %s59
      %p61 = scmp.eq.s32.totalorder %s21, 0
      %p62 = por %p60, %p61
      %s63 = sadd.s32 %s23, 1
      %s64 = smul.u32 %s63, 2
      %s65 = sadd.s32 %s30, 1
      %s66 = smul.u32 %s65, 2
      %s67 = ssub.s32 %s22, %s34
      %s68 = ssub.s32 %s64, %s66
      %s69 = sor.u32 %s67, %s68
      %p70 = scmp.eq.s32.totalorder %s69, 0
      %s72 = sadd.s32 %s71, 1
      %s73 = scalar_select %p70, %s71, %s72
      %p76 = pneg %p70
      %p77 = scmp.eq.s32.totalorder %s15, 3
      %p78 = por %p76, %p77
      %p79 = scmp.ne.s32.totalorder %s71, %s74
      %p80 = scmp.eq.s32.totalorder %s15, 0
      %p81 = por %p79, %p80
      %p82 = scmp.ne.s32.totalorder %s71, %s74
      %p83 = scmp.eq.s32.totalorder %s20, 3
      %p84 = por %p82, %p83
      %p85 = scmp.ne.s32.totalorder %s74, %s75
      %p86 = scmp.eq.s32.totalorder %s20, 0
      %p87 = por %p85, %p86
      %p88 = scmp.ne.s32.totalorder %s74, %s75
      %p89 = scmp.eq.s32.totalorder %s21, 3
      %p90 = por %p88, %p89
      %p92 = scmp.ne.s32.totalorder %s75, %s91
      %p93 = scmp.eq.s32.totalorder %s21, 0
      %p94 = por %p92, %p93
      %s96 = sadd.s32 %s95, 1
      %p99 = scmp.eq.s32.totalorder %s15, 3
      %p100 = scmp.ne.s32.totalorder %s95, %s97
      %p101 = scmp.eq.s32.totalorder %s15, 0
      %p102 = por %p100, %p101
      %p103 = scmp.ne.s32.totalorder %s95, %s97
      %p104 = scmp.eq.s32.totalorder %s20, 3
      %p105 = por %p103, %p104
      %p106 = scmp.ne.s32.totalorder %s97, %s98
      %p107 = scmp.eq.s32.totalorder %s20, 0
      %p108 = por %p106, %p107
      %p109 = scmp.ne.s32.totalorder %s97, %s98
      %p110 = scmp.eq.s32.totalorder %s21, 3
      %p111 = por %p109, %p110
      %p113 = scmp.ne.s32.totalorder %s98, %s112
      %p114 = scmp.eq.s32.totalorder %s21, 0
      %p115 = por %p113, %p114
      %s117 = sadd.s32 %s116, 1
      %p120 = scmp.eq.s32.totalorder %s15, 3
      %p121 = scmp.ne.s32.totalorder %s116, %s118
      %p122 = scmp.eq.s32.totalorder %s15, 0
      %p123 = por %p121, %p122
      %p124 = scmp.ne.s32.totalorder %s116, %s118
      %p125 = scmp.eq.s32.totalorder %s20, 3
      %p126 = por %p124, %p125
      %p127 = scmp.ne.s32.totalorder %s118, %s119
      %p128 = scmp.eq.s32.totalorder %s20, 0
      %p129 = por %p127, %p128
      %p130 = scmp.ne.s32.totalorder %s118, %s119
      %p131 = scmp.eq.s32.totalorder %s21, 3
      %p132 = por %p130, %p131
      %p134 = scmp.ne.s32.totalorder %s119, %s133
      %p135 = scmp.eq.s32.totalorder %s21, 0
      %p136 = por %p134, %p135
      %s138 = sadd.s32 %s137, 1
      %p141 = scmp.eq.s32.totalorder %s15, 3
      %p142 = scmp.ne.s32.totalorder %s137, %s139
      %p143 = scmp.eq.s32.totalorder %s15, 0
      %p144 = por %p142, %p143
      %p145 = scmp.ne.s32.totalorder %s137, %s139
      %p146 = scmp.eq.s32.totalorder %s20, 3
      %p147 = por %p145, %p146
      %p148 = scmp.ne.s32.totalorder %s139, %s140
      %p149 = scmp.eq.s32.totalorder %s20, 0
      %p150 = por %p148, %p149
      %p151 = scmp.ne.s32.totalorder %s139, %s140
      %p152 = scmp.eq.s32.totalorder %s21, 3
      %p153 = por %p151, %p152
      %p155 = scmp.ne.s32.totalorder %s140, %s154
      %p156 = scmp.eq.s32.totalorder %s21, 0
      %p157 = por %p155, %p156
      %s159 = sadd.s32 %s158, 1
      %p162 = scmp.eq.s32.totalorder %s15, 3
      %p163 = scmp.ne.s32.totalorder %s158, %s160
      %p164 = scmp.eq.s32.totalorder %s15, 0
      %p165 = por %p163, %p164
      %p166 = scmp.ne.s32.totalorder %s158, %s160
      %p167 = scmp.eq.s32.totalorder %s20, 3
      %p168 = por %p166, %p167
      %p169 = scmp.ne.s32.totalorder %s160, %s161
      %p170 = scmp.eq.s32.totalorder %s20, 0
      %p171 = por %p169, %p170
      %p172 = scmp.ne.s32.totalorder %s160, %s161
      %p173 = scmp.eq.s32.totalorder %s21, 3
      %p174 = por %p172, %p173
      %p176 = scmp.ne.s32.totalorder %s161, %s175
      %p177 = scmp.eq.s32.totalorder %s21, 0
      %p178 = por %p176, %p177
      %s179 = ssub.s32 %s22, %s34
      %s180 = ssub.s32 %s23, %s30
      %s181 = sor.u32 %s179, %s180
      %p182 = scmp.eq.s32.totalorder %s181, 0
      %s184 = sadd.s32 %s183, 1
      %s185 = scalar_select %p182, %s183, %s184
      %p188 = pneg %p182
      %p189 = scmp.eq.s32.totalorder %s15, 3
      %p190 = por %p188, %p189
      %p191 = scmp.ne.s32.totalorder %s183, %s186
      %p192 = scmp.eq.s32.totalorder %s15, 0
      %p193 = por %p191, %p192
      %p194 = scmp.ne.s32.totalorder %s183, %s186
      %p195 = scmp.eq.s32.totalorder %s20, 3
      %p196 = por %p194, %p195
      %p197 = scmp.ne.s32.totalorder %s186, %s187
      %p198 = scmp.eq.s32.totalorder %s20, 0
      %p199 = por %p197, %p198
      %p200 = scmp.ne.s32.totalorder %s186, %s187
      %p201 = scmp.eq.s32.totalorder %s21, 3
      %p202 = por %p200, %p201
      %p204 = scmp.ne.s32.totalorder %s187, %s203
      %p205 = scmp.eq.s32.totalorder %s21, 0
      %p206 = por %p204, %p205
      %p207 = scmp.le.s32.totalorder 1, %s15
      %p208 = scmp.lt.s32.totalorder %s15, 5
      %p209 = pnand %p207, %p208
      %p210 = pneg %p209
      // Predicated region
      $region9: #{tpu_custom_call.1} parent=5 // pred_check
        _
      $region10: #{tpu_custom_call.1} parent=5 // pred_check_branch
        %212 = sbr.rel (%p209) target = $region12
      $region11: #{tpu_custom_call.1} parent=5 // pred_region
        %s213 = ssub.s32 %s15, 1
        // Predicated region
        $region13: #{tpu_custom_call.1} parent=11 // pred_check
          %p214 = pneg %p108
        $region14: #{tpu_custom_call.1} parent=11 // pred_check_branch
          %216 = sbr.rel (%p214) target = $region16
        $region15: #{tpu_custom_call.1} parent=11 // pred_region
          _
        $region16: #{tpu_custom_call.1} parent=11 // pred_fallthru
          _
        // Predicated region
        $region17: #{tpu_custom_call.1} parent=11 // pred_check
          %p217 = pneg %p129
        $region18: #{tpu_custom_call.1} parent=11 // pred_check_branch
          %219 = sbr.rel (%p217) target = $region20
        $region19: #{tpu_custom_call.1} parent=11 // pred_region
          _
        $region20: #{tpu_custom_call.1} parent=11 // pred_fallthru
          _
        // Predicated region
        $region21: #{tpu_custom_call.1} parent=11 // pred_check
          %p220 = pneg %p150
        $region22: #{tpu_custom_call.1} parent=11 // pred_check_branch
          %222 = sbr.rel (%p220) target = $region24
        $region23: #{tpu_custom_call.1} parent=11 // pred_region
          _
        $region24: #{tpu_custom_call.1} parent=11 // pred_fallthru
          _
        // Predicated region
        $region25: #{tpu_custom_call.1} parent=11 // pred_check
          %p223 = pneg %p171
        $region26: #{tpu_custom_call.1} parent=11 // pred_check_branch
          %225 = sbr.rel (%p223) target = $region28
        $region27: #{tpu_custom_call.1} parent=11 // pred_region
          _
        $region28: #{tpu_custom_call.1} parent=11 // pred_fallthru
          _
      $region12: #{tpu_custom_call.1} parent=5 // pred_fallthru
        _
      %p226 = scmp.lt.s32.totalorder %s15, 4
      // Predicated region
      $region29: #{tpu_custom_call.1} parent=5 // pred_check
        %p227 = pneg %p226
      $region30: #{tpu_custom_call.1} parent=5 // pred_check_branch
        %229 = sbr.rel (%p227) target = $region32
      $region31: #{tpu_custom_call.1} parent=5 // pred_region
        // Predicated region
        $region33: #{tpu_custom_call.1} parent=31 // pred_check
          %p230 = pneg %p49
        $region34: #{tpu_custom_call.1} parent=31 // pred_check_branch
          %232 = sbr.rel (%p230) target = $region36
        $region35: #{tpu_custom_call.1} parent=31 // pred_region
          %s233 = smul.u32 8, %s23
          %s234 = ssub.s32 20, %s233
          %p235 = scmp.lt.s32.totalorder %s234, 8
          %s236 = scalar_select %p235, %s234, 8
          %s237 = smul.u32 64, %s236
          %s238 = smul.u32 %s237, 3
          %p239 = scmp.lt.s32.totalorder %s22, 1
          %s240 = scalar_select %p239, %s22, 1
          %p241 = scmp.lt.s32.totalorder %s233, 19
          %s242 = scalar_select %p241, %s233, 19
          %s243 = smul.addr %s242, 3
          %s244 = smul.addr %s240, 60
          %s245 = sadd.s32 %s243, %s244
          %s246 = smul.addr %s245, 4
          %s247 = scalar_lea.vmem %s0, %s246
          %s248 = smul.u32 8, %s23
          %s249 = ssub.s32 20, %s248
          %p250 = scmp.lt.s32.totalorder %s249, 8
          %s251 = scalar_select %p250, %s249, 8
          %s252 = smul.u32 64, %s251
          %s253 = smul.u32 %s252, 3
        $region36: #{tpu_custom_call.1} parent=31 // pred_fallthru
          _
        // Predicated region
        $region37: #{tpu_custom_call.1} parent=31 // pred_check
          %p254 = pneg %p81
        $region38: #{tpu_custom_call.1} parent=31 // pred_check_branch
          %256 = sbr.rel (%p254) target = $region40
        $region39: #{tpu_custom_call.1} parent=31 // pred_region
          %s257 = sadd.s32 %s23, 1
          %s258 = smul.u32 %s257, 2
          %s259 = smul.u32 4, %s258
          %p260 = scmp.lt.s32.totalorder %s22, 1
          %s261 = scalar_select %p260, %s22, 1
          %p262 = scmp.lt.s32.totalorder %s259, 19
          %s263 = scalar_select %p262, %s259, 19
          %s264 = smul.addr %s263, 3
          %s265 = smul.addr %s261, 60
          %s266 = sadd.s32 %s264, %s265
          %s267 = smul.addr %s266, 4
          %s268 = scalar_lea.vmem %s1, %s267
          %s269 = sadd.s32 %s23, 1
          %s270 = smul.u32 %s269, 2
          %s271 = smul.u32 4, %s270
        $region40: #{tpu_custom_call.1} parent=31 // pred_fallthru
          _
      $region32: #{tpu_custom_call.1} parent=5 // pred_fallthru
        _
      %p272 = scmp.le.s32.totalorder 1, %s15
      %p273 = scmp.lt.s32.totalorder %s15, 5
      %p274 = pnand %p272, %p273
      %p275 = pneg %p274
      // Predicated region
      $region41: #{tpu_custom_call.1} parent=5 // pred_check
        _
      $region42: #{tpu_custom_call.1} parent=5 // pred_check_branch
        %277 = sbr.rel (%p274) target = $region44
      $region43: #{tpu_custom_call.1} parent=5 // pred_region
        %s278 = ssub.s32 %s15, 1
        %s279 = smul.u32 8, %s25
        %s280 = ssub.s32 20, %s279
        %p281 = scmp.lt.s32.totalorder %s280, 8
        %s282 = scalar_select %p281, %s280, 8
        %s283 = smul.u32 64, %s282
        %s284 = smul.u32 %s283, 3
        %p285 = scmp.lt.s32.totalorder %s24, 1
        %s286 = scalar_select %p285, %s24, 1
        %p287 = scmp.lt.s32.totalorder %s279, 19
        %s288 = scalar_select %p287, %s279, 19
        %s289 = smul.addr %s288, 3
        %s290 = smul.addr %s286, 60
        %s291 = sadd.s32 %s289, %s290
        %s292 = smul.addr %s291, 4
        %s293 = scalar_lea.vmem %s0, %s292
        %p294 = pneg %p55
        %p295 = pneg %p52
        %s296 = sadd.s32 %s25, 1
        %s297 = smul.u32 %s296, 2
        %s298 = smul.u32 4, %s297
        %p299 = scmp.lt.s32.totalorder %s24, 1
        %s300 = scalar_select %p299, %s24, 1
        %p301 = scmp.lt.s32.totalorder %s298, 19
        %s302 = scalar_select %p301, %s298, 19
        %s303 = smul.addr %s302, 3
        %s304 = smul.addr %s300, 60
        %s305 = sadd.s32 %s303, %s304
        %s306 = smul.addr %s305, 4
        %s307 = scalar_lea.vmem %s1, %s306
        %p308 = pneg %p87
        %p309 = pneg %p84
        %p310 = pneg %p108
        %p311 = pneg %p105
        %p312 = pneg %p129
        %p313 = pneg %p126
        %p314 = pneg %p150
        %p315 = pneg %p147
        %p316 = pneg %p171
        %p317 = pneg %p168
        %p318 = pneg %p199
        %p319 = pneg %p196
        %s320 = sand.u32 %s186, 1
        %s321 = scalar_lea.sflag [#allocation4], %s320
        %s322 = sand.u32 %s186, 1
        %s323 = smul.addr %s322, 128
        %s324 = scalar_lea.vmem [#allocation3], %s323
        %s325 = smul.u32 8, %s25
        %s326 = ssub.s32 20, %s325
        %p327 = scmp.lt.s32.totalorder %s326, 8
        %s328 = scalar_select %p327, %s326, 8
        %s329 = smul.u32 64, %s328
        %s330 = smul.u32 %s329, 3
        %p331 = scmp.lt.s32.totalorder %s24, 1
        %s332 = scalar_select %p331, %s24, 1
        %p333 = scmp.lt.s32.totalorder %s325, 19
        %s334 = scalar_select %p333, %s325, 19
        %s335 = smul.addr %s334, 3
        %s336 = smul.addr %s332, 60
        %s337 = sadd.s32 %s335, %s336
        %s338 = smul.addr %s337, 4
        %s339 = scalar_lea.vmem %s0, %s338
        %s340 = smul.u32 8, %s25
        %s341 = ssub.s32 20, %s340
        %p342 = scmp.lt.s32.totalorder %s341, 8
        %s343 = scalar_select %p342, %s341, 8
        %s344 = smul.u32 64, %s343
        %s345 = smul.u32 %s344, 3
        %s346 = sadd.s32 %s25, 1
        %s347 = smul.u32 %s346, 2
        %s348 = smul.u32 4, %s347
        %p349 = scmp.lt.s32.totalorder %s24, 1
        %s350 = scalar_select %p349, %s24, 1
        %p351 = scmp.lt.s32.totalorder %s348, 19
        %s352 = scalar_select %p351, %s348, 19
        %s353 = smul.addr %s352, 3
        %s354 = smul.addr %s350, 60
        %s355 = sadd.s32 %s353, %s354
        %s356 = smul.addr %s355, 4
        %s357 = scalar_lea.vmem %s1, %s356
        %s358 = sadd.s32 %s25, 1
        %s359 = smul.u32 %s358, 2
        %s360 = smul.u32 4, %s359
        %s361 = smul.u32 8, %s25
        %s363 = smul.u32 %s25, 8
        %s364 = ssub.s32 %s363, 2
        %v365 = vld [vmem:[%s339] sm:$0xf]
        %v366 = vld [vmem:[%s339 + $0x4] sm:$0xf]
        %v367 = vld [vmem:[%s339 + $0x8] sm:$0x3]
        %v368 = vld [vmem:[%s339 + $0xc] sm:$0xf]
        %v369 = vld [vmem:[%s339 + $0x10] sm:$0xf]
        %v370 = vld [vmem:[%s339 + $0x14] sm:$0x3]
        %v371 = vld [vmem:[%s339 + $0x18] sm:$0xf]
        %v372 = vld [vmem:[%s339 + $0x1c] sm:$0xf]
        %v373 = vld [vmem:[%s339 + $0x20] sm:$0x3]
        %v374 = vld [vmem:[%s339 + $0x24] sm:$0xf]
        %v375 = vld [vmem:[%s339 + $0x28] sm:$0xf]
        %v376 = vld [vmem:[%s339 + $0x2c] sm:$0x3]
        %v377 = vld [vmem:[%s339 + $0x30] sm:$0xf]
        %v378 = vld [vmem:[%s339 + $0x34] sm:$0xf]
        %v379 = vld [vmem:[%s339 + $0x38] sm:$0x3]
        %v380 = vld [vmem:[%s339 + $0x3c] sm:$0xf]
        %v381 = vld [vmem:[%s339 + $0x40] sm:$0xf]
        %v382 = vld [vmem:[%s339 + $0x44] sm:$0x3]
        %v383 = vld [vmem:[%s339 + $0x48] sm:$0xf]
        %v384 = vld [vmem:[%s339 + $0x4c] sm:$0xf]
        %v385 = vld [vmem:[%s339 + $0x50] sm:$0x3]
        %v386 = vld [vmem:[%s339 + $0x54] sm:$0xf]
        %v387 = vld [vmem:[%s339 + $0x58] sm:$0xf]
        %v388 = vld [vmem:[%s339 + $0x5c] sm:$0x3]
        %v414 = vunpack.c.l.s4 1983009808
        %v415 = vunpack.c.0.s8 %v414
        %v416 = vlaneseq
        %v417 = vshrl.u32 %v416, 7
        %v418 = vsub.s32 %v415, %v417
        %v419 = vrot.slane %v365, %v418
        %v420 = vcombine.high %v419, %v419
        %v422 = vunpack.c.l.s4 1983009808
        %v423 = vunpack.c.0.s8 %v422
        %v424 = vlaneseq
        %v425 = vshrl.u32 %v424, 7
        %v426 = vsub.s32 %v423, %v425
        %v427 = vrot.slane %v366, %v426
        %v428 = vcombine.high %v427, %v427
        %v430 = vunpack.c.l.s4 1983009808
        %v431 = vunpack.c.0.s8 %v430
        %v432 = vlaneseq
        %v433 = vshrl.u32 %v432, 7
        %v434 = vsub.s32 %v431, %v433
        %v435 = vrot.slane %v367, %v434
        %v437 = vunpack.c.l.s4 1983009808
        %v438 = vunpack.c.0.s8 %v437
        %v439 = vlaneseq
        %v440 = vshrl.u32 %v439, 7
        %v441 = vsub.s32 %v438, %v440
        %v442 = vrot.slane %v368, %v441
        %v443 = vcombine.high %v442, %v442
        %v445 = vunpack.c.l.s4 1983009808
        %v446 = vunpack.c.0.s8 %v445
        %v447 = vlaneseq
        %v448 = vshrl.u32 %v447, 7
        %v449 = vsub.s32 %v446, %v448
        %v450 = vrot.slane %v369, %v449
        %v451 = vcombine.high %v450, %v450
        %v453 = vunpack.c.l.s4 1983009808
        %v454 = vunpack.c.0.s8 %v453
        %v455 = vlaneseq
        %v456 = vshrl.u32 %v455, 7
        %v457 = vsub.s32 %v454, %v456
        %v458 = vrot.slane %v370, %v457
        %v460 = vunpack.c.l.s4 1983009808
        %v461 = vunpack.c.0.s8 %v460
        %v462 = vlaneseq
        %v463 = vshrl.u32 %v462, 7
        %v464 = vsub.s32 %v461, %v463
        %v465 = vrot.slane %v371, %v464
        %v466 = vcombine.high %v465, %v465
        %v468 = vunpack.c.l.s4 1983009808
        %v469 = vunpack.c.0.s8 %v468
        %v470 = vlaneseq
        %v471 = vshrl.u32 %v470, 7
        %v472 = vsub.s32 %v469, %v471
        %v473 = vrot.slane %v372, %v472
        %v474 = vcombine.high %v473, %v473
        %v476 = vunpack.c.l.s4 1983009808
        %v477 = vunpack.c.0.s8 %v476
        %v478 = vlaneseq
        %v479 = vshrl.u32 %v478, 7
        %v480 = vsub.s32 %v477, %v479
        %v481 = vrot.slane %v373, %v480
        %v483 = vunpack.c.l.s4 1983009808
        %v484 = vunpack.c.0.s8 %v483
        %v485 = vlaneseq
        %v486 = vshrl.u32 %v485, 7
        %v487 = vsub.s32 %v484, %v486
        %v488 = vrot.slane %v374, %v487
        %v489 = vcombine.high %v488, %v488
        %v491 = vunpack.c.l.s4 1983009808
        %v492 = vunpack.c.0.s8 %v491
        %v493 = vlaneseq
        %v494 = vshrl.u32 %v493, 7
        %v495 = vsub.s32 %v492, %v494
        %v496 = vrot.slane %v375, %v495
        %v497 = vcombine.high %v496, %v496
        %v499 = vunpack.c.l.s4 1983009808
        %v500 = vunpack.c.0.s8 %v499
        %v501 = vlaneseq
        %v502 = vshrl.u32 %v501, 7
        %v503 = vsub.s32 %v500, %v502
        %v504 = vrot.slane %v376, %v503
        %v506 = vunpack.c.l.s4 1983009808
        %v507 = vunpack.c.0.s8 %v506
        %v508 = vlaneseq
        %v509 = vshrl.u32 %v508, 7
        %v510 = vsub.s32 %v507, %v509
        %v511 = vrot.slane %v377, %v510
        %v512 = vcombine.high %v511, %v511
        %v514 = vunpack.c.l.s4 1983009808
        %v515 = vunpack.c.0.s8 %v514
        %v516 = vlaneseq
        %v517 = vshrl.u32 %v516, 7
        %v518 = vsub.s32 %v515, %v517
        %v519 = vrot.slane %v378, %v518
        %v520 = vcombine.high %v519, %v519
        %v522 = vunpack.c.l.s4 1983009808
        %v523 = vunpack.c.0.s8 %v522
        %v524 = vlaneseq
        %v525 = vshrl.u32 %v524, 7
        %v526 = vsub.s32 %v523, %v525
        %v527 = vrot.slane %v379, %v526
        %v529 = vunpack.c.l.s4 1983009808
        %v530 = vunpack.c.0.s8 %v529
        %v531 = vlaneseq
        %v532 = vshrl.u32 %v531, 7
        %v533 = vsub.s32 %v530, %v532
        %v534 = vrot.slane %v380, %v533
        %v535 = vcombine.high %v534, %v534
        %v537 = vunpack.c.l.s4 1983009808
        %v538 = vunpack.c.0.s8 %v537
        %v539 = vlaneseq
        %v540 = vshrl.u32 %v539, 7
        %v541 = vsub.s32 %v538, %v540
        %v542 = vrot.slane %v381, %v541
        %v543 = vcombine.high %v542, %v542
        %v545 = vunpack.c.l.s4 1983009808
        %v546 = vunpack.c.0.s8 %v545
        %v547 = vlaneseq
        %v548 = vshrl.u32 %v547, 7
        %v549 = vsub.s32 %v546, %v548
        %v550 = vrot.slane %v382, %v549
        %v552 = vunpack.c.l.s4 1983009808
        %v553 = vunpack.c.0.s8 %v552
        %v554 = vlaneseq
        %v555 = vshrl.u32 %v554, 7
        %v556 = vsub.s32 %v553, %v555
        %v557 = vrot.slane %v383, %v556
        %v558 = vcombine.high %v557, %v557
        %v560 = vunpack.c.l.s4 1983009808
        %v561 = vunpack.c.0.s8 %v560
        %v562 = vlaneseq
        %v563 = vshrl.u32 %v562, 7
        %v564 = vsub.s32 %v561, %v563
        %v565 = vrot.slane %v384, %v564
        %v566 = vcombine.high %v565, %v565
        %v568 = vunpack.c.l.s4 1983009808
        %v569 = vunpack.c.0.s8 %v568
        %v570 = vlaneseq
        %v571 = vshrl.u32 %v570, 7
        %v572 = vsub.s32 %v569, %v571
        %v573 = vrot.slane %v385, %v572
        %v575 = vunpack.c.l.s4 1983009808
        %v576 = vunpack.c.0.s8 %v575
        %v577 = vlaneseq
        %v578 = vshrl.u32 %v577, 7
        %v579 = vsub.s32 %v576, %v578
        %v580 = vrot.slane %v386, %v579
        %v581 = vcombine.high %v580, %v580
        %v583 = vunpack.c.l.s4 1983009808
        %v584 = vunpack.c.0.s8 %v583
        %v585 = vlaneseq
        %v586 = vshrl.u32 %v585, 7
        %v587 = vsub.s32 %v584, %v586
        %v588 = vrot.slane %v387, %v587
        %v589 = vcombine.high %v588, %v588
        %v591 = vunpack.c.l.s4 1983009808
        %v592 = vunpack.c.0.s8 %v591
        %v593 = vlaneseq
        %v594 = vshrl.u32 %v593, 7
        %v595 = vsub.s32 %v592, %v594
        %v596 = vrot.slane %v388, %v595
        %v597 = vld [vmem:[%s2] sm:$0xf]
        %v598 = vld [vmem:[%s2 + $0x4] sm:$0xf]
        %v599 = vld [vmem:[%s2 + $0x8] sm:$0xf]
        %v600 = vld [vmem:[%s2 + $0xc] sm:$0xf]
        %v601 = vld [vmem:[%s2 + $0x10] sm:$0xf]
        %v602 = vld [vmem:[%s2 + $0x14] sm:$0xf]
        %v603 = vld [vmem:[%s2 + $0x18] sm:$0xf]
        %v604 = vld [vmem:[%s2 + $0x1c] sm:$0xf]
        %v605 = vld [vmem:[%s2 + $0x20] sm:$0xf]
        %v606 = vld [vmem:[%s2 + $0x24] sm:$0xf]
        %v607 = vld [vmem:[%s2 + $0x28] sm:$0xf]
        %v608 = vld [vmem:[%s2 + $0x2c] sm:$0xf]
        %v609 = vld [vmem:[%s2 + $0x30] sm:$0xf]
        %v610 = vld [vmem:[%s2 + $0x34] sm:$0xf]
        %v611 = vld [vmem:[%s2 + $0x38] sm:$0xf]
        %v612 = vld [vmem:[%s2 + $0x3c] sm:$0xf]
        %v613 = vld [vmem:[%s3] sm:$0x1]
        %v615 = vlaneseq
        %v616 = vshrl.u32 %v615, 7
        %v617 = vsub.s32 0, %v616
        %v618 = vrot.slane %v613, %v617
        %v620 = vcombine.low %v419, %v420
        %v621 = vcombine.low %v427, %v428
        %v623 = vunpack.c.l.s4 1983009808
        %v624 = vunpack.c.0.s8 %v623
        %v625 = vlaneseq
        %v626 = vshrl.u32 %v625, 7
        %v627 = vsub.s32 %v624, %v626
        %v628 = vrot.slane %v620, %v627
        %v630 = vunpack.c.l.s4 1983009808
        %v631 = vunpack.c.0.s8 %v630
        %v632 = vlaneseq
        %v633 = vshrl.u32 %v632, 7
        %v634 = vsub.s32 %v631, %v633
        %v635 = vrot.slane %v621, %v634
        %v636 = vcombine.low %v628, %v635
        %v637 = vcombine.low %v435, %v442
        %v638 = vcombine.low %v443, %v450
        %v640 = vunpack.c.l.s4 1983009808
        %v641 = vunpack.c.0.s8 %v640
        %v642 = vlaneseq
        %v643 = vshrl.u32 %v642, 7
        %v644 = vsub.s32 %v641, %v643
        %v645 = vrot.slane %v637, %v644
        %v647 = vunpack.c.l.s4 1983009808
        %v648 = vunpack.c.0.s8 %v647
        %v649 = vlaneseq
        %v650 = vshrl.u32 %v649, 7
        %v651 = vsub.s32 %v648, %v650
        %v652 = vrot.slane %v638, %v651
        %v653 = vcombine.low %v645, %v652
        %v654 = vcombine.low %v451, %v458
        %v655 = vcombine.low %v465, %v466
        %v657 = vunpack.c.l.s4 1983009808
        %v658 = vunpack.c.0.s8 %v657
        %v659 = vlaneseq
        %v660 = vshrl.u32 %v659, 7
        %v661 = vsub.s32 %v658, %v660
        %v662 = vrot.slane %v654, %v661
        %v664 = vunpack.c.l.s4 1983009808
        %v665 = vunpack.c.0.s8 %v664
        %v666 = vlaneseq
        %v667 = vshrl.u32 %v666, 7
        %v668 = vsub.s32 %v665, %v667
        %v669 = vrot.slane %v655, %v668
        %v670 = vcombine.low %v662, %v669
        %v671 = vcombine.low %v473, %v474
        %v672 = vcombine.low %v481, %v488
        %v674 = vunpack.c.l.s4 1983009808
        %v675 = vunpack.c.0.s8 %v674
        %v676 = vlaneseq
        %v677 = vshrl.u32 %v676, 7
        %v678 = vsub.s32 %v675, %v677
        %v679 = vrot.slane %v671, %v678
        %v681 = vunpack.c.l.s4 1983009808
        %v682 = vunpack.c.0.s8 %v681
        %v683 = vlaneseq
        %v684 = vshrl.u32 %v683, 7
        %v685 = vsub.s32 %v682, %v684
        %v686 = vrot.slane %v672, %v685
        %v687 = vcombine.low %v679, %v686
        %v688 = vcombine.low %v489, %v496
        %v689 = vcombine.low %v497, %v504
        %v691 = vunpack.c.l.s4 1983009808
        %v692 = vunpack.c.0.s8 %v691
        %v693 = vlaneseq
        %v694 = vshrl.u32 %v693, 7
        %v695 = vsub.s32 %v692, %v694
        %v696 = vrot.slane %v688, %v695
        %v698 = vunpack.c.l.s4 1983009808
        %v699 = vunpack.c.0.s8 %v698
        %v700 = vlaneseq
        %v701 = vshrl.u32 %v700, 7
        %v702 = vsub.s32 %v699, %v701
        %v703 = vrot.slane %v689, %v702
        %v704 = vcombine.low %v696, %v703
        %v705 = vcombine.low %v511, %v512
        %v706 = vcombine.low %v519, %v520
        %v708 = vunpack.c.l.s4 1983009808
        %v709 = vunpack.c.0.s8 %v708
        %v710 = vlaneseq
        %v711 = vshrl.u32 %v710, 7
        %v712 = vsub.s32 %v709, %v711
        %v713 = vrot.slane %v705, %v712
        %v715 = vunpack.c.l.s4 1983009808
        %v716 = vunpack.c.0.s8 %v715
        %v717 = vlaneseq
        %v718 = vshrl.u32 %v717, 7
        %v719 = vsub.s32 %v716, %v718
        %v720 = vrot.slane %v706, %v719
        %v721 = vcombine.low %v713, %v720
        %v722 = vcombine.low %v527, %v534
        %v723 = vcombine.low %v535, %v542
        %v725 = vunpack.c.l.s4 1983009808
        %v726 = vunpack.c.0.s8 %v725
        %v727 = vlaneseq
        %v728 = vshrl.u32 %v727, 7
        %v729 = vsub.s32 %v726, %v728
        %v730 = vrot.slane %v722, %v729
        %v732 = vunpack.c.l.s4 1983009808
        %v733 = vunpack.c.0.s8 %v732
        %v734 = vlaneseq
        %v735 = vshrl.u32 %v734, 7
        %v736 = vsub.s32 %v733, %v735
        %v737 = vrot.slane %v723, %v736
        %v738 = vcombine.low %v730, %v737
        %v739 = vcombine.low %v543, %v550
        %v740 = vcombine.low %v557, %v558
        %v742 = vunpack.c.l.s4 1983009808
        %v743 = vunpack.c.0.s8 %v742
        %v744 = vlaneseq
        %v745 = vshrl.u32 %v744, 7
        %v746 = vsub.s32 %v743, %v745
        %v747 = vrot.slane %v739, %v746
        %v749 = vunpack.c.l.s4 1983009808
        %v750 = vunpack.c.0.s8 %v749
        %v751 = vlaneseq
        %v752 = vshrl.u32 %v751, 7
        %v753 = vsub.s32 %v750, %v752
        %v754 = vrot.slane %v740, %v753
        %v755 = vcombine.low %v747, %v754
        %v756 = vcombine.low %v565, %v566
        %v757 = vcombine.low %v573, %v580
        %v759 = vunpack.c.l.s4 1983009808
        %v760 = vunpack.c.0.s8 %v759
        %v761 = vlaneseq
        %v762 = vshrl.u32 %v761, 7
        %v763 = vsub.s32 %v760, %v762
        %v764 = vrot.slane %v756, %v763
        %v766 = vunpack.c.l.s4 1983009808
        %v767 = vunpack.c.0.s8 %v766
        %v768 = vlaneseq
        %v769 = vshrl.u32 %v768, 7
        %v770 = vsub.s32 %v767, %v769
        %v771 = vrot.slane %v757, %v770
        %v772 = vcombine.low %v764, %v771
        %v773 = vcombine.low %v581, %v588
        %v774 = vcombine.low %v589, %v596
        %v776 = vunpack.c.l.s4 1983009808
        %v777 = vunpack.c.0.s8 %v776
        %v778 = vlaneseq
        %v779 = vshrl.u32 %v778, 7
        %v780 = vsub.s32 %v777, %v779
        %v781 = vrot.slane %v773, %v780
        %v783 = vunpack.c.l.s4 1983009808
        %v784 = vunpack.c.0.s8 %v783
        %v785 = vlaneseq
        %v786 = vshrl.u32 %v785, 7
        %v787 = vsub.s32 %v784, %v786
        %v788 = vrot.slane %v774, %v787
        %v789 = vcombine.low %v781, %v788
        %v816 = vunpack.c.l.b16 %v597
        %v817 = vunpack.c.l.b16 %v598
        %v818 = vunpack.c.l.b16 %v599
        %v819 = vunpack.c.l.b16 %v600
        %v820 = vunpack.c.l.b16 %v601
        %v821 = vunpack.c.l.b16 %v602
        %v822 = vunpack.c.l.b16 %v603
        %v823 = vunpack.c.l.b16 %v604
        %v824 = vunpack.c.l.b16 %v605
        %v825 = vunpack.c.l.b16 %v606
        %v826 = vunpack.c.l.b16 %v607
        %v827 = vunpack.c.l.b16 %v608
        %v828 = vunpack.c.l.b16 %v609
        %v829 = vunpack.c.l.b16 %v610
        %v830 = vunpack.c.l.b16 %v611
        %v831 = vunpack.c.l.b16 %v612
        %v832 = vpack.c.b16 %v817, %v816
        %v833 = vpack.c.b16 %v819, %v818
        %v834 = vpack.c.b16 %v821, %v820
        %v835 = vpack.c.b16 %v823, %v822
        %v836 = vpack.c.b16 %v825, %v824
        %v837 = vpack.c.b16 %v827, %v826
        %v838 = vpack.c.b16 %v829, %v828
        %v839 = vpack.c.b16 %v831, %v830
        %848 = vmatprep.subr.bf16.mxu0 0
        %849 = vmatpush1.bf16.msra.mxu0 %v839
        %850 = vmatprep.subr.bf16.mxu0 0
        %851 = vmatpush1.bf16.msra.mxu0 %v838
        %852 = vmatprep.subr.bf16.mxu0 0
        %853 = vmatpush1.bf16.msra.mxu0 %v837
        %854 = vmatprep.subr.bf16.mxu0 0
        %855 = vmatpush1.bf16.msra.mxu0 %v836
        %856 = vmatprep.subr.bf16.mxu0 0
        %857 = vmatpush1.bf16.msra.mxu0 %v835
        %858 = vmatprep.subr.bf16.mxu0 0
        %859 = vmatpush1.bf16.msra.mxu0 %v834
        %860 = vmatprep.subr.bf16.mxu0 0
        %861 = vmatpush1.bf16.msra.mxu0 %v833
        %862 = vmatprep.subr.bf16.mxu0 0
        %863 = vmatpush1.bf16.msra.mxu0 %v832
        %864 = vmatprep.subr.bf16.mxu0 0
        %865 = vmatpush2.bf16.msra.mxu0 0
        %866 = vmatprep.subr.bf16.mxu0 0
        %867 = vmatpush2.bf16.msra.mxu0 0
        %868 = vmatprep.subr.bf16.mxu0 0
        %869 = vmatpush2.bf16.msra.mxu0 0
        %870 = vmatprep.subr.bf16.mxu0 0
        %871 = vmatpush2.bf16.msra.mxu0 0
        %872 = vmatprep.subr.bf16.mxu0 0
        %873 = vmatpush2.bf16.msra.mxu0 0
        %874 = vmatprep.subr.bf16.mxu0 0
        %875 = vmatpush2.bf16.msra.mxu0 0
        %876 = vmatprep.subr.bf16.mxu0 0
        %877 = vmatpush2.bf16.msra.mxu0 0
        %878 = vmatprep.subr.bf16.mxu0 0
        %879 = vmatpush2.bf16.msra.mxu0 0
        %880 = vmatprep.mubr.bf16.mxu0 0
        %881 = vmatmul.mubr.bf16.gmra.mxu0 %v636
        %v882 = vpop.f32.mrf.mxu0
        %v883 = vadd.f32 %v618, %v882
        %v884 = vpop.f32.mrf.mxu0
        %v885 = vpop.f32.mrf.mxu0
        %v886 = vadd.f32 %v618, %v885
        %v887 = vpop.f32.mrf.mxu0
        %888 = vmatprep.mubr.bf16.mxu0 0
        %889 = vmatmul.mubr.bf16.gmra.mxu0 %v653
        %v890 = vpop.f32.mrf.mxu0
        %v891 = vadd.f32 %v618, %v890
        %v892 = vpop.f32.mrf.mxu0
        %v893 = vpop.f32.mrf.mxu0
        %v894 = vadd.f32 %v618, %v893
        %v895 = vpop.f32.mrf.mxu0
        %896 = vmatprep.mubr.bf16.mxu0 0
        %897 = vmatmul.mubr.bf16.gmra.mxu0 %v670
        %v898 = vpop.f32.mrf.mxu0
        %v899 = vadd.f32 %v618, %v898
        %v900 = vpop.f32.mrf.mxu0
        %v901 = vpop.f32.mrf.mxu0
        %v902 = vadd.f32 %v618, %v901
        %v903 = vpop.f32.mrf.mxu0
        %904 = vmatprep.mubr.bf16.mxu0 0
        %905 = vmatmul.mubr.bf16.gmra.mxu0 %v687
        %v906 = vpop.f32.mrf.mxu0
        %v907 = vadd.f32 %v618, %v906
        %v908 = vpop.f32.mrf.mxu0
        %v909 = vpop.f32.mrf.mxu0
        %v910 = vadd.f32 %v618, %v909
        %v911 = vpop.f32.mrf.mxu0
        %912 = vmatprep.mubr.bf16.mxu0 0
        %913 = vmatmul.mubr.bf16.gmra.mxu0 %v704
        %v914 = vpop.f32.mrf.mxu0
        %v915 = vadd.f32 %v618, %v914
        %v916 = vpop.f32.mrf.mxu0
        %v917 = vpop.f32.mrf.mxu0
        %v918 = vadd.f32 %v618, %v917
        %v919 = vpop.f32.mrf.mxu0
        %920 = vmatprep.mubr.bf16.mxu0 0
        %921 = vmatmul.mubr.bf16.gmra.mxu0 %v721
        %v922 = vpop.f32.mrf.mxu0
        %v923 = vadd.f32 %v618, %v922
        %v924 = vpop.f32.mrf.mxu0
        %v925 = vpop.f32.mrf.mxu0
        %v926 = vadd.f32 %v618, %v925
        %v927 = vpop.f32.mrf.mxu0
        %928 = vmatprep.mubr.bf16.mxu0 0
        %929 = vmatmul.mubr.bf16.gmra.mxu0 %v738
        %v930 = vpop.f32.mrf.mxu0
        %v931 = vadd.f32 %v618, %v930
        %v932 = vpop.f32.mrf.mxu0
        %v933 = vpop.f32.mrf.mxu0
        %v934 = vadd.f32 %v618, %v933
        %v935 = vpop.f32.mrf.mxu0
        %936 = vmatprep.mubr.bf16.mxu0 0
        %937 = vmatmul.mubr.bf16.gmra.mxu0 %v755
        %v938 = vpop.f32.mrf.mxu0
        %v939 = vadd.f32 %v618, %v938
        %v940 = vpop.f32.mrf.mxu0
        %v941 = vpop.f32.mrf.mxu0
        %v942 = vadd.f32 %v618, %v941
        %v943 = vpop.f32.mrf.mxu0
        %944 = vmatprep.mubr.bf16.mxu0 0
        %945 = vmatmul.mubr.bf16.gmra.mxu0 %v772
        %v946 = vpop.f32.mrf.mxu0
        %v947 = vadd.f32 %v618, %v946
        %v948 = vpop.f32.mrf.mxu0
        %v949 = vpop.f32.mrf.mxu0
        %v950 = vadd.f32 %v618, %v949
        %v951 = vpop.f32.mrf.mxu0
        %952 = vmatprep.mubr.bf16.mxu0 0
        %953 = vmatmul.mubr.bf16.gmra.mxu0 %v789
        %v954 = vpop.f32.mrf.mxu0
        %v955 = vadd.f32 %v618, %v954
        %v956 = vpop.f32.mrf.mxu0
        %v957 = vpop.f32.mrf.mxu0
        %v958 = vadd.f32 %v618, %v957
        %v959 = vpop.f32.mrf.mxu0
        %960 = vdwg.mxu0
        %v961 = vsub.f32 0.0, %v883
        %v962 = vsub.f32 0.0, %v886
        %v963 = vsub.f32 0.0, %v891
        %v964 = vsub.f32 0.0, %v894
        %v965 = vsub.f32 0.0, %v899
        %v966 = vsub.f32 0.0, %v902
        %v967 = vsub.f32 0.0, %v907
        %v968 = vsub.f32 0.0, %v910
        %v969 = vsub.f32 0.0, %v915
        %v970 = vsub.f32 0.0, %v918
        %v971 = vsub.f32 0.0, %v923
        %v972 = vsub.f32 0.0, %v926
        %v973 = vsub.f32 0.0, %v931
        %v974 = vsub.f32 0.0, %v934
        %v975 = vsub.f32 0.0, %v939
        %v976 = vsub.f32 0.0, %v942
        %v977 = vsub.f32 0.0, %v947
        %v978 = vsub.f32 0.0, %v950
        %v979 = vsub.f32 0.0, %v955
        %v980 = vsub.f32 0.0, %v958
        %v981 = vmul.f32 %v961, 1.442695
        %v982 = vpow.pop %v981
        %v983 = vmul.f32 %v962, 1.442695
        %v984 = vpow.pop %v983
        %v985 = vmul.f32 %v963, 1.442695
        %v986 = vpow.pop %v985
        %v987 = vmul.f32 %v964, 1.442695
        %v988 = vpow.pop %v987
        %v989 = vmul.f32 %v965, 1.442695
        %v990 = vpow.pop %v989
        %v991 = vmul.f32 %v966, 1.442695
        %v992 = vpow.pop %v991
        %v993 = vmul.f32 %v967, 1.442695
        %v994 = vpow.pop %v993
        %v995 = vmul.f32 %v968, 1.442695
        %v996 = vpow.pop %v995
        %v997 = vmul.f32 %v969, 1.442695
        %v998 = vpow.pop %v997
        %v999 = vmul.f32 %v970, 1.442695
        %v1000 = vpow.pop %v999
        %v1001 = vmul.f32 %v971, 1.442695
        %v1002 = vpow.pop %v1001
        %v1003 = vmul.f32 %v972, 1.442695
        %v1004 = vpow.pop %v1003
        %v1005 = vmul.f32 %v973, 1.442695
        %v1006 = vpow.pop %v1005
        %v1007 = vmul.f32 %v974, 1.442695
        %v1008 = vpow.pop %v1007
        %v1009 = vmul.f32 %v975, 1.442695
        %v1010 = vpow.pop %v1009
        %v1011 = vmul.f32 %v976, 1.442695
        %v1012 = vpow.pop %v1011
        %v1013 = vmul.f32 %v977, 1.442695
        %v1014 = vpow.pop %v1013
        %v1015 = vmul.f32 %v978, 1.442695
        %v1016 = vpow.pop %v1015
        %v1017 = vmul.f32 %v979, 1.442695
        %v1018 = vpow.pop %v1017
        %v1019 = vmul.f32 %v980, 1.442695
        %v1020 = vpow.pop %v1019
        %v1021 = vadd.f32 %v982, 1.0
        %v1022 = vadd.f32 %v984, 1.0
        %v1023 = vadd.f32 %v986, 1.0
        %v1024 = vadd.f32 %v988, 1.0
        %v1025 = vadd.f32 %v990, 1.0
        %v1026 = vadd.f32 %v992, 1.0
        %v1027 = vadd.f32 %v994, 1.0
        %v1028 = vadd.f32 %v996, 1.0
        %v1029 = vadd.f32 %v998, 1.0
        %v1030 = vadd.f32 %v1000, 1.0
        %v1031 = vadd.f32 %v1002, 1.0
        %v1032 = vadd.f32 %v1004, 1.0
        %v1033 = vadd.f32 %v1006, 1.0
        %v1034 = vadd.f32 %v1008, 1.0
        %v1035 = vadd.f32 %v1010, 1.0
        %v1036 = vadd.f32 %v1012, 1.0
        %v1037 = vadd.f32 %v1014, 1.0
        %v1038 = vadd.f32 %v1016, 1.0
        %v1039 = vadd.f32 %v1018, 1.0
        %v1040 = vadd.f32 %v1020, 1.0
        %v1041 = vrcp.pop %v1021
        %v1042 = vrcp.pop %v1022
        %v1043 = vrcp.pop %v1023
        %v1044 = vrcp.pop %v1024
        %v1045 = vrcp.pop %v1025
        %v1046 = vrcp.pop %v1026
        %v1047 = vrcp.pop %v1027
        %v1048 = vrcp.pop %v1028
        %v1049 = vrcp.pop %v1029
        %v1050 = vrcp.pop %v1030
        %v1051 = vrcp.pop %v1031
        %v1052 = vrcp.pop %v1032
        %v1053 = vrcp.pop %v1033
        %v1054 = vrcp.pop %v1034
        %v1055 = vrcp.pop %v1035
        %v1056 = vrcp.pop %v1036
        %v1057 = vrcp.pop %v1037
        %v1058 = vrcp.pop %v1038
        %v1059 = vrcp.pop %v1039
        %v1060 = vrcp.pop %v1040
        %v1061 = vmul.f32 %v883, %v1041
        %v1062 = vmul.f32 %v886, %v1042
        %v1063 = vmul.f32 %v891, %v1043
        %v1064 = vmul.f32 %v894, %v1044
        %v1065 = vmul.f32 %v899, %v1045
        %v1066 = vmul.f32 %v902, %v1046
        %v1067 = vmul.f32 %v907, %v1047
        %v1068 = vmul.f32 %v910, %v1048
        %v1069 = vmul.f32 %v915, %v1049
        %v1070 = vmul.f32 %v918, %v1050
        %v1071 = vmul.f32 %v923, %v1051
        %v1072 = vmul.f32 %v926, %v1052
        %v1073 = vmul.f32 %v931, %v1053
        %v1074 = vmul.f32 %v934, %v1054
        %v1075 = vmul.f32 %v939, %v1055
        %v1076 = vmul.f32 %v942, %v1056
        %v1077 = vmul.f32 %v947, %v1057
        %v1078 = vmul.f32 %v950, %v1058
        %v1079 = vmul.f32 %v955, %v1059
        %v1080 = vmul.f32 %v958, %v1060
        %v1101 = vcombine.high %v1061, %v1061
        %v1102 = vcombine.high %v1062, %v1062
        %v1103 = vcombine.high %v1063, %v1063
        %v1104 = vcombine.high %v1064, %v1064
        %v1105 = vcombine.high %v1065, %v1065
        %v1106 = vcombine.high %v1066, %v1066
        %v1107 = vcombine.high %v1067, %v1067
        %v1108 = vcombine.high %v1068, %v1068
        %v1109 = vcombine.high %v1069, %v1069
        %v1110 = vcombine.high %v1070, %v1070
        %v1111 = vcombine.high %v1071, %v1071
        %v1112 = vcombine.high %v1072, %v1072
        %v1113 = vcombine.high %v1073, %v1073
        %v1114 = vcombine.high %v1074, %v1074
        %v1115 = vcombine.high %v1075, %v1075
        %v1116 = vcombine.high %v1076, %v1076
        %v1117 = vcombine.high %v1077, %v1077
        %v1118 = vcombine.high %v1078, %v1078
        %v1119 = vcombine.high %v1079, %v1079
        %v1120 = vcombine.high %v1080, %v1080
        %v1141 = vstv %s364
        %v1142 = vadd.s32 %v1141, 1
        %v1143 = vadd.s32 %v1141, 2
        %v1144 = vadd.s32 %v1141, 3
        %v1145 = vadd.s32 %v1141, 4
        %v1146 = vadd.s32 %v1141, 5
        %v1147 = vadd.s32 %v1141, 6
        %v1148 = vadd.s32 %v1141, 7
        %vm1149 = vcmp.ge.s32.totalorder %v1141, 0
        %vm1150 = vcmp.ge.s32.totalorder %v1142, 0
        %vm1151 = vcmp.ge.s32.totalorder %v1143, 0
        %vm1152 = vcmp.ge.s32.totalorder %v1144, 0
        %vm1153 = vcmp.ge.s32.totalorder %v1145, 0
        %vm1154 = vcmp.ge.s32.totalorder %v1146, 0
        %vm1155 = vcmp.ge.s32.totalorder %v1147, 0
        %vm1156 = vcmp.ge.s32.totalorder %v1148, 0
        %vm1157 = vcmp.lt.s32.totalorder %v1141, 16
        %vm1158 = vcmp.lt.s32.totalorder %v1142, 16
        %vm1159 = vcmp.lt.s32.totalorder %v1143, 16
        %vm1160 = vcmp.lt.s32.totalorder %v1144, 16
        %vm1161 = vcmp.lt.s32.totalorder %v1145, 16
        %vm1162 = vcmp.lt.s32.totalorder %v1146, 16
        %vm1163 = vcmp.lt.s32.totalorder %v1147, 16
        %vm1164 = vcmp.lt.s32.totalorder %v1148, 16
        %vm1165 = vmand %vm1149, %vm1157
        %vm1166 = vmand %vm1150, %vm1158
        %vm1167 = vmand %vm1151, %vm1159
        %vm1168 = vmand %vm1152, %vm1160
        %vm1169 = vmand %vm1153, %vm1161
        %vm1170 = vmand %vm1154, %vm1162
        %vm1171 = vmand %vm1155, %vm1163
        %vm1172 = vmand %vm1156, %vm1164
        %v1173 = vsel %vm1165, 1, 0
        %v1174 = vsel %vm1166, 1, 0
        %v1175 = vsel %vm1167, 1, 0
        %v1176 = vsel %vm1168, 1, 0
        %v1177 = vsel %vm1169, 1, 0
        %v1178 = vsel %vm1170, 1, 0
        %v1179 = vsel %vm1171, 1, 0
        %v1180 = vsel %vm1172, 1, 0
        %vm1181 = vcmp.eq.s32.totalorder %v1173, 1
        %vm1182 = vcmp.eq.s32.totalorder %v1174, 1
        %vm1183 = vcmp.eq.s32.totalorder %v1175, 1
        %vm1184 = vcmp.eq.s32.totalorder %v1176, 1
        %vm1185 = vcmp.eq.s32.totalorder %v1177, 1
        %vm1186 = vcmp.eq.s32.totalorder %v1178, 1
        %vm1187 = vcmp.eq.s32.totalorder %v1179, 1
        %vm1188 = vcmp.eq.s32.totalorder %v1180, 1
        %v1189 = vsel %vm1181, %v1061, 0.0
        %v1190 = vsel %vm1181, %v1101, 0.0
        %v1191 = vsel %vm1181, %v1062, 0.0
        %v1192 = vsel %vm1181, %v1102, 0.0
        %v1193 = vsel %vm1181, %v1063, 0.0
        %v1194 = vsel %vm1182, %v1103, 0.0
        %v1195 = vsel %vm1182, %v1064, 0.0
        %v1196 = vsel %vm1182, %v1104, 0.0
        %v1197 = vsel %vm1182, %v1065, 0.0
        %v1198 = vsel %vm1182, %v1105, 0.0
        %v1199 = vsel %vm1183, %v1066, 0.0
        %v1200 = vsel %vm1183, %v1106, 0.0
        %v1201 = vsel %vm1183, %v1067, 0.0
        %v1202 = vsel %vm1183, %v1107, 0.0
        %v1203 = vsel %vm1183, %v1068, 0.0
        %v1204 = vsel %vm1184, %v1108, 0.0
        %v1205 = vsel %vm1184, %v1069, 0.0
        %v1206 = vsel %vm1184, %v1109, 0.0
        %v1207 = vsel %vm1184, %v1070, 0.0
        %v1208 = vsel %vm1184, %v1110, 0.0
        %v1209 = vsel %vm1185, %v1071, 0.0
        %v1210 = vsel %vm1185, %v1111, 0.0
        %v1211 = vsel %vm1185, %v1072, 0.0
        %v1212 = vsel %vm1185, %v1112, 0.0
        %v1213 = vsel %vm1185, %v1073, 0.0
        %v1214 = vsel %vm1186, %v1113, 0.0
        %v1215 = vsel %vm1186, %v1074, 0.0
        %v1216 = vsel %vm1186, %v1114, 0.0
        %v1217 = vsel %vm1186, %v1075, 0.0
        %v1218 = vsel %vm1186, %v1115, 0.0
        %v1219 = vsel %vm1187, %v1076, 0.0
        %v1220 = vsel %vm1187, %v1116, 0.0
        %v1221 = vsel %vm1187, %v1077, 0.0
        %v1222 = vsel %vm1187, %v1117, 0.0
        %v1223 = vsel %vm1187, %v1078, 0.0
        %v1224 = vsel %vm1188, %v1118, 0.0
        %v1225 = vsel %vm1188, %v1079, 0.0
        %v1226 = vsel %vm1188, %v1119, 0.0
        %v1227 = vsel %vm1188, %v1080, 0.0
        %v1228 = vsel %vm1188, %v1120, 0.0
        %v1261 = vcombine.low %v1189, %v1190
        %v1262 = vcombine.low %v1191, %v1192
        %v1263 = vcombine.low %v1194, %v1195
        %v1264 = vcombine.low %v1196, %v1197
        %v1265 = vcombine.low %v1199, %v1200
        %v1266 = vcombine.low %v1201, %v1202
        %v1267 = vcombine.low %v1204, %v1205
        %v1268 = vcombine.low %v1206, %v1207
        %v1269 = vcombine.low %v1209, %v1210
        %v1270 = vcombine.low %v1211, %v1212
        %v1271 = vcombine.low %v1214, %v1215
        %v1272 = vcombine.low %v1216, %v1217
        %v1273 = vcombine.low %v1219, %v1220
        %v1274 = vcombine.low %v1221, %v1222
        %v1275 = vcombine.low %v1224, %v1225
        %v1276 = vcombine.low %v1226, %v1227
        %v1293 = vpack.c.bf16 %v1262, %v1261
        %v1294 = vpack.c.bf16 %v1193, %v1193
        %v1295 = vpack.c.bf16 %v1264, %v1263
        %v1296 = vpack.c.bf16 %v1198, %v1198
        %v1297 = vpack.c.bf16 %v1266, %v1265
        %v1298 = vpack.c.bf16 %v1203, %v1203
        %v1299 = vpack.c.bf16 %v1268, %v1267
        %v1300 = vpack.c.bf16 %v1208, %v1208
        %v1301 = vpack.c.bf16 %v1270, %v1269
        %v1302 = vpack.c.bf16 %v1213, %v1213
        %v1303 = vpack.c.bf16 %v1272, %v1271
        %v1304 = vpack.c.bf16 %v1218, %v1218
        %v1305 = vpack.c.bf16 %v1274, %v1273
        %v1306 = vpack.c.bf16 %v1223, %v1223
        %v1307 = vpack.c.bf16 %v1276, %v1275
        %v1308 = vpack.c.bf16 %v1228, %v1228
        %v1325 = vunpack.c.l.b16 %v1293
        %v1326 = vunpack.c.h.b16 %v1293
        %v1327 = vunpack.c.l.b16 %v1294
        %v1328 = vunpack.c.l.b16 %v1295
        %v1329 = vunpack.c.h.b16 %v1295
        %v1330 = vunpack.c.l.b16 %v1296
        %v1331 = vunpack.c.l.b16 %v1297
        %v1332 = vunpack.c.h.b16 %v1297
        %v1333 = vunpack.c.l.b16 %v1298
        %v1334 = vunpack.c.l.b16 %v1299
        %v1335 = vunpack.c.h.b16 %v1299
        %v1336 = vunpack.c.l.b16 %v1300
        %v1337 = vunpack.c.l.b16 %v1301
        %v1338 = vunpack.c.h.b16 %v1301
        %v1339 = vunpack.c.l.b16 %v1302
        %v1340 = vunpack.c.l.b16 %v1303
        %v1341 = vunpack.c.h.b16 %v1303
        %v1342 = vunpack.c.l.b16 %v1304
        %v1343 = vunpack.c.l.b16 %v1305
        %v1344 = vunpack.c.h.b16 %v1305
        %v1345 = vunpack.c.l.b16 %v1306
        %v1346 = vunpack.c.l.b16 %v1307
        %v1347 = vunpack.c.h.b16 %v1307
        %v1348 = vunpack.c.l.b16 %v1308
        %v1349 = vpack.c.b16 %v1325, %v1325
        %v1350 = vpack.c.b16 %v1326, %v1326
        %v1351 = vpack.c.b16 %v1327, %v1327
        %v1352 = vpack.c.b16 %v1328, %v1328
        %v1353 = vpack.c.b16 %v1329, %v1329
        %v1354 = vpack.c.b16 %v1330, %v1330
        %v1355 = vpack.c.b16 %v1331, %v1331
        %v1356 = vpack.c.b16 %v1332, %v1332
        %v1357 = vpack.c.b16 %v1333, %v1333
        %v1358 = vpack.c.b16 %v1334, %v1334
        %v1359 = vpack.c.b16 %v1335, %v1335
        %v1360 = vpack.c.b16 %v1336, %v1336
        %v1361 = vpack.c.b16 %v1337, %v1337
        %v1362 = vpack.c.b16 %v1338, %v1338
        %v1363 = vpack.c.b16 %v1339, %v1339
        %v1364 = vpack.c.b16 %v1340, %v1340
        %v1365 = vpack.c.b16 %v1341, %v1341
        %v1366 = vpack.c.b16 %v1342, %v1342
        %v1367 = vpack.c.b16 %v1343, %v1343
        %v1368 = vpack.c.b16 %v1344, %v1344
        %v1369 = vpack.c.b16 %v1345, %v1345
        %v1370 = vpack.c.b16 %v1346, %v1346
        %v1371 = vpack.c.b16 %v1347, %v1347
        %v1372 = vpack.c.b16 %v1348, %v1348
        %1397 = vst [vmem:[#allocation2] sm:$0xf] %v1349
        %1398 = vst [vmem:[#allocation2 + $0x4] sm:$0xf] %v1350
        %1399 = vst [vmem:[#allocation2 + $0x8] sm:$0x3] %v1351
        %1400 = vst [vmem:[#allocation2 + $0xc] sm:$0xf] %v1352
        %1401 = vst [vmem:[#allocation2 + $0x10] sm:$0xf] %v1353
        %1402 = vst [vmem:[#allocation2 + $0x14] sm:$0x3] %v1354
        %1403 = vst [vmem:[#allocation2 + $0x18] sm:$0xf] %v1355
        %1404 = vst [vmem:[#allocation2 + $0x1c] sm:$0xf] %v1356
        %1405 = vst [vmem:[#allocation2 + $0x20] sm:$0x3] %v1357
        %1406 = vst [vmem:[#allocation2 + $0x24] sm:$0xf] %v1358
        %1407 = vst [vmem:[#allocation2 + $0x28] sm:$0xf] %v1359
        %1408 = vst [vmem:[#allocation2 + $0x2c] sm:$0x3] %v1360
        %1409 = vst [vmem:[#allocation2 + $0x30] sm:$0xf] %v1361
        %1410 = vst [vmem:[#allocation2 + $0x34] sm:$0xf] %v1362
        %1411 = vst [vmem:[#allocation2 + $0x38] sm:$0x3] %v1363
        %1412 = vst [vmem:[#allocation2 + $0x3c] sm:$0xf] %v1364
        %1413 = vst [vmem:[#allocation2 + $0x40] sm:$0xf] %v1365
        %1414 = vst [vmem:[#allocation2 + $0x44] sm:$0x3] %v1366
        %1415 = vst [vmem:[#allocation2 + $0x48] sm:$0xf] %v1367
        %1416 = vst [vmem:[#allocation2 + $0x4c] sm:$0xf] %v1368
        %1417 = vst [vmem:[#allocation2 + $0x50] sm:$0x3] %v1369
        %1418 = vst [vmem:[#allocation2 + $0x54] sm:$0xf] %v1370
        %1419 = vst [vmem:[#allocation2 + $0x58] sm:$0xf] %v1371
        %1420 = vst [vmem:[#allocation2 + $0x5c] sm:$0x3] %v1372
        %v1421 = vld [vmem:[%s357] sm:$0xf]
        %v1422 = vld [vmem:[%s357 + $0x4] sm:$0xf]
        %v1423 = vld [vmem:[%s357 + $0x8] sm:$0x3]
        %v1424 = vld [vmem:[%s357 + $0xc] sm:$0xf]
        %v1425 = vld [vmem:[%s357 + $0x10] sm:$0xf]
        %v1426 = vld [vmem:[%s357 + $0x14] sm:$0x3]
        %v1427 = vld [vmem:[%s357 + $0x18] sm:$0xf]
        %v1428 = vld [vmem:[%s357 + $0x1c] sm:$0xf]
        %v1429 = vld [vmem:[%s357 + $0x20] sm:$0x3]
        %v1430 = vld [vmem:[%s357 + $0x24] sm:$0xf]
        %v1431 = vld [vmem:[%s357 + $0x28] sm:$0xf]
        %v1432 = vld [vmem:[%s357 + $0x2c] sm:$0x3]
        %v1446 = vunpack.c.l.s4 1983009808
        %v1447 = vunpack.c.0.s8 %v1446
        %v1448 = vlaneseq
        %v1449 = vshrl.u32 %v1448, 7
        %v1450 = vsub.s32 %v1447, %v1449
        %v1451 = vrot.slane %v1421, %v1450
        %v1452 = vcombine.high %v1451, %v1451
        %v1454 = vunpack.c.l.s4 1983009808
        %v1455 = vunpack.c.0.s8 %v1454
        %v1456 = vlaneseq
        %v1457 = vshrl.u32 %v1456, 7
        %v1458 = vsub.s32 %v1455, %v1457
        %v1459 = vrot.slane %v1422, %v1458
        %v1460 = vcombine.high %v1459, %v1459
        %v1462 = vunpack.c.l.s4 1983009808
        %v1463 = vunpack.c.0.s8 %v1462
        %v1464 = vlaneseq
        %v1465 = vshrl.u32 %v1464, 7
        %v1466 = vsub.s32 %v1463, %v1465
        %v1467 = vrot.slane %v1423, %v1466
        %v1469 = vunpack.c.l.s4 1983009808
        %v1470 = vunpack.c.0.s8 %v1469
        %v1471 = vlaneseq
        %v1472 = vshrl.u32 %v1471, 7
        %v1473 = vsub.s32 %v1470, %v1472
        %v1474 = vrot.slane %v1424, %v1473
        %v1475 = vcombine.high %v1474, %v1474
        %v1477 = vunpack.c.l.s4 1983009808
        %v1478 = vunpack.c.0.s8 %v1477
        %v1479 = vlaneseq
        %v1480 = vshrl.u32 %v1479, 7
        %v1481 = vsub.s32 %v1478, %v1480
        %v1482 = vrot.slane %v1425, %v1481
        %v1483 = vcombine.high %v1482, %v1482
        %v1485 = vunpack.c.l.s4 1983009808
        %v1486 = vunpack.c.0.s8 %v1485
        %v1487 = vlaneseq
        %v1488 = vshrl.u32 %v1487, 7
        %v1489 = vsub.s32 %v1486, %v1488
        %v1490 = vrot.slane %v1426, %v1489
        %v1492 = vunpack.c.l.s4 1983009808
        %v1493 = vunpack.c.0.s8 %v1492
        %v1494 = vlaneseq
        %v1495 = vshrl.u32 %v1494, 7
        %v1496 = vsub.s32 %v1493, %v1495
        %v1497 = vrot.slane %v1427, %v1496
        %v1498 = vcombine.high %v1497, %v1497
        %v1500 = vunpack.c.l.s4 1983009808
        %v1501 = vunpack.c.0.s8 %v1500
        %v1502 = vlaneseq
        %v1503 = vshrl.u32 %v1502, 7
        %v1504 = vsub.s32 %v1501, %v1503
        %v1505 = vrot.slane %v1428, %v1504
        %v1506 = vcombine.high %v1505, %v1505
        %v1508 = vunpack.c.l.s4 1983009808
        %v1509 = vunpack.c.0.s8 %v1508
        %v1510 = vlaneseq
        %v1511 = vshrl.u32 %v1510, 7
        %v1512 = vsub.s32 %v1509, %v1511
        %v1513 = vrot.slane %v1429, %v1512
        %v1515 = vunpack.c.l.s4 1983009808
        %v1516 = vunpack.c.0.s8 %v1515
        %v1517 = vlaneseq
        %v1518 = vshrl.u32 %v1517, 7
        %v1519 = vsub.s32 %v1516, %v1518
        %v1520 = vrot.slane %v1430, %v1519
        %v1521 = vcombine.high %v1520, %v1520
        %v1523 = vunpack.c.l.s4 1983009808
        %v1524 = vunpack.c.0.s8 %v1523
        %v1525 = vlaneseq
        %v1526 = vshrl.u32 %v1525, 7
        %v1527 = vsub.s32 %v1524, %v1526
        %v1528 = vrot.slane %v1431, %v1527
        %v1529 = vcombine.high %v1528, %v1528
        %v1531 = vunpack.c.l.s4 1983009808
        %v1532 = vunpack.c.0.s8 %v1531
        %v1533 = vlaneseq
        %v1534 = vshrl.u32 %v1533, 7
        %v1535 = vsub.s32 %v1532, %v1534
        %v1536 = vrot.slane %v1432, %v1535
        %v1537 = vld [vmem:[%s2] sm:$0xf]
        %v1538 = vld [vmem:[%s2 + $0x4] sm:$0xf]
        %v1539 = vld [vmem:[%s2 + $0x8] sm:$0xf]
        %v1540 = vld [vmem:[%s2 + $0xc] sm:$0xf]
        %v1541 = vld [vmem:[%s2 + $0x10] sm:$0xf]
        %v1542 = vld [vmem:[%s2 + $0x14] sm:$0xf]
        %v1543 = vld [vmem:[%s2 + $0x18] sm:$0xf]
        %v1544 = vld [vmem:[%s2 + $0x1c] sm:$0xf]
        %v1545 = vld [vmem:[%s2 + $0x20] sm:$0xf]
        %v1546 = vld [vmem:[%s2 + $0x24] sm:$0xf]
        %v1547 = vld [vmem:[%s2 + $0x28] sm:$0xf]
        %v1548 = vld [vmem:[%s2 + $0x2c] sm:$0xf]
        %v1549 = vld [vmem:[%s2 + $0x30] sm:$0xf]
        %v1550 = vld [vmem:[%s2 + $0x34] sm:$0xf]
        %v1551 = vld [vmem:[%s2 + $0x38] sm:$0xf]
        %v1552 = vld [vmem:[%s2 + $0x3c] sm:$0xf]
        %v1553 = vld [vmem:[%s3] sm:$0x1]
        %v1555 = vlaneseq
        %v1556 = vshrl.u32 %v1555, 7
        %v1557 = vsub.s32 0, %v1556
        %v1558 = vrot.slane %v1553, %v1557
        %v1560 = vcombine.low %v1451, %v1452
        %v1561 = vcombine.low %v1459, %v1460
        %v1563 = vunpack.c.l.s4 1983009808
        %v1564 = vunpack.c.0.s8 %v1563
        %v1565 = vlaneseq
        %v1566 = vshrl.u32 %v1565, 7
        %v1567 = vsub.s32 %v1564, %v1566
        %v1568 = vrot.slane %v1560, %v1567
        %v1570 = vunpack.c.l.s4 1983009808
        %v1571 = vunpack.c.0.s8 %v1570
        %v1572 = vlaneseq
        %v1573 = vshrl.u32 %v1572, 7
        %v1574 = vsub.s32 %v1571, %v1573
        %v1575 = vrot.slane %v1561, %v1574
        %v1576 = vcombine.low %v1568, %v1575
        %v1577 = vcombine.low %v1467, %v1474
        %v1578 = vcombine.low %v1475, %v1482
        %v1580 = vunpack.c.l.s4 1983009808
        %v1581 = vunpack.c.0.s8 %v1580
        %v1582 = vlaneseq
        %v1583 = vshrl.u32 %v1582, 7
        %v1584 = vsub.s32 %v1581, %v1583
        %v1585 = vrot.slane %v1577, %v1584
        %v1587 = vunpack.c.l.s4 1983009808
        %v1588 = vunpack.c.0.s8 %v1587
        %v1589 = vlaneseq
        %v1590 = vshrl.u32 %v1589, 7
        %v1591 = vsub.s32 %v1588, %v1590
        %v1592 = vrot.slane %v1578, %v1591
        %v1593 = vcombine.low %v1585, %v1592
        %v1594 = vcombine.low %v1483, %v1490
        %v1595 = vcombine.low %v1497, %v1498
        %v1597 = vunpack.c.l.s4 1983009808
        %v1598 = vunpack.c.0.s8 %v1597
        %v1599 = vlaneseq
        %v1600 = vshrl.u32 %v1599, 7
        %v1601 = vsub.s32 %v1598, %v1600
        %v1602 = vrot.slane %v1594, %v1601
        %v1604 = vunpack.c.l.s4 1983009808
        %v1605 = vunpack.c.0.s8 %v1604
        %v1606 = vlaneseq
        %v1607 = vshrl.u32 %v1606, 7
        %v1608 = vsub.s32 %v1605, %v1607
        %v1609 = vrot.slane %v1595, %v1608
        %v1610 = vcombine.low %v1602, %v1609
        %v1611 = vcombine.low %v1505, %v1506
        %v1612 = vcombine.low %v1513, %v1520
        %v1614 = vunpack.c.l.s4 1983009808
        %v1615 = vunpack.c.0.s8 %v1614
        %v1616 = vlaneseq
        %v1617 = vshrl.u32 %v1616, 7
        %v1618 = vsub.s32 %v1615, %v1617
        %v1619 = vrot.slane %v1611, %v1618
        %v1621 = vunpack.c.l.s4 1983009808
        %v1622 = vunpack.c.0.s8 %v1621
        %v1623 = vlaneseq
        %v1624 = vshrl.u32 %v1623, 7
        %v1625 = vsub.s32 %v1622, %v1624
        %v1626 = vrot.slane %v1612, %v1625
        %v1627 = vcombine.low %v1619, %v1626
        %v1628 = vcombine.low %v1521, %v1528
        %v1629 = vcombine.low %v1529, %v1536
        %v1631 = vunpack.c.l.s4 1983009808
        %v1632 = vunpack.c.0.s8 %v1631
        %v1633 = vlaneseq
        %v1634 = vshrl.u32 %v1633, 7
        %v1635 = vsub.s32 %v1632, %v1634
        %v1636 = vrot.slane %v1628, %v1635
        %v1638 = vunpack.c.l.s4 1983009808
        %v1639 = vunpack.c.0.s8 %v1638
        %v1640 = vlaneseq
        %v1641 = vshrl.u32 %v1640, 7
        %v1642 = vsub.s32 %v1639, %v1641
        %v1643 = vrot.slane %v1629, %v1642
        %v1644 = vcombine.low %v1636, %v1643
        %v1666 = vunpack.c.l.b16 %v1537
        %v1667 = vunpack.c.l.b16 %v1538
        %v1668 = vunpack.c.l.b16 %v1539
        %v1669 = vunpack.c.l.b16 %v1540
        %v1670 = vunpack.c.l.b16 %v1541
        %v1671 = vunpack.c.l.b16 %v1542
        %v1672 = vunpack.c.l.b16 %v1543
        %v1673 = vunpack.c.l.b16 %v1544
        %v1674 = vunpack.c.l.b16 %v1545
        %v1675 = vunpack.c.l.b16 %v1546
        %v1676 = vunpack.c.l.b16 %v1547
        %v1677 = vunpack.c.l.b16 %v1548
        %v1678 = vunpack.c.l.b16 %v1549
        %v1679 = vunpack.c.l.b16 %v1550
        %v1680 = vunpack.c.l.b16 %v1551
        %v1681 = vunpack.c.l.b16 %v1552
        %v1682 = vpack.c.b16 %v1667, %v1666
        %v1683 = vpack.c.b16 %v1669, %v1668
        %v1684 = vpack.c.b16 %v1671, %v1670
        %v1685 = vpack.c.b16 %v1673, %v1672
        %v1686 = vpack.c.b16 %v1675, %v1674
        %v1687 = vpack.c.b16 %v1677, %v1676
        %v1688 = vpack.c.b16 %v1679, %v1678
        %v1689 = vpack.c.b16 %v1681, %v1680
        %1698 = vmatprep.subr.bf16.mxu0 0
        %1699 = vmatpush1.bf16.msra.mxu0 %v1689
        %1700 = vmatprep.subr.bf16.mxu0 0
        %1701 = vmatpush1.bf16.msra.mxu0 %v1688
        %1702 = vmatprep.subr.bf16.mxu0 0
        %1703 = vmatpush1.bf16.msra.mxu0 %v1687
        %1704 = vmatprep.subr.bf16.mxu0 0
        %1705 = vmatpush1.bf16.msra.mxu0 %v1686
        %1706 = vmatprep.subr.bf16.mxu0 0
        %1707 = vmatpush1.bf16.msra.mxu0 %v1685
        %1708 = vmatprep.subr.bf16.mxu0 0
        %1709 = vmatpush1.bf16.msra.mxu0 %v1684
        %1710 = vmatprep.subr.bf16.mxu0 0
        %1711 = vmatpush1.bf16.msra.mxu0 %v1683
        %1712 = vmatprep.subr.bf16.mxu0 0
        %1713 = vmatpush1.bf16.msra.mxu0 %v1682
        %1714 = vmatprep.subr.bf16.mxu0 0
        %1715 = vmatpush2.bf16.msra.mxu0 0
        %1716 = vmatprep.subr.bf16.mxu0 0
        %1717 = vmatpush2.bf16.msra.mxu0 0
        %1718 = vmatprep.subr.bf16.mxu0 0
        %1719 = vmatpush2.bf16.msra.mxu0 0
        %1720 = vmatprep.subr.bf16.mxu0 0
        %1721 = vmatpush2.bf16.msra.mxu0 0
        %1722 = vmatprep.subr.bf16.mxu0 0
        %1723 = vmatpush2.bf16.msra.mxu0 0
        %1724 = vmatprep.subr.bf16.mxu0 0
        %1725 = vmatpush2.bf16.msra.mxu0 0
        %1726 = vmatprep.subr.bf16.mxu0 0
        %1727 = vmatpush2.bf16.msra.mxu0 0
        %1728 = vmatprep.subr.bf16.mxu0 0
        %1729 = vmatpush2.bf16.msra.mxu0 0
        %1730 = vmatprep.mubr.bf16.mxu0 0
        %1731 = vmatmul.mubr.bf16.gmra.mxu0 %v1576
        %v1732 = vpop.f32.mrf.mxu0
        %v1733 = vadd.f32 %v1558, %v1732
        %v1734 = vpop.f32.mrf.mxu0
        %v1735 = vpop.f32.mrf.mxu0
        %v1736 = vadd.f32 %v1558, %v1735
        %v1737 = vpop.f32.mrf.mxu0
        %1738 = vmatprep.mubr.bf16.mxu0 0
        %1739 = vmatmul.mubr.bf16.gmra.mxu0 %v1593
        %v1740 = vpop.f32.mrf.mxu0
        %v1741 = vadd.f32 %v1558, %v1740
        %v1742 = vpop.f32.mrf.mxu0
        %v1743 = vpop.f32.mrf.mxu0
        %v1744 = vadd.f32 %v1558, %v1743
        %v1745 = vpop.f32.mrf.mxu0
        %1746 = vmatprep.mubr.bf16.mxu0 0
        %1747 = vmatmul.mubr.bf16.gmra.mxu0 %v1610
        %v1748 = vpop.f32.mrf.mxu0
        %v1749 = vadd.f32 %v1558, %v1748
        %v1750 = vpop.f32.mrf.mxu0
        %v1751 = vpop.f32.mrf.mxu0
        %v1752 = vadd.f32 %v1558, %v1751
        %v1753 = vpop.f32.mrf.mxu0
        %1754 = vmatprep.mubr.bf16.mxu0 0
        %1755 = vmatmul.mubr.bf16.gmra.mxu0 %v1627
        %v1756 = vpop.f32.mrf.mxu0
        %v1757 = vadd.f32 %v1558, %v1756
        %v1758 = vpop.f32.mrf.mxu0
        %v1759 = vpop.f32.mrf.mxu0
        %v1760 = vadd.f32 %v1558, %v1759
        %v1761 = vpop.f32.mrf.mxu0
        %1762 = vmatprep.mubr.bf16.mxu0 0
        %1763 = vmatmul.mubr.bf16.gmra.mxu0 %v1644
        %v1764 = vpop.f32.mrf.mxu0
        %v1765 = vadd.f32 %v1558, %v1764
        %v1766 = vpop.f32.mrf.mxu0
        %v1767 = vpop.f32.mrf.mxu0
        %v1768 = vadd.f32 %v1558, %v1767
        %v1769 = vpop.f32.mrf.mxu0
        %1770 = vdwg.mxu0
        %v1771 = vsub.f32 0.0, %v1733
        %v1772 = vsub.f32 0.0, %v1736
        %v1773 = vsub.f32 0.0, %v1741
        %v1774 = vsub.f32 0.0, %v1744
        %v1775 = vsub.f32 0.0, %v1749
        %v1776 = vsub.f32 0.0, %v1752
        %v1777 = vsub.f32 0.0, %v1757
        %v1778 = vsub.f32 0.0, %v1760
        %v1779 = vsub.f32 0.0, %v1765
        %v1780 = vsub.f32 0.0, %v1768
        %v1781 = vmul.f32 %v1771, 1.442695
        %v1782 = vpow.pop %v1781
        %v1783 = vmul.f32 %v1772, 1.442695
        %v1784 = vpow.pop %v1783
        %v1785 = vmul.f32 %v1773, 1.442695
        %v1786 = vpow.pop %v1785
        %v1787 = vmul.f32 %v1774, 1.442695
        %v1788 = vpow.pop %v1787
        %v1789 = vmul.f32 %v1775, 1.442695
        %v1790 = vpow.pop %v1789
        %v1791 = vmul.f32 %v1776, 1.442695
        %v1792 = vpow.pop %v1791
        %v1793 = vmul.f32 %v1777, 1.442695
        %v1794 = vpow.pop %v1793
        %v1795 = vmul.f32 %v1778, 1.442695
        %v1796 = vpow.pop %v1795
        %v1797 = vmul.f32 %v1779, 1.442695
        %v1798 = vpow.pop %v1797
        %v1799 = vmul.f32 %v1780, 1.442695
        %v1800 = vpow.pop %v1799
        %v1801 = vadd.f32 %v1782, 1.0
        %v1802 = vadd.f32 %v1784, 1.0
        %v1803 = vadd.f32 %v1786, 1.0
        %v1804 = vadd.f32 %v1788, 1.0
        %v1805 = vadd.f32 %v1790, 1.0
        %v1806 = vadd.f32 %v1792, 1.0
        %v1807 = vadd.f32 %v1794, 1.0
        %v1808 = vadd.f32 %v1796, 1.0
        %v1809 = vadd.f32 %v1798, 1.0
        %v1810 = vadd.f32 %v1800, 1.0
        %v1811 = vrcp.pop %v1801
        %v1812 = vrcp.pop %v1802
        %v1813 = vrcp.pop %v1803
        %v1814 = vrcp.pop %v1804
        %v1815 = vrcp.pop %v1805
        %v1816 = vrcp.pop %v1806
        %v1817 = vrcp.pop %v1807
        %v1818 = vrcp.pop %v1808
        %v1819 = vrcp.pop %v1809
        %v1820 = vrcp.pop %v1810
        %v1821 = vmul.f32 %v1733, %v1811
        %v1822 = vmul.f32 %v1736, %v1812
        %v1823 = vmul.f32 %v1741, %v1813
        %v1824 = vmul.f32 %v1744, %v1814
        %v1825 = vmul.f32 %v1749, %v1815
        %v1826 = vmul.f32 %v1752, %v1816
        %v1827 = vmul.f32 %v1757, %v1817
        %v1828 = vmul.f32 %v1760, %v1818
        %v1829 = vmul.f32 %v1765, %v1819
        %v1830 = vmul.f32 %v1768, %v1820
        %v1841 = vcombine.high %v1821, %v1821
        %v1842 = vcombine.high %v1822, %v1822
        %v1843 = vcombine.high %v1823, %v1823
        %v1844 = vcombine.high %v1824, %v1824
        %v1845 = vcombine.high %v1825, %v1825
        %v1846 = vcombine.high %v1826, %v1826
        %v1847 = vcombine.high %v1827, %v1827
        %v1848 = vcombine.high %v1828, %v1828
        %v1849 = vcombine.high %v1829, %v1829
        %v1850 = vcombine.high %v1830, %v1830
        %s1861 = sadd.s32 %s363, 6
        %v1862 = vstv %s1861
        %v1863 = vadd.s32 %v1862, 1
        %v1864 = vadd.s32 %v1862, 2
        %v1865 = vadd.s32 %v1862, 3
        %vm1866 = vcmp.ge.s32.totalorder %v1862, 0
        %vm1867 = vcmp.ge.s32.totalorder %v1863, 0
        %vm1868 = vcmp.ge.s32.totalorder %v1864, 0
        %vm1869 = vcmp.ge.s32.totalorder %v1865, 0
        %vm1870 = vcmp.lt.s32.totalorder %v1862, 16
        %vm1871 = vcmp.lt.s32.totalorder %v1863, 16
        %vm1872 = vcmp.lt.s32.totalorder %v1864, 16
        %vm1873 = vcmp.lt.s32.totalorder %v1865, 16
        %vm1874 = vmand %vm1866, %vm1870
        %vm1875 = vmand %vm1867, %vm1871
        %vm1876 = vmand %vm1868, %vm1872
        %vm1877 = vmand %vm1869, %vm1873
        %v1878 = vsel %vm1874, 1, 0
        %v1879 = vsel %vm1875, 1, 0
        %v1880 = vsel %vm1876, 1, 0
        %v1881 = vsel %vm1877, 1, 0
        %vm1882 = vcmp.eq.s32.totalorder %v1878, 1
        %vm1883 = vcmp.eq.s32.totalorder %v1879, 1
        %vm1884 = vcmp.eq.s32.totalorder %v1880, 1
        %vm1885 = vcmp.eq.s32.totalorder %v1881, 1
        %v1886 = vsel %vm1882, %v1821, 0.0
        %v1887 = vsel %vm1882, %v1841, 0.0
        %v1888 = vsel %vm1882, %v1822, 0.0
        %v1889 = vsel %vm1882, %v1842, 0.0
        %v1890 = vsel %vm1882, %v1823, 0.0
        %v1891 = vsel %vm1883, %v1843, 0.0
        %v1892 = vsel %vm1883, %v1824, 0.0
        %v1893 = vsel %vm1883, %v1844, 0.0
        %v1894 = vsel %vm1883, %v1825, 0.0
        %v1895 = vsel %vm1883, %v1845, 0.0
        %v1896 = vsel %vm1884, %v1826, 0.0
        %v1897 = vsel %vm1884, %v1846, 0.0
        %v1898 = vsel %vm1884, %v1827, 0.0
        %v1899 = vsel %vm1884, %v1847, 0.0
        %v1900 = vsel %vm1884, %v1828, 0.0
        %v1901 = vsel %vm1885, %v1848, 0.0
        %v1902 = vsel %vm1885, %v1829, 0.0
        %v1903 = vsel %vm1885, %v1849, 0.0
        %v1904 = vsel %vm1885, %v1830, 0.0
        %v1905 = vsel %vm1885, %v1850, 0.0
        %v1922 = vcombine.low %v1886, %v1887
        %v1923 = vcombine.low %v1888, %v1889
        %v1924 = vcombine.low %v1891, %v1892
        %v1925 = vcombine.low %v1893, %v1894
        %v1926 = vcombine.low %v1896, %v1897
        %v1927 = vcombine.low %v1898, %v1899
        %v1928 = vcombine.low %v1901, %v1902
        %v1929 = vcombine.low %v1903, %v1904
        %v1938 = vpack.c.bf16 %v1923, %v1922
        %v1939 = vpack.c.bf16 %v1890, %v1890
        %v1940 = vpack.c.bf16 %v1925, %v1924
        %v1941 = vpack.c.bf16 %v1895, %v1895
        %v1942 = vpack.c.bf16 %v1927, %v1926
        %v1943 = vpack.c.bf16 %v1900, %v1900
        %v1944 = vpack.c.bf16 %v1929, %v1928
        %v1945 = vpack.c.bf16 %v1905, %v1905
        %v1954 = vunpack.c.l.b16 %v1938
        %v1955 = vunpack.c.h.b16 %v1938
        %v1956 = vunpack.c.l.b16 %v1939
        %v1957 = vunpack.c.l.b16 %v1940
        %v1958 = vunpack.c.h.b16 %v1940
        %v1959 = vunpack.c.l.b16 %v1941
        %v1960 = vunpack.c.l.b16 %v1942
        %v1961 = vunpack.c.h.b16 %v1942
        %v1962 = vunpack.c.l.b16 %v1943
        %v1963 = vunpack.c.l.b16 %v1944
        %v1964 = vunpack.c.h.b16 %v1944
        %v1965 = vunpack.c.l.b16 %v1945
        %v1966 = vpack.c.b16 %v1954, %v1954
        %v1967 = vpack.c.b16 %v1955, %v1955
        %v1968 = vpack.c.b16 %v1956, %v1956
        %v1969 = vpack.c.b16 %v1957, %v1957
        %v1970 = vpack.c.b16 %v1958, %v1958
        %v1971 = vpack.c.b16 %v1959, %v1959
        %v1972 = vpack.c.b16 %v1960, %v1960
        %v1973 = vpack.c.b16 %v1961, %v1961
        %v1974 = vpack.c.b16 %v1962, %v1962
        %v1975 = vpack.c.b16 %v1963, %v1963
        %v1976 = vpack.c.b16 %v1964, %v1964
        %v1977 = vpack.c.b16 %v1965, %v1965
        %s1990 = scalar_lea.vmem [#allocation2], 96
        %1991 = vst [vmem:[%s1990] sm:$0xf] %v1966
        %1992 = vst [vmem:[%s1990 + $0x4] sm:$0xf] %v1967
        %1993 = vst [vmem:[%s1990 + $0x8] sm:$0x3] %v1968
        %1994 = vst [vmem:[%s1990 + $0xc] sm:$0xf] %v1969
        %1995 = vst [vmem:[%s1990 + $0x10] sm:$0xf] %v1970
        %1996 = vst [vmem:[%s1990 + $0x14] sm:$0x3] %v1971
        %1997 = vst [vmem:[%s1990 + $0x18] sm:$0xf] %v1972
        %1998 = vst [vmem:[%s1990 + $0x1c] sm:$0xf] %v1973
        %1999 = vst [vmem:[%s1990 + $0x20] sm:$0x3] %v1974
        %2000 = vst [vmem:[%s1990 + $0x24] sm:$0xf] %v1975
        %2001 = vst [vmem:[%s1990 + $0x28] sm:$0xf] %v1976
        %2002 = vst [vmem:[%s1990 + $0x2c] sm:$0x3] %v1977
        %2003 = vst [vmem:[#allocation2] sm:$0x1] 0
        %2004 = vst [vmem:[#allocation2 + $0xc] sm:$0x1] 0
        %2005 = vst [vmem:[#allocation2 + $0x18] sm:$0x1] 0
        %2006 = vst [vmem:[#allocation2 + $0x24] sm:$0x1] 0
        %2007 = vst [vmem:[#allocation2 + $0x30] sm:$0x1] 0
        %2008 = vst [vmem:[#allocation2 + $0x3c] sm:$0x1] 0
        %2009 = vst [vmem:[#allocation2 + $0x48] sm:$0x1] 0
        %2010 = vst [vmem:[#allocation2 + $0x54] sm:$0x1] 0
        %2011 = vst [vmem:[#allocation2 + $0x60] sm:$0x1] 0
        %2012 = vst [vmem:[#allocation2 + $0x6c] sm:$0x1] 0
        %2013 = vst [vmem:[#allocation2 + $0x78] sm:$0x1] 0
        %2014 = vst [vmem:[#allocation2 + $0x84] sm:$0x1] 0
        %2015 = vst [vmem:[#allocation2 + $0x8] sm:$0x2] 0
        %2016 = vst [vmem:[#allocation2 + $0x14] sm:$0x2] 0
        %2017 = vst [vmem:[#allocation2 + $0x20] sm:$0x2] 0
        %2018 = vst [vmem:[#allocation2 + $0x2c] sm:$0x2] 0
        %2019 = vst [vmem:[#allocation2 + $0x38] sm:$0x2] 0
        %2020 = vst [vmem:[#allocation2 + $0x44] sm:$0x2] 0
        %2021 = vst [vmem:[#allocation2 + $0x50] sm:$0x2] 0
        %2022 = vst [vmem:[#allocation2 + $0x5c] sm:$0x2] 0
        %2023 = vst [vmem:[#allocation2 + $0x68] sm:$0x2] 0
        %2024 = vst [vmem:[#allocation2 + $0x74] sm:$0x2] 0
        %2025 = vst [vmem:[#allocation2 + $0x80] sm:$0x2] 0
        %2026 = vst [vmem:[#allocation2 + $0x8c] sm:$0x2] 0
        %v2027 = vld [vmem:[#allocation2] sm:$0xf]
        %v2028 = vld [vmem:[#allocation2 + $0x4] sm:$0xf]
        %v2029 = vld [vmem:[#allocation2 + $0x8] sm:$0x3]
        %v2030 = vld [vmem:[#allocation2 + $0xc] sm:$0xf]
        %v2031 = vld [vmem:[#allocation2 + $0x10] sm:$0xf]
        %v2032 = vld [vmem:[#allocation2 + $0x14] sm:$0x3]
        %v2033 = vld [vmem:[#allocation2 + $0x18] sm:$0xf]
        %v2034 = vld [vmem:[#allocation2 + $0x1c] sm:$0xf]
        %v2035 = vld [vmem:[#allocation2 + $0x20] sm:$0x3]
        %v2036 = vld [vmem:[#allocation2 + $0x24] sm:$0xf]
        %v2037 = vld [vmem:[#allocation2 + $0x28] sm:$0xf]
        %v2038 = vld [vmem:[#allocation2 + $0x2c] sm:$0x3]
        %v2039 = vld [vmem:[#allocation2 + $0x30] sm:$0xf]
        %v2040 = vld [vmem:[#allocation2 + $0x34] sm:$0xf]
        %v2041 = vld [vmem:[#allocation2 + $0x38] sm:$0x3]
        %v2042 = vld [vmem:[#allocation2 + $0x3c] sm:$0xf]
        %v2043 = vld [vmem:[#allocation2 + $0x40] sm:$0xf]
        %v2044 = vld [vmem:[#allocation2 + $0x44] sm:$0x3]
        %v2045 = vld [vmem:[#allocation2 + $0x48] sm:$0xf]
        %v2046 = vld [vmem:[#allocation2 + $0x4c] sm:$0xf]
        %v2047 = vld [vmem:[#allocation2 + $0x50] sm:$0x3]
        %v2048 = vld [vmem:[#allocation2 + $0x54] sm:$0xf]
        %v2049 = vld [vmem:[#allocation2 + $0x58] sm:$0xf]
        %v2050 = vld [vmem:[#allocation2 + $0x5c] sm:$0x3]
        %v2051 = vld [vmem:[%s4] sm:$0x1]
        %v2052 = vunpack.c.l.bf16 %v2027
        %v2053 = vunpack.c.l.bf16 %v2028
        %v2054 = vunpack.c.l.bf16 %v2030
        %v2055 = vunpack.c.l.bf16 %v2031
        %v2056 = vunpack.c.l.bf16 %v2033
        %v2057 = vunpack.c.l.bf16 %v2034
        %v2058 = vunpack.c.l.bf16 %v2036
        %v2059 = vunpack.c.l.bf16 %v2037
        %v2060 = vunpack.c.l.bf16 %v2039
        %v2061 = vunpack.c.l.bf16 %v2040
        %v2062 = vunpack.c.l.bf16 %v2042
        %v2063 = vunpack.c.l.bf16 %v2043
        %v2064 = vunpack.c.l.bf16 %v2045
        %v2065 = vunpack.c.l.bf16 %v2046
        %v2066 = vunpack.c.l.bf16 %v2048
        %v2067 = vunpack.c.l.bf16 %v2049
        %v2068 = vlaneseq
        %v2069 = vshrl.u32 %v2068, 7
        %v2070 = vsub.s32 0, %v2069
        %v2071 = vrot.slane %v2051, %v2070
        %v2072 = vmul.f32 %v2052, %v2071
        %v2073 = vmul.f32 %v2053, %v2071
        %v2074 = vmul.f32 %v2054, %v2071
        %v2075 = vmul.f32 %v2055, %v2071
        %v2076 = vmul.f32 %v2056, %v2071
        %v2077 = vmul.f32 %v2057, %v2071
        %v2078 = vmul.f32 %v2058, %v2071
        %v2079 = vmul.f32 %v2059, %v2071
        %v2080 = vmul.f32 %v2060, %v2071
        %v2081 = vmul.f32 %v2061, %v2071
        %v2082 = vmul.f32 %v2062, %v2071
        %v2083 = vmul.f32 %v2063, %v2071
        %v2084 = vmul.f32 %v2064, %v2071
        %v2085 = vmul.f32 %v2065, %v2071
        %v2086 = vmul.f32 %v2066, %v2071
        %v2087 = vmul.f32 %v2067, %v2071
        %v2088 = vld [vmem:[%s4 + $0x1] sm:$0x1]
        %v2089 = vunpack.c.l.bf16 %v2029
        %v2090 = vunpack.c.l.bf16 %v2032
        %v2091 = vunpack.c.l.bf16 %v2035
        %v2092 = vunpack.c.l.bf16 %v2038
        %v2093 = vunpack.c.l.bf16 %v2041
        %v2094 = vunpack.c.l.bf16 %v2044
        %v2095 = vunpack.c.l.bf16 %v2047
        %v2096 = vunpack.c.l.bf16 %v2050
        %v2097 = vlaneseq
        %v2098 = vshrl.u32 %v2097, 7
        %v2099 = vsub.s32 0, %v2098
        %v2100 = vrot.slane %v2088, %v2099
        %v2101 = vmul.f32 %v2052, %v2100
        %v2102 = vmul.f32 %v2053, %v2100
        %v2103 = vmul.f32 %v2089, %v2100
        %v2104 = vmul.f32 %v2054, %v2100
        %v2105 = vmul.f32 %v2055, %v2100
        %v2106 = vmul.f32 %v2090, %v2100
        %v2107 = vmul.f32 %v2056, %v2100
        %v2108 = vmul.f32 %v2057, %v2100
        %v2109 = vmul.f32 %v2091, %v2100
        %v2110 = vmul.f32 %v2058, %v2100
        %v2111 = vmul.f32 %v2059, %v2100
        %v2112 = vmul.f32 %v2092, %v2100
        %v2113 = vmul.f32 %v2060, %v2100
        %v2114 = vmul.f32 %v2061, %v2100
        %v2115 = vmul.f32 %v2093, %v2100
        %v2116 = vmul.f32 %v2062, %v2100
        %v2117 = vmul.f32 %v2063, %v2100
        %v2118 = vmul.f32 %v2094, %v2100
        %v2119 = vmul.f32 %v2064, %v2100
        %v2120 = vmul.f32 %v2065, %v2100
        %v2121 = vmul.f32 %v2095, %v2100
        %v2122 = vmul.f32 %v2066, %v2100
        %v2123 = vmul.f32 %v2067, %v2100
        %v2124 = vmul.f32 %v2096, %v2100
        %vm2149 = vcmask 1046528
        %v2150 = vrot.slane %v2101, 1
        %v2151 = vrot.slane %v2102, 1
        %v2152 = vsel %vm2149, %v2150, %v2151
        %v2153 = vrot.slane %v2103, 1
        %v2154 = vsel %vm2149, %v2151, %v2153
        %v2155 = vrot.slane %v2104, 1
        %v2156 = vrot.slane %v2105, 1
        %v2157 = vsel %vm2149, %v2155, %v2156
        %v2158 = vrot.slane %v2106, 1
        %v2159 = vsel %vm2149, %v2156, %v2158
        %v2160 = vrot.slane %v2107, 1
        %v2161 = vrot.slane %v2108, 1
        %v2162 = vsel %vm2149, %v2160, %v2161
        %v2163 = vrot.slane %v2109, 1
        %v2164 = vsel %vm2149, %v2161, %v2163
        %v2165 = vrot.slane %v2110, 1
        %v2166 = vrot.slane %v2111, 1
        %v2167 = vsel %vm2149, %v2165, %v2166
        %v2168 = vrot.slane %v2112, 1
        %v2169 = vsel %vm2149, %v2166, %v2168
        %v2170 = vrot.slane %v2113, 1
        %v2171 = vrot.slane %v2114, 1
        %v2172 = vsel %vm2149, %v2170, %v2171
        %v2173 = vrot.slane %v2115, 1
        %v2174 = vsel %vm2149, %v2171, %v2173
        %v2175 = vrot.slane %v2116, 1
        %v2176 = vrot.slane %v2117, 1
        %v2177 = vsel %vm2149, %v2175, %v2176
        %v2178 = vrot.slane %v2118, 1
        %v2179 = vsel %vm2149, %v2176, %v2178
        %v2180 = vrot.slane %v2119, 1
        %v2181 = vrot.slane %v2120, 1
        %v2182 = vsel %vm2149, %v2180, %v2181
        %v2183 = vrot.slane %v2121, 1
        %v2184 = vsel %vm2149, %v2181, %v2183
        %v2185 = vrot.slane %v2122, 1
        %v2186 = vrot.slane %v2123, 1
        %v2187 = vsel %vm2149, %v2185, %v2186
        %v2188 = vrot.slane %v2124, 1
        %v2189 = vsel %vm2149, %v2186, %v2188
        %v2206 = vadd.f32 %v2072, %v2152
        %v2207 = vadd.f32 %v2073, %v2154
        %v2208 = vadd.f32 %v2074, %v2157
        %v2209 = vadd.f32 %v2075, %v2159
        %v2210 = vadd.f32 %v2076, %v2162
        %v2211 = vadd.f32 %v2077, %v2164
        %v2212 = vadd.f32 %v2078, %v2167
        %v2213 = vadd.f32 %v2079, %v2169
        %v2214 = vadd.f32 %v2080, %v2172
        %v2215 = vadd.f32 %v2081, %v2174
        %v2216 = vadd.f32 %v2082, %v2177
        %v2217 = vadd.f32 %v2083, %v2179
        %v2218 = vadd.f32 %v2084, %v2182
        %v2219 = vadd.f32 %v2085, %v2184
        %v2220 = vadd.f32 %v2086, %v2187
        %v2221 = vadd.f32 %v2087, %v2189
        %v2222 = vld [vmem:[%s4 + $0x2] sm:$0x1]
        %v2223 = vlaneseq
        %v2224 = vshrl.u32 %v2223, 7
        %v2225 = vsub.s32 0, %v2224
        %v2226 = vrot.slane %v2222, %v2225
        %v2227 = vmul.f32 %v2052, %v2226
        %v2228 = vmul.f32 %v2053, %v2226
        %v2229 = vmul.f32 %v2089, %v2226
        %v2230 = vmul.f32 %v2054, %v2226
        %v2231 = vmul.f32 %v2055, %v2226
        %v2232 = vmul.f32 %v2090, %v2226
        %v2233 = vmul.f32 %v2056, %v2226
        %v2234 = vmul.f32 %v2057, %v2226
        %v2235 = vmul.f32 %v2091, %v2226
        %v2236 = vmul.f32 %v2058, %v2226
        %v2237 = vmul.f32 %v2059, %v2226
        %v2238 = vmul.f32 %v2092, %v2226
        %v2239 = vmul.f32 %v2060, %v2226
        %v2240 = vmul.f32 %v2061, %v2226
        %v2241 = vmul.f32 %v2093, %v2226
        %v2242 = vmul.f32 %v2062, %v2226
        %v2243 = vmul.f32 %v2063, %v2226
        %v2244 = vmul.f32 %v2094, %v2226
        %v2245 = vmul.f32 %v2064, %v2226
        %v2246 = vmul.f32 %v2065, %v2226
        %v2247 = vmul.f32 %v2095, %v2226
        %v2248 = vmul.f32 %v2066, %v2226
        %v2249 = vmul.f32 %v2067, %v2226
        %v2250 = vmul.f32 %v2096, %v2226
        %vm2275 = vcmask 1045504
        %v2276 = vrot.slane %v2227, 2
        %v2277 = vrot.slane %v2228, 2
        %v2278 = vsel %vm2275, %v2276, %v2277
        %v2279 = vrot.slane %v2229, 2
        %v2280 = vsel %vm2275, %v2277, %v2279
        %v2281 = vrot.slane %v2230, 2
        %v2282 = vrot.slane %v2231, 2
        %v2283 = vsel %vm2275, %v2281, %v2282
        %v2284 = vrot.slane %v2232, 2
        %v2285 = vsel %vm2275, %v2282, %v2284
        %v2286 = vrot.slane %v2233, 2
        %v2287 = vrot.slane %v2234, 2
        %v2288 = vsel %vm2275, %v2286, %v2287
        %v2289 = vrot.slane %v2235, 2
        %v2290 = vsel %vm2275, %v2287, %v2289
        %v2291 = vrot.slane %v2236, 2
        %v2292 = vrot.slane %v2237, 2
        %v2293 = vsel %vm2275, %v2291, %v2292
        %v2294 = vrot.slane %v2238, 2
        %v2295 = vsel %vm2275, %v2292, %v2294
        %v2296 = vrot.slane %v2239, 2
        %v2297 = vrot.slane %v2240, 2
        %v2298 = vsel %vm2275, %v2296, %v2297
        %v2299 = vrot.slane %v2241, 2
        %v2300 = vsel %vm2275, %v2297, %v2299
        %v2301 = vrot.slane %v2242, 2
        %v2302 = vrot.slane %v2243, 2
        %v2303 = vsel %vm2275, %v2301, %v2302
        %v2304 = vrot.slane %v2244, 2
        %v2305 = vsel %vm2275, %v2302, %v2304
        %v2306 = vrot.slane %v2245, 2
        %v2307 = vrot.slane %v2246, 2
        %v2308 = vsel %vm2275, %v2306, %v2307
        %v2309 = vrot.slane %v2247, 2
        %v2310 = vsel %vm2275, %v2307, %v2309
        %v2311 = vrot.slane %v2248, 2
        %v2312 = vrot.slane %v2249, 2
        %v2313 = vsel %vm2275, %v2311, %v2312
        %v2314 = vrot.slane %v2250, 2
        %v2315 = vsel %vm2275, %v2312, %v2314
        %v2332 = vadd.f32 %v2206, %v2278
        %v2333 = vadd.f32 %v2207, %v2280
        %v2334 = vadd.f32 %v2208, %v2283
        %v2335 = vadd.f32 %v2209, %v2285
        %v2336 = vadd.f32 %v2210, %v2288
        %v2337 = vadd.f32 %v2211, %v2290
        %v2338 = vadd.f32 %v2212, %v2293
        %v2339 = vadd.f32 %v2213, %v2295
        %v2340 = vadd.f32 %v2214, %v2298
        %v2341 = vadd.f32 %v2215, %v2300
        %v2342 = vadd.f32 %v2216, %v2303
        %v2343 = vadd.f32 %v2217, %v2305
        %v2344 = vadd.f32 %v2218, %v2308
        %v2345 = vadd.f32 %v2219, %v2310
        %v2346 = vadd.f32 %v2220, %v2313
        %v2347 = vadd.f32 %v2221, %v2315
        %v2348 = vld [vmem:[%s4 + $0x3] sm:$0x1]
        %v2349 = vlaneseq
        %v2350 = vshrl.u32 %v2349, 7
        %v2351 = vsub.s32 0, %v2350
        %v2352 = vrot.slane %v2348, %v2351
        %v2353 = vmul.f32 %v2052, %v2352
        %v2354 = vmul.f32 %v2053, %v2352
        %v2355 = vmul.f32 %v2089, %v2352
        %v2356 = vmul.f32 %v2054, %v2352
        %v2357 = vmul.f32 %v2055, %v2352
        %v2358 = vmul.f32 %v2090, %v2352
        %v2359 = vmul.f32 %v2056, %v2352
        %v2360 = vmul.f32 %v2057, %v2352
        %v2361 = vmul.f32 %v2091, %v2352
        %v2362 = vmul.f32 %v2058, %v2352
        %v2363 = vmul.f32 %v2059, %v2352
        %v2364 = vmul.f32 %v2092, %v2352
        %v2365 = vmul.f32 %v2060, %v2352
        %v2366 = vmul.f32 %v2061, %v2352
        %v2367 = vmul.f32 %v2093, %v2352
        %v2368 = vmul.f32 %v2062, %v2352
        %v2369 = vmul.f32 %v2063, %v2352
        %v2370 = vmul.f32 %v2094, %v2352
        %v2371 = vmul.f32 %v2064, %v2352
        %v2372 = vmul.f32 %v2065, %v2352
        %v2373 = vmul.f32 %v2095, %v2352
        %v2374 = vmul.f32 %v2066, %v2352
        %v2375 = vmul.f32 %v2067, %v2352
        %v2376 = vmul.f32 %v2096, %v2352
        %vm2401 = vcmask 1044480
        %v2402 = vrot.slane %v2353, 3
        %v2403 = vrot.slane %v2354, 3
        %v2404 = vsel %vm2401, %v2402, %v2403
        %v2405 = vrot.slane %v2355, 3
        %v2406 = vsel %vm2401, %v2403, %v2405
        %v2407 = vrot.slane %v2356, 3
        %v2408 = vrot.slane %v2357, 3
        %v2409 = vsel %vm2401, %v2407, %v2408
        %v2410 = vrot.slane %v2358, 3
        %v2411 = vsel %vm2401, %v2408, %v2410
        %v2412 = vrot.slane %v2359, 3
        %v2413 = vrot.slane %v2360, 3
        %v2414 = vsel %vm2401, %v2412, %v2413
        %v2415 = vrot.slane %v2361, 3
        %v2416 = vsel %vm2401, %v2413, %v2415
        %v2417 = vrot.slane %v2362, 3
        %v2418 = vrot.slane %v2363, 3
        %v2419 = vsel %vm2401, %v2417, %v2418
        %v2420 = vrot.slane %v2364, 3
        %v2421 = vsel %vm2401, %v2418, %v2420
        %v2422 = vrot.slane %v2365, 3
        %v2423 = vrot.slane %v2366, 3
        %v2424 = vsel %vm2401, %v2422, %v2423
        %v2425 = vrot.slane %v2367, 3
        %v2426 = vsel %vm2401, %v2423, %v2425
        %v2427 = vrot.slane %v2368, 3
        %v2428 = vrot.slane %v2369, 3
        %v2429 = vsel %vm2401, %v2427, %v2428
        %v2430 = vrot.slane %v2370, 3
        %v2431 = vsel %vm2401, %v2428, %v2430
        %v2432 = vrot.slane %v2371, 3
        %v2433 = vrot.slane %v2372, 3
        %v2434 = vsel %vm2401, %v2432, %v2433
        %v2435 = vrot.slane %v2373, 3
        %v2436 = vsel %vm2401, %v2433, %v2435
        %v2437 = vrot.slane %v2374, 3
        %v2438 = vrot.slane %v2375, 3
        %v2439 = vsel %vm2401, %v2437, %v2438
        %v2440 = vrot.slane %v2376, 3
        %v2441 = vsel %vm2401, %v2438, %v2440
        %v2458 = vadd.f32 %v2332, %v2404
        %v2459 = vadd.f32 %v2333, %v2406
        %v2460 = vadd.f32 %v2334, %v2409
        %v2461 = vadd.f32 %v2335, %v2411
        %v2462 = vadd.f32 %v2336, %v2414
        %v2463 = vadd.f32 %v2337, %v2416
        %v2464 = vadd.f32 %v2338, %v2419
        %v2465 = vadd.f32 %v2339, %v2421
        %v2466 = vadd.f32 %v2340, %v2424
        %v2467 = vadd.f32 %v2341, %v2426
        %v2468 = vadd.f32 %v2342, %v2429
        %v2469 = vadd.f32 %v2343, %v2431
        %v2470 = vadd.f32 %v2344, %v2434
        %v2471 = vadd.f32 %v2345, %v2436
        %v2472 = vadd.f32 %v2346, %v2439
        %v2473 = vadd.f32 %v2347, %v2441
        %v2474 = vld [vmem:[%s4 + $0x4] sm:$0x1]
        %v2475 = vlaneseq
        %v2476 = vshrl.u32 %v2475, 7
        %v2477 = vsub.s32 0, %v2476
        %v2478 = vrot.slane %v2474, %v2477
        %v2479 = vmul.f32 %v2052, %v2478
        %v2480 = vmul.f32 %v2053, %v2478
        %v2481 = vmul.f32 %v2089, %v2478
        %v2482 = vmul.f32 %v2054, %v2478
        %v2483 = vmul.f32 %v2055, %v2478
        %v2484 = vmul.f32 %v2090, %v2478
        %v2485 = vmul.f32 %v2056, %v2478
        %v2486 = vmul.f32 %v2057, %v2478
        %v2487 = vmul.f32 %v2091, %v2478
        %v2488 = vmul.f32 %v2058, %v2478
        %v2489 = vmul.f32 %v2059, %v2478
        %v2490 = vmul.f32 %v2092, %v2478
        %v2491 = vmul.f32 %v2060, %v2478
        %v2492 = vmul.f32 %v2061, %v2478
        %v2493 = vmul.f32 %v2093, %v2478
        %v2494 = vmul.f32 %v2062, %v2478
        %v2495 = vmul.f32 %v2063, %v2478
        %v2496 = vmul.f32 %v2094, %v2478
        %v2497 = vmul.f32 %v2064, %v2478
        %v2498 = vmul.f32 %v2065, %v2478
        %v2499 = vmul.f32 %v2095, %v2478
        %v2500 = vmul.f32 %v2066, %v2478
        %v2501 = vmul.f32 %v2067, %v2478
        %v2502 = vmul.f32 %v2096, %v2478
        %vm2527 = vcmask 1043456
        %v2528 = vrot.slane %v2479, 4
        %v2529 = vrot.slane %v2480, 4
        %v2530 = vsel %vm2527, %v2528, %v2529
        %v2531 = vrot.slane %v2481, 4
        %v2532 = vsel %vm2527, %v2529, %v2531
        %v2533 = vrot.slane %v2482, 4
        %v2534 = vrot.slane %v2483, 4
        %v2535 = vsel %vm2527, %v2533, %v2534
        %v2536 = vrot.slane %v2484, 4
        %v2537 = vsel %vm2527, %v2534, %v2536
        %v2538 = vrot.slane %v2485, 4
        %v2539 = vrot.slane %v2486, 4
        %v2540 = vsel %vm2527, %v2538, %v2539
        %v2541 = vrot.slane %v2487, 4
        %v2542 = vsel %vm2527, %v2539, %v2541
        %v2543 = vrot.slane %v2488, 4
        %v2544 = vrot.slane %v2489, 4
        %v2545 = vsel %vm2527, %v2543, %v2544
        %v2546 = vrot.slane %v2490, 4
        %v2547 = vsel %vm2527, %v2544, %v2546
        %v2548 = vrot.slane %v2491, 4
        %v2549 = vrot.slane %v2492, 4
        %v2550 = vsel %vm2527, %v2548, %v2549
        %v2551 = vrot.slane %v2493, 4
        %v2552 = vsel %vm2527, %v2549, %v2551
        %v2553 = vrot.slane %v2494, 4
        %v2554 = vrot.slane %v2495, 4
        %v2555 = vsel %vm2527, %v2553, %v2554
        %v2556 = vrot.slane %v2496, 4
        %v2557 = vsel %vm2527, %v2554, %v2556
        %v2558 = vrot.slane %v2497, 4
        %v2559 = vrot.slane %v2498, 4
        %v2560 = vsel %vm2527, %v2558, %v2559
        %v2561 = vrot.slane %v2499, 4
        %v2562 = vsel %vm2527, %v2559, %v2561
        %v2563 = vrot.slane %v2500, 4
        %v2564 = vrot.slane %v2501, 4
        %v2565 = vsel %vm2527, %v2563, %v2564
        %v2566 = vrot.slane %v2502, 4
        %v2567 = vsel %vm2527, %v2564, %v2566
        %v2584 = vadd.f32 %v2458, %v2530
        %v2585 = vadd.f32 %v2459, %v2532
        %v2586 = vadd.f32 %v2460, %v2535
        %v2587 = vadd.f32 %v2461, %v2537
        %v2588 = vadd.f32 %v2462, %v2540
        %v2589 = vadd.f32 %v2463, %v2542
        %v2590 = vadd.f32 %v2464, %v2545
        %v2591 = vadd.f32 %v2465, %v2547
        %v2592 = vadd.f32 %v2466, %v2550
        %v2593 = vadd.f32 %v2467, %v2552
        %v2594 = vadd.f32 %v2468, %v2555
        %v2595 = vadd.f32 %v2469, %v2557
        %v2596 = vadd.f32 %v2470, %v2560
        %v2597 = vadd.f32 %v2471, %v2562
        %v2598 = vadd.f32 %v2472, %v2565
        %v2599 = vadd.f32 %v2473, %v2567
        %s2600 = scalar_lea.vmem [#allocation2], 12
        %v2601 = vld [vmem:[%s2600] sm:$0xf]
        %v2602 = vld [vmem:[%s2600 + $0x4] sm:$0xf]
        %v2603 = vld [vmem:[%s2600 + $0x8] sm:$0x3]
        %v2604 = vld [vmem:[%s2600 + $0xc] sm:$0xf]
        %v2605 = vld [vmem:[%s2600 + $0x10] sm:$0xf]
        %v2606 = vld [vmem:[%s2600 + $0x14] sm:$0x3]
        %v2607 = vld [vmem:[%s2600 + $0x18] sm:$0xf]
        %v2608 = vld [vmem:[%s2600 + $0x1c] sm:$0xf]
        %v2609 = vld [vmem:[%s2600 + $0x20] sm:$0x3]
        %v2610 = vld [vmem:[%s2600 + $0x24] sm:$0xf]
        %v2611 = vld [vmem:[%s2600 + $0x28] sm:$0xf]
        %v2612 = vld [vmem:[%s2600 + $0x2c] sm:$0x3]
        %v2613 = vld [vmem:[%s2600 + $0x30] sm:$0xf]
        %v2614 = vld [vmem:[%s2600 + $0x34] sm:$0xf]
        %v2615 = vld [vmem:[%s2600 + $0x38] sm:$0x3]
        %v2616 = vld [vmem:[%s2600 + $0x3c] sm:$0xf]
        %v2617 = vld [vmem:[%s2600 + $0x40] sm:$0xf]
        %v2618 = vld [vmem:[%s2600 + $0x44] sm:$0x3]
        %v2619 = vld [vmem:[%s2600 + $0x48] sm:$0xf]
        %v2620 = vld [vmem:[%s2600 + $0x4c] sm:$0xf]
        %v2621 = vld [vmem:[%s2600 + $0x50] sm:$0x3]
        %v2622 = vld [vmem:[%s2600 + $0x54] sm:$0xf]
        %v2623 = vld [vmem:[%s2600 + $0x58] sm:$0xf]
        %v2624 = vld [vmem:[%s2600 + $0x5c] sm:$0x3]
        %v2625 = vld [vmem:[%s4 + $0x5] sm:$0x1]
        %v2626 = vunpack.c.l.bf16 %v2601
        %v2627 = vunpack.c.l.bf16 %v2602
        %v2628 = vunpack.c.l.bf16 %v2604
        %v2629 = vunpack.c.l.bf16 %v2605
        %v2630 = vunpack.c.l.bf16 %v2607
        %v2631 = vunpack.c.l.bf16 %v2608
        %v2632 = vunpack.c.l.bf16 %v2610
        %v2633 = vunpack.c.l.bf16 %v2611
        %v2634 = vunpack.c.l.bf16 %v2613
        %v2635 = vunpack.c.l.bf16 %v2614
        %v2636 = vunpack.c.l.bf16 %v2616
        %v2637 = vunpack.c.l.bf16 %v2617
        %v2638 = vunpack.c.l.bf16 %v2619
        %v2639 = vunpack.c.l.bf16 %v2620
        %v2640 = vunpack.c.l.bf16 %v2622
        %v2641 = vunpack.c.l.bf16 %v2623
        %v2642 = vlaneseq
        %v2643 = vshrl.u32 %v2642, 7
        %v2644 = vsub.s32 0, %v2643
        %v2645 = vrot.slane %v2625, %v2644
        %v2646 = vmul.f32 %v2626, %v2645
        %v2647 = vmul.f32 %v2627, %v2645
        %v2648 = vmul.f32 %v2628, %v2645
        %v2649 = vmul.f32 %v2629, %v2645
        %v2650 = vmul.f32 %v2630, %v2645
        %v2651 = vmul.f32 %v2631, %v2645
        %v2652 = vmul.f32 %v2632, %v2645
        %v2653 = vmul.f32 %v2633, %v2645
        %v2654 = vmul.f32 %v2634, %v2645
        %v2655 = vmul.f32 %v2635, %v2645
        %v2656 = vmul.f32 %v2636, %v2645
        %v2657 = vmul.f32 %v2637, %v2645
        %v2658 = vmul.f32 %v2638, %v2645
        %v2659 = vmul.f32 %v2639, %v2645
        %v2660 = vmul.f32 %v2640, %v2645
        %v2661 = vmul.f32 %v2641, %v2645
        %v2662 = vld [vmem:[%s4 + $0x6] sm:$0x1]
        %v2663 = vunpack.c.l.bf16 %v2603
        %v2664 = vunpack.c.l.bf16 %v2606
        %v2665 = vunpack.c.l.bf16 %v2609
        %v2666 = vunpack.c.l.bf16 %v2612
        %v2667 = vunpack.c.l.bf16 %v2615
        %v2668 = vunpack.c.l.bf16 %v2618
        %v2669 = vunpack.c.l.bf16 %v2621
        %v2670 = vunpack.c.l.bf16 %v2624
        %v2671 = vlaneseq
        %v2672 = vshrl.u32 %v2671, 7
        %v2673 = vsub.s32 0, %v2672
        %v2674 = vrot.slane %v2662, %v2673
        %v2675 = vmul.f32 %v2626, %v2674
        %v2676 = vmul.f32 %v2627, %v2674
        %v2677 = vmul.f32 %v2663, %v2674
        %v2678 = vmul.f32 %v2628, %v2674
        %v2679 = vmul.f32 %v2629, %v2674
        %v2680 = vmul.f32 %v2664, %v2674
        %v2681 = vmul.f32 %v2630, %v2674
        %v2682 = vmul.f32 %v2631, %v2674
        %v2683 = vmul.f32 %v2665, %v2674
        %v2684 = vmul.f32 %v2632, %v2674
        %v2685 = vmul.f32 %v2633, %v2674
        %v2686 = vmul.f32 %v2666, %v2674
        %v2687 = vmul.f32 %v2634, %v2674
        %v2688 = vmul.f32 %v2635, %v2674
        %v2689 = vmul.f32 %v2667, %v2674
        %v2690 = vmul.f32 %v2636, %v2674
        %v2691 = vmul.f32 %v2637, %v2674
        %v2692 = vmul.f32 %v2668, %v2674
        %v2693 = vmul.f32 %v2638, %v2674
        %v2694 = vmul.f32 %v2639, %v2674
        %v2695 = vmul.f32 %v2669, %v2674
        %v2696 = vmul.f32 %v2640, %v2674
        %v2697 = vmul.f32 %v2641, %v2674
        %v2698 = vmul.f32 %v2670, %v2674
        %v2723 = vrot.slane %v2675, 1
        %v2724 = vrot.slane %v2676, 1
        %v2725 = vsel %vm2149, %v2723, %v2724
        %v2726 = vrot.slane %v2677, 1
        %v2727 = vsel %vm2149, %v2724, %v2726
        %v2728 = vrot.slane %v2678, 1
        %v2729 = vrot.slane %v2679, 1
        %v2730 = vsel %vm2149, %v2728, %v2729
        %v2731 = vrot.slane %v2680, 1
        %v2732 = vsel %vm2149, %v2729, %v2731
        %v2733 = vrot.slane %v2681, 1
        %v2734 = vrot.slane %v2682, 1
        %v2735 = vsel %vm2149, %v2733, %v2734
        %v2736 = vrot.slane %v2683, 1
        %v2737 = vsel %vm2149, %v2734, %v2736
        %v2738 = vrot.slane %v2684, 1
        %v2739 = vrot.slane %v2685, 1
        %v2740 = vsel %vm2149, %v2738, %v2739
        %v2741 = vrot.slane %v2686, 1
        %v2742 = vsel %vm2149, %v2739, %v2741
        %v2743 = vrot.slane %v2687, 1
        %v2744 = vrot.slane %v2688, 1
        %v2745 = vsel %vm2149, %v2743, %v2744
        %v2746 = vrot.slane %v2689, 1
        %v2747 = vsel %vm2149, %v2744, %v2746
        %v2748 = vrot.slane %v2690, 1
        %v2749 = vrot.slane %v2691, 1
        %v2750 = vsel %vm2149, %v2748, %v2749
        %v2751 = vrot.slane %v2692, 1
        %v2752 = vsel %vm2149, %v2749, %v2751
        %v2753 = vrot.slane %v2693, 1
        %v2754 = vrot.slane %v2694, 1
        %v2755 = vsel %vm2149, %v2753, %v2754
        %v2756 = vrot.slane %v2695, 1
        %v2757 = vsel %vm2149, %v2754, %v2756
        %v2758 = vrot.slane %v2696, 1
        %v2759 = vrot.slane %v2697, 1
        %v2760 = vsel %vm2149, %v2758, %v2759
        %v2761 = vrot.slane %v2698, 1
        %v2762 = vsel %vm2149, %v2759, %v2761
        %v2779 = vadd.f32 %v2646, %v2725
        %v2780 = vadd.f32 %v2647, %v2727
        %v2781 = vadd.f32 %v2648, %v2730
        %v2782 = vadd.f32 %v2649, %v2732
        %v2783 = vadd.f32 %v2650, %v2735
        %v2784 = vadd.f32 %v2651, %v2737
        %v2785 = vadd.f32 %v2652, %v2740
        %v2786 = vadd.f32 %v2653, %v2742
        %v2787 = vadd.f32 %v2654, %v2745
        %v2788 = vadd.f32 %v2655, %v2747
        %v2789 = vadd.f32 %v2656, %v2750
        %v2790 = vadd.f32 %v2657, %v2752
        %v2791 = vadd.f32 %v2658, %v2755
        %v2792 = vadd.f32 %v2659, %v2757
        %v2793 = vadd.f32 %v2660, %v2760
        %v2794 = vadd.f32 %v2661, %v2762
        %v2795 = vld [vmem:[%s4 + $0x7] sm:$0x1]
        %v2796 = vlaneseq
        %v2797 = vshrl.u32 %v2796, 7
        %v2798 = vsub.s32 0, %v2797
        %v2799 = vrot.slane %v2795, %v2798
        %v2800 = vmul.f32 %v2626, %v2799
        %v2801 = vmul.f32 %v2627, %v2799
        %v2802 = vmul.f32 %v2663, %v2799
        %v2803 = vmul.f32 %v2628, %v2799
        %v2804 = vmul.f32 %v2629, %v2799
        %v2805 = vmul.f32 %v2664, %v2799
        %v2806 = vmul.f32 %v2630, %v2799
        %v2807 = vmul.f32 %v2631, %v2799
        %v2808 = vmul.f32 %v2665, %v2799
        %v2809 = vmul.f32 %v2632, %v2799
        %v2810 = vmul.f32 %v2633, %v2799
        %v2811 = vmul.f32 %v2666, %v2799
        %v2812 = vmul.f32 %v2634, %v2799
        %v2813 = vmul.f32 %v2635, %v2799
        %v2814 = vmul.f32 %v2667, %v2799
        %v2815 = vmul.f32 %v2636, %v2799
        %v2816 = vmul.f32 %v2637, %v2799
        %v2817 = vmul.f32 %v2668, %v2799
        %v2818 = vmul.f32 %v2638, %v2799
        %v2819 = vmul.f32 %v2639, %v2799
        %v2820 = vmul.f32 %v2669, %v2799
        %v2821 = vmul.f32 %v2640, %v2799
        %v2822 = vmul.f32 %v2641, %v2799
        %v2823 = vmul.f32 %v2670, %v2799
        %v2848 = vrot.slane %v2800, 2
        %v2849 = vrot.slane %v2801, 2
        %v2850 = vsel %vm2275, %v2848, %v2849
        %v2851 = vrot.slane %v2802, 2
        %v2852 = vsel %vm2275, %v2849, %v2851
        %v2853 = vrot.slane %v2803, 2
        %v2854 = vrot.slane %v2804, 2
        %v2855 = vsel %vm2275, %v2853, %v2854
        %v2856 = vrot.slane %v2805, 2
        %v2857 = vsel %vm2275, %v2854, %v2856
        %v2858 = vrot.slane %v2806, 2
        %v2859 = vrot.slane %v2807, 2
        %v2860 = vsel %vm2275, %v2858, %v2859
        %v2861 = vrot.slane %v2808, 2
        %v2862 = vsel %vm2275, %v2859, %v2861
        %v2863 = vrot.slane %v2809, 2
        %v2864 = vrot.slane %v2810, 2
        %v2865 = vsel %vm2275, %v2863, %v2864
        %v2866 = vrot.slane %v2811, 2
        %v2867 = vsel %vm2275, %v2864, %v2866
        %v2868 = vrot.slane %v2812, 2
        %v2869 = vrot.slane %v2813, 2
        %v2870 = vsel %vm2275, %v2868, %v2869
        %v2871 = vrot.slane %v2814, 2
        %v2872 = vsel %vm2275, %v2869, %v2871
        %v2873 = vrot.slane %v2815, 2
        %v2874 = vrot.slane %v2816, 2
        %v2875 = vsel %vm2275, %v2873, %v2874
        %v2876 = vrot.slane %v2817, 2
        %v2877 = vsel %vm2275, %v2874, %v2876
        %v2878 = vrot.slane %v2818, 2
        %v2879 = vrot.slane %v2819, 2
        %v2880 = vsel %vm2275, %v2878, %v2879
        %v2881 = vrot.slane %v2820, 2
        %v2882 = vsel %vm2275, %v2879, %v2881
        %v2883 = vrot.slane %v2821, 2
        %v2884 = vrot.slane %v2822, 2
        %v2885 = vsel %vm2275, %v2883, %v2884
        %v2886 = vrot.slane %v2823, 2
        %v2887 = vsel %vm2275, %v2884, %v2886
        %v2904 = vadd.f32 %v2779, %v2850
        %v2905 = vadd.f32 %v2780, %v2852
        %v2906 = vadd.f32 %v2781, %v2855
        %v2907 = vadd.f32 %v2782, %v2857
        %v2908 = vadd.f32 %v2783, %v2860
        %v2909 = vadd.f32 %v2784, %v2862
        %v2910 = vadd.f32 %v2785, %v2865
        %v2911 = vadd.f32 %v2786, %v2867
        %v2912 = vadd.f32 %v2787, %v2870
        %v2913 = vadd.f32 %v2788, %v2872
        %v2914 = vadd.f32 %v2789, %v2875
        %v2915 = vadd.f32 %v2790, %v2877
        %v2916 = vadd.f32 %v2791, %v2880
        %v2917 = vadd.f32 %v2792, %v2882
        %v2918 = vadd.f32 %v2793, %v2885
        %v2919 = vadd.f32 %v2794, %v2887
        %v2920 = vld [vmem:[%s4 + $0x8] sm:$0x1]
        %v2921 = vlaneseq
        %v2922 = vshrl.u32 %v2921, 7
        %v2923 = vsub.s32 0, %v2922
        %v2924 = vrot.slane %v2920, %v2923
        %v2925 = vmul.f32 %v2626, %v2924
        %v2926 = vmul.f32 %v2627, %v2924
        %v2927 = vmul.f32 %v2663, %v2924
        %v2928 = vmul.f32 %v2628, %v2924
        %v2929 = vmul.f32 %v2629, %v2924
        %v2930 = vmul.f32 %v2664, %v2924
        %v2931 = vmul.f32 %v2630, %v2924
        %v2932 = vmul.f32 %v2631, %v2924
        %v2933 = vmul.f32 %v2665, %v2924
        %v2934 = vmul.f32 %v2632, %v2924
        %v2935 = vmul.f32 %v2633, %v2924
        %v2936 = vmul.f32 %v2666, %v2924
        %v2937 = vmul.f32 %v2634, %v2924
        %v2938 = vmul.f32 %v2635, %v2924
        %v2939 = vmul.f32 %v2667, %v2924
        %v2940 = vmul.f32 %v2636, %v2924
        %v2941 = vmul.f32 %v2637, %v2924
        %v2942 = vmul.f32 %v2668, %v2924
        %v2943 = vmul.f32 %v2638, %v2924
        %v2944 = vmul.f32 %v2639, %v2924
        %v2945 = vmul.f32 %v2669, %v2924
        %v2946 = vmul.f32 %v2640, %v2924
        %v2947 = vmul.f32 %v2641, %v2924
        %v2948 = vmul.f32 %v2670, %v2924
        %v2973 = vrot.slane %v2925, 3
        %v2974 = vrot.slane %v2926, 3
        %v2975 = vsel %vm2401, %v2973, %v2974
        %v2976 = vrot.slane %v2927, 3
        %v2977 = vsel %vm2401, %v2974, %v2976
        %v2978 = vrot.slane %v2928, 3
        %v2979 = vrot.slane %v2929, 3
        %v2980 = vsel %vm2401, %v2978, %v2979
        %v2981 = vrot.slane %v2930, 3
        %v2982 = vsel %vm2401, %v2979, %v2981
        %v2983 = vrot.slane %v2931, 3
        %v2984 = vrot.slane %v2932, 3
        %v2985 = vsel %vm2401, %v2983, %v2984
        %v2986 = vrot.slane %v2933, 3
        %v2987 = vsel %vm2401, %v2984, %v2986
        %v2988 = vrot.slane %v2934, 3
        %v2989 = vrot.slane %v2935, 3
        %v2990 = vsel %vm2401, %v2988, %v2989
        %v2991 = vrot.slane %v2936, 3
        %v2992 = vsel %vm2401, %v2989, %v2991
        %v2993 = vrot.slane %v2937, 3
        %v2994 = vrot.slane %v2938, 3
        %v2995 = vsel %vm2401, %v2993, %v2994
        %v2996 = vrot.slane %v2939, 3
        %v2997 = vsel %vm2401, %v2994, %v2996
        %v2998 = vrot.slane %v2940, 3
        %v2999 = vrot.slane %v2941, 3
        %v3000 = vsel %vm2401, %v2998, %v2999
        %v3001 = vrot.slane %v2942, 3
        %v3002 = vsel %vm2401, %v2999, %v3001
        %v3003 = vrot.slane %v2943, 3
        %v3004 = vrot.slane %v2944, 3
        %v3005 = vsel %vm2401, %v3003, %v3004
        %v3006 = vrot.slane %v2945, 3
        %v3007 = vsel %vm2401, %v3004, %v3006
        %v3008 = vrot.slane %v2946, 3
        %v3009 = vrot.slane %v2947, 3
        %v3010 = vsel %vm2401, %v3008, %v3009
        %v3011 = vrot.slane %v2948, 3
        %v3012 = vsel %vm2401, %v3009, %v3011
        %v3029 = vadd.f32 %v2904, %v2975
        %v3030 = vadd.f32 %v2905, %v2977
        %v3031 = vadd.f32 %v2906, %v2980
        %v3032 = vadd.f32 %v2907, %v2982
        %v3033 = vadd.f32 %v2908, %v2985
        %v3034 = vadd.f32 %v2909, %v2987
        %v3035 = vadd.f32 %v2910, %v2990
        %v3036 = vadd.f32 %v2911, %v2992
        %v3037 = vadd.f32 %v2912, %v2995
        %v3038 = vadd.f32 %v2913, %v2997
        %v3039 = vadd.f32 %v2914, %v3000
        %v3040 = vadd.f32 %v2915, %v3002
        %v3041 = vadd.f32 %v2916, %v3005
        %v3042 = vadd.f32 %v2917, %v3007
        %v3043 = vadd.f32 %v2918, %v3010
        %v3044 = vadd.f32 %v2919, %v3012
        %v3045 = vld [vmem:[%s4 + $0x9] sm:$0x1]
        %v3046 = vlaneseq
        %v3047 = vshrl.u32 %v3046, 7
        %v3048 = vsub.s32 0, %v3047
        %v3049 = vrot.slane %v3045, %v3048
        %v3050 = vmul.f32 %v2626, %v3049
        %v3051 = vmul.f32 %v2627, %v3049
        %v3052 = vmul.f32 %v2663, %v3049
        %v3053 = vmul.f32 %v2628, %v3049
        %v3054 = vmul.f32 %v2629, %v3049
        %v3055 = vmul.f32 %v2664, %v3049
        %v3056 = vmul.f32 %v2630, %v3049
        %v3057 = vmul.f32 %v2631, %v3049
        %v3058 = vmul.f32 %v2665, %v3049
        %v3059 = vmul.f32 %v2632, %v3049
        %v3060 = vmul.f32 %v2633, %v3049
        %v3061 = vmul.f32 %v2666, %v3049
        %v3062 = vmul.f32 %v2634, %v3049
        %v3063 = vmul.f32 %v2635, %v3049
        %v3064 = vmul.f32 %v2667, %v3049
        %v3065 = vmul.f32 %v2636, %v3049
        %v3066 = vmul.f32 %v2637, %v3049
        %v3067 = vmul.f32 %v2668, %v3049
        %v3068 = vmul.f32 %v2638, %v3049
        %v3069 = vmul.f32 %v2639, %v3049
        %v3070 = vmul.f32 %v2669, %v3049
        %v3071 = vmul.f32 %v2640, %v3049
        %v3072 = vmul.f32 %v2641, %v3049
        %v3073 = vmul.f32 %v2670, %v3049
        %v3098 = vrot.slane %v3050, 4
        %v3099 = vrot.slane %v3051, 4
        %v3100 = vsel %vm2527, %v3098, %v3099
        %v3101 = vrot.slane %v3052, 4
        %v3102 = vsel %vm2527, %v3099, %v3101
        %v3103 = vrot.slane %v3053, 4
        %v3104 = vrot.slane %v3054, 4
        %v3105 = vsel %vm2527, %v3103, %v3104
        %v3106 = vrot.slane %v3055, 4
        %v3107 = vsel %vm2527, %v3104, %v3106
        %v3108 = vrot.slane %v3056, 4
        %v3109 = vrot.slane %v3057, 4
        %v3110 = vsel %vm2527, %v3108, %v3109
        %v3111 = vrot.slane %v3058, 4
        %v3112 = vsel %vm2527, %v3109, %v3111
        %v3113 = vrot.slane %v3059, 4
        %v3114 = vrot.slane %v3060, 4
        %v3115 = vsel %vm2527, %v3113, %v3114
        %v3116 = vrot.slane %v3061, 4
        %v3117 = vsel %vm2527, %v3114, %v3116
        %v3118 = vrot.slane %v3062, 4
        %v3119 = vrot.slane %v3063, 4
        %v3120 = vsel %vm2527, %v3118, %v3119
        %v3121 = vrot.slane %v3064, 4
        %v3122 = vsel %vm2527, %v3119, %v3121
        %v3123 = vrot.slane %v3065, 4
        %v3124 = vrot.slane %v3066, 4
        %v3125 = vsel %vm2527, %v3123, %v3124
        %v3126 = vrot.slane %v3067, 4
        %v3127 = vsel %vm2527, %v3124, %v3126
        %v3128 = vrot.slane %v3068, 4
        %v3129 = vrot.slane %v3069, 4
        %v3130 = vsel %vm2527, %v3128, %v3129
        %v3131 = vrot.slane %v3070, 4
        %v3132 = vsel %vm2527, %v3129, %v3131
        %v3133 = vrot.slane %v3071, 4
        %v3134 = vrot.slane %v3072, 4
        %v3135 = vsel %vm2527, %v3133, %v3134
        %v3136 = vrot.slane %v3073, 4
        %v3137 = vsel %vm2527, %v3134, %v3136
        %v3154 = vadd.f32 %v3029, %v3100
        %v3155 = vadd.f32 %v3030, %v3102
        %v3156 = vadd.f32 %v3031, %v3105
        %v3157 = vadd.f32 %v3032, %v3107
        %v3158 = vadd.f32 %v3033, %v3110
        %v3159 = vadd.f32 %v3034, %v3112
        %v3160 = vadd.f32 %v3035, %v3115
        %v3161 = vadd.f32 %v3036, %v3117
        %v3162 = vadd.f32 %v3037, %v3120
        %v3163 = vadd.f32 %v3038, %v3122
        %v3164 = vadd.f32 %v3039, %v3125
        %v3165 = vadd.f32 %v3040, %v3127
        %v3166 = vadd.f32 %v3041, %v3130
        %v3167 = vadd.f32 %v3042, %v3132
        %v3168 = vadd.f32 %v3043, %v3135
        %v3169 = vadd.f32 %v3044, %v3137
        %s3170 = scalar_lea.vmem [#allocation2], 24
        %v3171 = vld [vmem:[%s3170] sm:$0xf]
        %v3172 = vld [vmem:[%s3170 + $0x4] sm:$0xf]
        %v3173 = vld [vmem:[%s3170 + $0x8] sm:$0x3]
        %v3174 = vld [vmem:[%s3170 + $0xc] sm:$0xf]
        %v3175 = vld [vmem:[%s3170 + $0x10] sm:$0xf]
        %v3176 = vld [vmem:[%s3170 + $0x14] sm:$0x3]
        %v3177 = vld [vmem:[%s3170 + $0x18] sm:$0xf]
        %v3178 = vld [vmem:[%s3170 + $0x1c] sm:$0xf]
        %v3179 = vld [vmem:[%s3170 + $0x20] sm:$0x3]
        %v3180 = vld [vmem:[%s3170 + $0x24] sm:$0xf]
        %v3181 = vld [vmem:[%s3170 + $0x28] sm:$0xf]
        %v3182 = vld [vmem:[%s3170 + $0x2c] sm:$0x3]
        %v3183 = vld [vmem:[%s3170 + $0x30] sm:$0xf]
        %v3184 = vld [vmem:[%s3170 + $0x34] sm:$0xf]
        %v3185 = vld [vmem:[%s3170 + $0x38] sm:$0x3]
        %v3186 = vld [vmem:[%s3170 + $0x3c] sm:$0xf]
        %v3187 = vld [vmem:[%s3170 + $0x40] sm:$0xf]
        %v3188 = vld [vmem:[%s3170 + $0x44] sm:$0x3]
        %v3189 = vld [vmem:[%s3170 + $0x48] sm:$0xf]
        %v3190 = vld [vmem:[%s3170 + $0x4c] sm:$0xf]
        %v3191 = vld [vmem:[%s3170 + $0x50] sm:$0x3]
        %v3192 = vld [vmem:[%s3170 + $0x54] sm:$0xf]
        %v3193 = vld [vmem:[%s3170 + $0x58] sm:$0xf]
        %v3194 = vld [vmem:[%s3170 + $0x5c] sm:$0x3]
        %v3195 = vld [vmem:[%s4 + $0xa] sm:$0x1]
        %v3196 = vunpack.c.l.bf16 %v3171
        %v3197 = vunpack.c.l.bf16 %v3172
        %v3198 = vunpack.c.l.bf16 %v3174
        %v3199 = vunpack.c.l.bf16 %v3175
        %v3200 = vunpack.c.l.bf16 %v3177
        %v3201 = vunpack.c.l.bf16 %v3178
        %v3202 = vunpack.c.l.bf16 %v3180
        %v3203 = vunpack.c.l.bf16 %v3181
        %v3204 = vunpack.c.l.bf16 %v3183
        %v3205 = vunpack.c.l.bf16 %v3184
        %v3206 = vunpack.c.l.bf16 %v3186
        %v3207 = vunpack.c.l.bf16 %v3187
        %v3208 = vunpack.c.l.bf16 %v3189
        %v3209 = vunpack.c.l.bf16 %v3190
        %v3210 = vunpack.c.l.bf16 %v3192
        %v3211 = vunpack.c.l.bf16 %v3193
        %v3212 = vlaneseq
        %v3213 = vshrl.u32 %v3212, 7
        %v3214 = vsub.s32 0, %v3213
        %v3215 = vrot.slane %v3195, %v3214
        %v3216 = vmul.f32 %v3196, %v3215
        %v3217 = vmul.f32 %v3197, %v3215
        %v3218 = vmul.f32 %v3198, %v3215
        %v3219 = vmul.f32 %v3199, %v3215
        %v3220 = vmul.f32 %v3200, %v3215
        %v3221 = vmul.f32 %v3201, %v3215
        %v3222 = vmul.f32 %v3202, %v3215
        %v3223 = vmul.f32 %v3203, %v3215
        %v3224 = vmul.f32 %v3204, %v3215
        %v3225 = vmul.f32 %v3205, %v3215
        %v3226 = vmul.f32 %v3206, %v3215
        %v3227 = vmul.f32 %v3207, %v3215
        %v3228 = vmul.f32 %v3208, %v3215
        %v3229 = vmul.f32 %v3209, %v3215
        %v3230 = vmul.f32 %v3210, %v3215
        %v3231 = vmul.f32 %v3211, %v3215
        %v3232 = vld [vmem:[%s4 + $0xb] sm:$0x1]
        %v3233 = vunpack.c.l.bf16 %v3173
        %v3234 = vunpack.c.l.bf16 %v3176
        %v3235 = vunpack.c.l.bf16 %v3179
        %v3236 = vunpack.c.l.bf16 %v3182
        %v3237 = vunpack.c.l.bf16 %v3185
        %v3238 = vunpack.c.l.bf16 %v3188
        %v3239 = vunpack.c.l.bf16 %v3191
        %v3240 = vunpack.c.l.bf16 %v3194
        %v3241 = vlaneseq
        %v3242 = vshrl.u32 %v3241, 7
        %v3243 = vsub.s32 0, %v3242
        %v3244 = vrot.slane %v3232, %v3243
        %v3245 = vmul.f32 %v3196, %v3244
        %v3246 = vmul.f32 %v3197, %v3244
        %v3247 = vmul.f32 %v3233, %v3244
        %v3248 = vmul.f32 %v3198, %v3244
        %v3249 = vmul.f32 %v3199, %v3244
        %v3250 = vmul.f32 %v3234, %v3244
        %v3251 = vmul.f32 %v3200, %v3244
        %v3252 = vmul.f32 %v3201, %v3244
        %v3253 = vmul.f32 %v3235, %v3244
        %v3254 = vmul.f32 %v3202, %v3244
        %v3255 = vmul.f32 %v3203, %v3244
        %v3256 = vmul.f32 %v3236, %v3244
        %v3257 = vmul.f32 %v3204, %v3244
        %v3258 = vmul.f32 %v3205, %v3244
        %v3259 = vmul.f32 %v3237, %v3244
        %v3260 = vmul.f32 %v3206, %v3244
        %v3261 = vmul.f32 %v3207, %v3244
        %v3262 = vmul.f32 %v3238, %v3244
        %v3263 = vmul.f32 %v3208, %v3244
        %v3264 = vmul.f32 %v3209, %v3244
        %v3265 = vmul.f32 %v3239, %v3244
        %v3266 = vmul.f32 %v3210, %v3244
        %v3267 = vmul.f32 %v3211, %v3244
        %v3268 = vmul.f32 %v3240, %v3244
        %v3293 = vrot.slane %v3245, 1
        %v3294 = vrot.slane %v3246, 1
        %v3295 = vsel %vm2149, %v3293, %v3294
        %v3296 = vrot.slane %v3247, 1
        %v3297 = vsel %vm2149, %v3294, %v3296
        %v3298 = vrot.slane %v3248, 1
        %v3299 = vrot.slane %v3249, 1
        %v3300 = vsel %vm2149, %v3298, %v3299
        %v3301 = vrot.slane %v3250, 1
        %v3302 = vsel %vm2149, %v3299, %v3301
        %v3303 = vrot.slane %v3251, 1
        %v3304 = vrot.slane %v3252, 1
        %v3305 = vsel %vm2149, %v3303, %v3304
        %v3306 = vrot.slane %v3253, 1
        %v3307 = vsel %vm2149, %v3304, %v3306
        %v3308 = vrot.slane %v3254, 1
        %v3309 = vrot.slane %v3255, 1
        %v3310 = vsel %vm2149, %v3308, %v3309
        %v3311 = vrot.slane %v3256, 1
        %v3312 = vsel %vm2149, %v3309, %v3311
        %v3313 = vrot.slane %v3257, 1
        %v3314 = vrot.slane %v3258, 1
        %v3315 = vsel %vm2149, %v3313, %v3314
        %v3316 = vrot.slane %v3259, 1
        %v3317 = vsel %vm2149, %v3314, %v3316
        %v3318 = vrot.slane %v3260, 1
        %v3319 = vrot.slane %v3261, 1
        %v3320 = vsel %vm2149, %v3318, %v3319
        %v3321 = vrot.slane %v3262, 1
        %v3322 = vsel %vm2149, %v3319, %v3321
        %v3323 = vrot.slane %v3263, 1
        %v3324 = vrot.slane %v3264, 1
        %v3325 = vsel %vm2149, %v3323, %v3324
        %v3326 = vrot.slane %v3265, 1
        %v3327 = vsel %vm2149, %v3324, %v3326
        %v3328 = vrot.slane %v3266, 1
        %v3329 = vrot.slane %v3267, 1
        %v3330 = vsel %vm2149, %v3328, %v3329
        %v3331 = vrot.slane %v3268, 1
        %v3332 = vsel %vm2149, %v3329, %v3331
        %v3349 = vadd.f32 %v3216, %v3295
        %v3350 = vadd.f32 %v3217, %v3297
        %v3351 = vadd.f32 %v3218, %v3300
        %v3352 = vadd.f32 %v3219, %v3302
        %v3353 = vadd.f32 %v3220, %v3305
        %v3354 = vadd.f32 %v3221, %v3307
        %v3355 = vadd.f32 %v3222, %v3310
        %v3356 = vadd.f32 %v3223, %v3312
        %v3357 = vadd.f32 %v3224, %v3315
        %v3358 = vadd.f32 %v3225, %v3317
        %v3359 = vadd.f32 %v3226, %v3320
        %v3360 = vadd.f32 %v3227, %v3322
        %v3361 = vadd.f32 %v3228, %v3325
        %v3362 = vadd.f32 %v3229, %v3327
        %v3363 = vadd.f32 %v3230, %v3330
        %v3364 = vadd.f32 %v3231, %v3332
        %v3365 = vld [vmem:[%s4 + $0xc] sm:$0x1]
        %v3366 = vlaneseq
        %v3367 = vshrl.u32 %v3366, 7
        %v3368 = vsub.s32 0, %v3367
        %v3369 = vrot.slane %v3365, %v3368
        %v3370 = vmul.f32 %v3196, %v3369
        %v3371 = vmul.f32 %v3197, %v3369
        %v3372 = vmul.f32 %v3233, %v3369
        %v3373 = vmul.f32 %v3198, %v3369
        %v3374 = vmul.f32 %v3199, %v3369
        %v3375 = vmul.f32 %v3234, %v3369
        %v3376 = vmul.f32 %v3200, %v3369
        %v3377 = vmul.f32 %v3201, %v3369
        %v3378 = vmul.f32 %v3235, %v3369
        %v3379 = vmul.f32 %v3202, %v3369
        %v3380 = vmul.f32 %v3203, %v3369
        %v3381 = vmul.f32 %v3236, %v3369
        %v3382 = vmul.f32 %v3204, %v3369
        %v3383 = vmul.f32 %v3205, %v3369
        %v3384 = vmul.f32 %v3237, %v3369
        %v3385 = vmul.f32 %v3206, %v3369
        %v3386 = vmul.f32 %v3207, %v3369
        %v3387 = vmul.f32 %v3238, %v3369
        %v3388 = vmul.f32 %v3208, %v3369
        %v3389 = vmul.f32 %v3209, %v3369
        %v3390 = vmul.f32 %v3239, %v3369
        %v3391 = vmul.f32 %v3210, %v3369
        %v3392 = vmul.f32 %v3211, %v3369
        %v3393 = vmul.f32 %v3240, %v3369
        %v3418 = vrot.slane %v3370, 2
        %v3419 = vrot.slane %v3371, 2
        %v3420 = vsel %vm2275, %v3418, %v3419
        %v3421 = vrot.slane %v3372, 2
        %v3422 = vsel %vm2275, %v3419, %v3421
        %v3423 = vrot.slane %v3373, 2
        %v3424 = vrot.slane %v3374, 2
        %v3425 = vsel %vm2275, %v3423, %v3424
        %v3426 = vrot.slane %v3375, 2
        %v3427 = vsel %vm2275, %v3424, %v3426
        %v3428 = vrot.slane %v3376, 2
        %v3429 = vrot.slane %v3377, 2
        %v3430 = vsel %vm2275, %v3428, %v3429
        %v3431 = vrot.slane %v3378, 2
        %v3432 = vsel %vm2275, %v3429, %v3431
        %v3433 = vrot.slane %v3379, 2
        %v3434 = vrot.slane %v3380, 2
        %v3435 = vsel %vm2275, %v3433, %v3434
        %v3436 = vrot.slane %v3381, 2
        %v3437 = vsel %vm2275, %v3434, %v3436
        %v3438 = vrot.slane %v3382, 2
        %v3439 = vrot.slane %v3383, 2
        %v3440 = vsel %vm2275, %v3438, %v3439
        %v3441 = vrot.slane %v3384, 2
        %v3442 = vsel %vm2275, %v3439, %v3441
        %v3443 = vrot.slane %v3385, 2
        %v3444 = vrot.slane %v3386, 2
        %v3445 = vsel %vm2275, %v3443, %v3444
        %v3446 = vrot.slane %v3387, 2
        %v3447 = vsel %vm2275, %v3444, %v3446
        %v3448 = vrot.slane %v3388, 2
        %v3449 = vrot.slane %v3389, 2
        %v3450 = vsel %vm2275, %v3448, %v3449
        %v3451 = vrot.slane %v3390, 2
        %v3452 = vsel %vm2275, %v3449, %v3451
        %v3453 = vrot.slane %v3391, 2
        %v3454 = vrot.slane %v3392, 2
        %v3455 = vsel %vm2275, %v3453, %v3454
        %v3456 = vrot.slane %v3393, 2
        %v3457 = vsel %vm2275, %v3454, %v3456
        %v3474 = vadd.f32 %v3349, %v3420
        %v3475 = vadd.f32 %v3350, %v3422
        %v3476 = vadd.f32 %v3351, %v3425
        %v3477 = vadd.f32 %v3352, %v3427
        %v3478 = vadd.f32 %v3353, %v3430
        %v3479 = vadd.f32 %v3354, %v3432
        %v3480 = vadd.f32 %v3355, %v3435
        %v3481 = vadd.f32 %v3356, %v3437
        %v3482 = vadd.f32 %v3357, %v3440
        %v3483 = vadd.f32 %v3358, %v3442
        %v3484 = vadd.f32 %v3359, %v3445
        %v3485 = vadd.f32 %v3360, %v3447
        %v3486 = vadd.f32 %v3361, %v3450
        %v3487 = vadd.f32 %v3362, %v3452
        %v3488 = vadd.f32 %v3363, %v3455
        %v3489 = vadd.f32 %v3364, %v3457
        %v3490 = vld [vmem:[%s4 + $0xd] sm:$0x1]
        %v3491 = vlaneseq
        %v3492 = vshrl.u32 %v3491, 7
        %v3493 = vsub.s32 0, %v3492
        %v3494 = vrot.slane %v3490, %v3493
        %v3495 = vmul.f32 %v3196, %v3494
        %v3496 = vmul.f32 %v3197, %v3494
        %v3497 = vmul.f32 %v3233, %v3494
        %v3498 = vmul.f32 %v3198, %v3494
        %v3499 = vmul.f32 %v3199, %v3494
        %v3500 = vmul.f32 %v3234, %v3494
        %v3501 = vmul.f32 %v3200, %v3494
        %v3502 = vmul.f32 %v3201, %v3494
        %v3503 = vmul.f32 %v3235, %v3494
        %v3504 = vmul.f32 %v3202, %v3494
        %v3505 = vmul.f32 %v3203, %v3494
        %v3506 = vmul.f32 %v3236, %v3494
        %v3507 = vmul.f32 %v3204, %v3494
        %v3508 = vmul.f32 %v3205, %v3494
        %v3509 = vmul.f32 %v3237, %v3494
        %v3510 = vmul.f32 %v3206, %v3494
        %v3511 = vmul.f32 %v3207, %v3494
        %v3512 = vmul.f32 %v3238, %v3494
        %v3513 = vmul.f32 %v3208, %v3494
        %v3514 = vmul.f32 %v3209, %v3494
        %v3515 = vmul.f32 %v3239, %v3494
        %v3516 = vmul.f32 %v3210, %v3494
        %v3517 = vmul.f32 %v3211, %v3494
        %v3518 = vmul.f32 %v3240, %v3494
        %v3543 = vrot.slane %v3495, 3
        %v3544 = vrot.slane %v3496, 3
        %v3545 = vsel %vm2401, %v3543, %v3544
        %v3546 = vrot.slane %v3497, 3
        %v3547 = vsel %vm2401, %v3544, %v3546
        %v3548 = vrot.slane %v3498, 3
        %v3549 = vrot.slane %v3499, 3
        %v3550 = vsel %vm2401, %v3548, %v3549
        %v3551 = vrot.slane %v3500, 3
        %v3552 = vsel %vm2401, %v3549, %v3551
        %v3553 = vrot.slane %v3501, 3
        %v3554 = vrot.slane %v3502, 3
        %v3555 = vsel %vm2401, %v3553, %v3554
        %v3556 = vrot.slane %v3503, 3
        %v3557 = vsel %vm2401, %v3554, %v3556
        %v3558 = vrot.slane %v3504, 3
        %v3559 = vrot.slane %v3505, 3
        %v3560 = vsel %vm2401, %v3558, %v3559
        %v3561 = vrot.slane %v3506, 3
        %v3562 = vsel %vm2401, %v3559, %v3561
        %v3563 = vrot.slane %v3507, 3
        %v3564 = vrot.slane %v3508, 3
        %v3565 = vsel %vm2401, %v3563, %v3564
        %v3566 = vrot.slane %v3509, 3
        %v3567 = vsel %vm2401, %v3564, %v3566
        %v3568 = vrot.slane %v3510, 3
        %v3569 = vrot.slane %v3511, 3
        %v3570 = vsel %vm2401, %v3568, %v3569
        %v3571 = vrot.slane %v3512, 3
        %v3572 = vsel %vm2401, %v3569, %v3571
        %v3573 = vrot.slane %v3513, 3
        %v3574 = vrot.slane %v3514, 3
        %v3575 = vsel %vm2401, %v3573, %v3574
        %v3576 = vrot.slane %v3515, 3
        %v3577 = vsel %vm2401, %v3574, %v3576
        %v3578 = vrot.slane %v3516, 3
        %v3579 = vrot.slane %v3517, 3
        %v3580 = vsel %vm2401, %v3578, %v3579
        %v3581 = vrot.slane %v3518, 3
        %v3582 = vsel %vm2401, %v3579, %v3581
        %v3599 = vadd.f32 %v3474, %v3545
        %v3600 = vadd.f32 %v3475, %v3547
        %v3601 = vadd.f32 %v3476, %v3550
        %v3602 = vadd.f32 %v3477, %v3552
        %v3603 = vadd.f32 %v3478, %v3555
        %v3604 = vadd.f32 %v3479, %v3557
        %v3605 = vadd.f32 %v3480, %v3560
        %v3606 = vadd.f32 %v3481, %v3562
        %v3607 = vadd.f32 %v3482, %v3565
        %v3608 = vadd.f32 %v3483, %v3567
        %v3609 = vadd.f32 %v3484, %v3570
        %v3610 = vadd.f32 %v3485, %v3572
        %v3611 = vadd.f32 %v3486, %v3575
        %v3612 = vadd.f32 %v3487, %v3577
        %v3613 = vadd.f32 %v3488, %v3580
        %v3614 = vadd.f32 %v3489, %v3582
        %v3615 = vld [vmem:[%s4 + $0xe] sm:$0x1]
        %v3616 = vlaneseq
        %v3617 = vshrl.u32 %v3616, 7
        %v3618 = vsub.s32 0, %v3617
        %v3619 = vrot.slane %v3615, %v3618
        %v3620 = vmul.f32 %v3196, %v3619
        %v3621 = vmul.f32 %v3197, %v3619
        %v3622 = vmul.f32 %v3233, %v3619
        %v3623 = vmul.f32 %v3198, %v3619
        %v3624 = vmul.f32 %v3199, %v3619
        %v3625 = vmul.f32 %v3234, %v3619
        %v3626 = vmul.f32 %v3200, %v3619
        %v3627 = vmul.f32 %v3201, %v3619
        %v3628 = vmul.f32 %v3235, %v3619
        %v3629 = vmul.f32 %v3202, %v3619
        %v3630 = vmul.f32 %v3203, %v3619
        %v3631 = vmul.f32 %v3236, %v3619
        %v3632 = vmul.f32 %v3204, %v3619
        %v3633 = vmul.f32 %v3205, %v3619
        %v3634 = vmul.f32 %v3237, %v3619
        %v3635 = vmul.f32 %v3206, %v3619
        %v3636 = vmul.f32 %v3207, %v3619
        %v3637 = vmul.f32 %v3238, %v3619
        %v3638 = vmul.f32 %v3208, %v3619
        %v3639 = vmul.f32 %v3209, %v3619
        %v3640 = vmul.f32 %v3239, %v3619
        %v3641 = vmul.f32 %v3210, %v3619
        %v3642 = vmul.f32 %v3211, %v3619
        %v3643 = vmul.f32 %v3240, %v3619
        %v3668 = vrot.slane %v3620, 4
        %v3669 = vrot.slane %v3621, 4
        %v3670 = vsel %vm2527, %v3668, %v3669
        %v3671 = vrot.slane %v3622, 4
        %v3672 = vsel %vm2527, %v3669, %v3671
        %v3673 = vrot.slane %v3623, 4
        %v3674 = vrot.slane %v3624, 4
        %v3675 = vsel %vm2527, %v3673, %v3674
        %v3676 = vrot.slane %v3625, 4
        %v3677 = vsel %vm2527, %v3674, %v3676
        %v3678 = vrot.slane %v3626, 4
        %v3679 = vrot.slane %v3627, 4
        %v3680 = vsel %vm2527, %v3678, %v3679
        %v3681 = vrot.slane %v3628, 4
        %v3682 = vsel %vm2527, %v3679, %v3681
        %v3683 = vrot.slane %v3629, 4
        %v3684 = vrot.slane %v3630, 4
        %v3685 = vsel %vm2527, %v3683, %v3684
        %v3686 = vrot.slane %v3631, 4
        %v3687 = vsel %vm2527, %v3684, %v3686
        %v3688 = vrot.slane %v3632, 4
        %v3689 = vrot.slane %v3633, 4
        %v3690 = vsel %vm2527, %v3688, %v3689
        %v3691 = vrot.slane %v3634, 4
        %v3692 = vsel %vm2527, %v3689, %v3691
        %v3693 = vrot.slane %v3635, 4
        %v3694 = vrot.slane %v3636, 4
        %v3695 = vsel %vm2527, %v3693, %v3694
        %v3696 = vrot.slane %v3637, 4
        %v3697 = vsel %vm2527, %v3694, %v3696
        %v3698 = vrot.slane %v3638, 4
        %v3699 = vrot.slane %v3639, 4
        %v3700 = vsel %vm2527, %v3698, %v3699
        %v3701 = vrot.slane %v3640, 4
        %v3702 = vsel %vm2527, %v3699, %v3701
        %v3703 = vrot.slane %v3641, 4
        %v3704 = vrot.slane %v3642, 4
        %v3705 = vsel %vm2527, %v3703, %v3704
        %v3706 = vrot.slane %v3643, 4
        %v3707 = vsel %vm2527, %v3704, %v3706
        %v3724 = vadd.f32 %v3599, %v3670
        %v3725 = vadd.f32 %v3600, %v3672
        %v3726 = vadd.f32 %v3601, %v3675
        %v3727 = vadd.f32 %v3602, %v3677
        %v3728 = vadd.f32 %v3603, %v3680
        %v3729 = vadd.f32 %v3604, %v3682
        %v3730 = vadd.f32 %v3605, %v3685
        %v3731 = vadd.f32 %v3606, %v3687
        %v3732 = vadd.f32 %v3607, %v3690
        %v3733 = vadd.f32 %v3608, %v3692
        %v3734 = vadd.f32 %v3609, %v3695
        %v3735 = vadd.f32 %v3610, %v3697
        %v3736 = vadd.f32 %v3611, %v3700
        %v3737 = vadd.f32 %v3612, %v3702
        %v3738 = vadd.f32 %v3613, %v3705
        %v3739 = vadd.f32 %v3614, %v3707
        %s3740 = scalar_lea.vmem [#allocation2], 36
        %v3741 = vld [vmem:[%s3740] sm:$0xf]
        %v3742 = vld [vmem:[%s3740 + $0x4] sm:$0xf]
        %v3743 = vld [vmem:[%s3740 + $0x8] sm:$0x3]
        %v3744 = vld [vmem:[%s3740 + $0xc] sm:$0xf]
        %v3745 = vld [vmem:[%s3740 + $0x10] sm:$0xf]
        %v3746 = vld [vmem:[%s3740 + $0x14] sm:$0x3]
        %v3747 = vld [vmem:[%s3740 + $0x18] sm:$0xf]
        %v3748 = vld [vmem:[%s3740 + $0x1c] sm:$0xf]
        %v3749 = vld [vmem:[%s3740 + $0x20] sm:$0x3]
        %v3750 = vld [vmem:[%s3740 + $0x24] sm:$0xf]
        %v3751 = vld [vmem:[%s3740 + $0x28] sm:$0xf]
        %v3752 = vld [vmem:[%s3740 + $0x2c] sm:$0x3]
        %v3753 = vld [vmem:[%s3740 + $0x30] sm:$0xf]
        %v3754 = vld [vmem:[%s3740 + $0x34] sm:$0xf]
        %v3755 = vld [vmem:[%s3740 + $0x38] sm:$0x3]
        %v3756 = vld [vmem:[%s3740 + $0x3c] sm:$0xf]
        %v3757 = vld [vmem:[%s3740 + $0x40] sm:$0xf]
        %v3758 = vld [vmem:[%s3740 + $0x44] sm:$0x3]
        %v3759 = vld [vmem:[%s3740 + $0x48] sm:$0xf]
        %v3760 = vld [vmem:[%s3740 + $0x4c] sm:$0xf]
        %v3761 = vld [vmem:[%s3740 + $0x50] sm:$0x3]
        %v3762 = vld [vmem:[%s3740 + $0x54] sm:$0xf]
        %v3763 = vld [vmem:[%s3740 + $0x58] sm:$0xf]
        %v3764 = vld [vmem:[%s3740 + $0x5c] sm:$0x3]
        %v3765 = vld [vmem:[%s4 + $0xf] sm:$0x1]
        %v3766 = vunpack.c.l.bf16 %v3741
        %v3767 = vunpack.c.l.bf16 %v3742
        %v3768 = vunpack.c.l.bf16 %v3744
        %v3769 = vunpack.c.l.bf16 %v3745
        %v3770 = vunpack.c.l.bf16 %v3747
        %v3771 = vunpack.c.l.bf16 %v3748
        %v3772 = vunpack.c.l.bf16 %v3750
        %v3773 = vunpack.c.l.bf16 %v3751
        %v3774 = vunpack.c.l.bf16 %v3753
        %v3775 = vunpack.c.l.bf16 %v3754
        %v3776 = vunpack.c.l.bf16 %v3756
        %v3777 = vunpack.c.l.bf16 %v3757
        %v3778 = vunpack.c.l.bf16 %v3759
        %v3779 = vunpack.c.l.bf16 %v3760
        %v3780 = vunpack.c.l.bf16 %v3762
        %v3781 = vunpack.c.l.bf16 %v3763
        %v3782 = vlaneseq
        %v3783 = vshrl.u32 %v3782, 7
        %v3784 = vsub.s32 0, %v3783
        %v3785 = vrot.slane %v3765, %v3784
        %v3786 = vmul.f32 %v3766, %v3785
        %v3787 = vmul.f32 %v3767, %v3785
        %v3788 = vmul.f32 %v3768, %v3785
        %v3789 = vmul.f32 %v3769, %v3785
        %v3790 = vmul.f32 %v3770, %v3785
        %v3791 = vmul.f32 %v3771, %v3785
        %v3792 = vmul.f32 %v3772, %v3785
        %v3793 = vmul.f32 %v3773, %v3785
        %v3794 = vmul.f32 %v3774, %v3785
        %v3795 = vmul.f32 %v3775, %v3785
        %v3796 = vmul.f32 %v3776, %v3785
        %v3797 = vmul.f32 %v3777, %v3785
        %v3798 = vmul.f32 %v3778, %v3785
        %v3799 = vmul.f32 %v3779, %v3785
        %v3800 = vmul.f32 %v3780, %v3785
        %v3801 = vmul.f32 %v3781, %v3785
        %v3802 = vld [vmem:[%s4 + $0x10] sm:$0x1]
        %v3803 = vunpack.c.l.bf16 %v3743
        %v3804 = vunpack.c.l.bf16 %v3746
        %v3805 = vunpack.c.l.bf16 %v3749
        %v3806 = vunpack.c.l.bf16 %v3752
        %v3807 = vunpack.c.l.bf16 %v3755
        %v3808 = vunpack.c.l.bf16 %v3758
        %v3809 = vunpack.c.l.bf16 %v3761
        %v3810 = vunpack.c.l.bf16 %v3764
        %v3811 = vlaneseq
        %v3812 = vshrl.u32 %v3811, 7
        %v3813 = vsub.s32 0, %v3812
        %v3814 = vrot.slane %v3802, %v3813
        %v3815 = vmul.f32 %v3766, %v3814
        %v3816 = vmul.f32 %v3767, %v3814
        %v3817 = vmul.f32 %v3803, %v3814
        %v3818 = vmul.f32 %v3768, %v3814
        %v3819 = vmul.f32 %v3769, %v3814
        %v3820 = vmul.f32 %v3804, %v3814
        %v3821 = vmul.f32 %v3770, %v3814
        %v3822 = vmul.f32 %v3771, %v3814
        %v3823 = vmul.f32 %v3805, %v3814
        %v3824 = vmul.f32 %v3772, %v3814
        %v3825 = vmul.f32 %v3773, %v3814
        %v3826 = vmul.f32 %v3806, %v3814
        %v3827 = vmul.f32 %v3774, %v3814
        %v3828 = vmul.f32 %v3775, %v3814
        %v3829 = vmul.f32 %v3807, %v3814
        %v3830 = vmul.f32 %v3776, %v3814
        %v3831 = vmul.f32 %v3777, %v3814
        %v3832 = vmul.f32 %v3808, %v3814
        %v3833 = vmul.f32 %v3778, %v3814
        %v3834 = vmul.f32 %v3779, %v3814
        %v3835 = vmul.f32 %v3809, %v3814
        %v3836 = vmul.f32 %v3780, %v3814
        %v3837 = vmul.f32 %v3781, %v3814
        %v3838 = vmul.f32 %v3810, %v3814
        %v3863 = vrot.slane %v3815, 1
        %v3864 = vrot.slane %v3816, 1
        %v3865 = vsel %vm2149, %v3863, %v3864
        %v3866 = vrot.slane %v3817, 1
        %v3867 = vsel %vm2149, %v3864, %v3866
        %v3868 = vrot.slane %v3818, 1
        %v3869 = vrot.slane %v3819, 1
        %v3870 = vsel %vm2149, %v3868, %v3869
        %v3871 = vrot.slane %v3820, 1
        %v3872 = vsel %vm2149, %v3869, %v3871
        %v3873 = vrot.slane %v3821, 1
        %v3874 = vrot.slane %v3822, 1
        %v3875 = vsel %vm2149, %v3873, %v3874
        %v3876 = vrot.slane %v3823, 1
        %v3877 = vsel %vm2149, %v3874, %v3876
        %v3878 = vrot.slane %v3824, 1
        %v3879 = vrot.slane %v3825, 1
        %v3880 = vsel %vm2149, %v3878, %v3879
        %v3881 = vrot.slane %v3826, 1
        %v3882 = vsel %vm2149, %v3879, %v3881
        %v3883 = vrot.slane %v3827, 1
        %v3884 = vrot.slane %v3828, 1
        %v3885 = vsel %vm2149, %v3883, %v3884
        %v3886 = vrot.slane %v3829, 1
        %v3887 = vsel %vm2149, %v3884, %v3886
        %v3888 = vrot.slane %v3830, 1
        %v3889 = vrot.slane %v3831, 1
        %v3890 = vsel %vm2149, %v3888, %v3889
        %v3891 = vrot.slane %v3832, 1
        %v3892 = vsel %vm2149, %v3889, %v3891
        %v3893 = vrot.slane %v3833, 1
        %v3894 = vrot.slane %v3834, 1
        %v3895 = vsel %vm2149, %v3893, %v3894
        %v3896 = vrot.slane %v3835, 1
        %v3897 = vsel %vm2149, %v3894, %v3896
        %v3898 = vrot.slane %v3836, 1
        %v3899 = vrot.slane %v3837, 1
        %v3900 = vsel %vm2149, %v3898, %v3899
        %v3901 = vrot.slane %v3838, 1
        %v3902 = vsel %vm2149, %v3899, %v3901
        %v3919 = vadd.f32 %v3786, %v3865
        %v3920 = vadd.f32 %v3787, %v3867
        %v3921 = vadd.f32 %v3788, %v3870
        %v3922 = vadd.f32 %v3789, %v3872
        %v3923 = vadd.f32 %v3790, %v3875
        %v3924 = vadd.f32 %v3791, %v3877
        %v3925 = vadd.f32 %v3792, %v3880
        %v3926 = vadd.f32 %v3793, %v3882
        %v3927 = vadd.f32 %v3794, %v3885
        %v3928 = vadd.f32 %v3795, %v3887
        %v3929 = vadd.f32 %v3796, %v3890
        %v3930 = vadd.f32 %v3797, %v3892
        %v3931 = vadd.f32 %v3798, %v3895
        %v3932 = vadd.f32 %v3799, %v3897
        %v3933 = vadd.f32 %v3800, %v3900
        %v3934 = vadd.f32 %v3801, %v3902
        %v3935 = vld [vmem:[%s4 + $0x11] sm:$0x1]
        %v3936 = vlaneseq
        %v3937 = vshrl.u32 %v3936, 7
        %v3938 = vsub.s32 0, %v3937
        %v3939 = vrot.slane %v3935, %v3938
        %v3940 = vmul.f32 %v3766, %v3939
        %v3941 = vmul.f32 %v3767, %v3939
        %v3942 = vmul.f32 %v3803, %v3939
        %v3943 = vmul.f32 %v3768, %v3939
        %v3944 = vmul.f32 %v3769, %v3939
        %v3945 = vmul.f32 %v3804, %v3939
        %v3946 = vmul.f32 %v3770, %v3939
        %v3947 = vmul.f32 %v3771, %v3939
        %v3948 = vmul.f32 %v3805, %v3939
        %v3949 = vmul.f32 %v3772, %v3939
        %v3950 = vmul.f32 %v3773, %v3939
        %v3951 = vmul.f32 %v3806, %v3939
        %v3952 = vmul.f32 %v3774, %v3939
        %v3953 = vmul.f32 %v3775, %v3939
        %v3954 = vmul.f32 %v3807, %v3939
        %v3955 = vmul.f32 %v3776, %v3939
        %v3956 = vmul.f32 %v3777, %v3939
        %v3957 = vmul.f32 %v3808, %v3939
        %v3958 = vmul.f32 %v3778, %v3939
        %v3959 = vmul.f32 %v3779, %v3939
        %v3960 = vmul.f32 %v3809, %v3939
        %v3961 = vmul.f32 %v3780, %v3939
        %v3962 = vmul.f32 %v3781, %v3939
        %v3963 = vmul.f32 %v3810, %v3939
        %v3988 = vrot.slane %v3940, 2
        %v3989 = vrot.slane %v3941, 2
        %v3990 = vsel %vm2275, %v3988, %v3989
        %v3991 = vrot.slane %v3942, 2
        %v3992 = vsel %vm2275, %v3989, %v3991
        %v3993 = vrot.slane %v3943, 2
        %v3994 = vrot.slane %v3944, 2
        %v3995 = vsel %vm2275, %v3993, %v3994
        %v3996 = vrot.slane %v3945, 2
        %v3997 = vsel %vm2275, %v3994, %v3996
        %v3998 = vrot.slane %v3946, 2
        %v3999 = vrot.slane %v3947, 2
        %v4000 = vsel %vm2275, %v3998, %v3999
        %v4001 = vrot.slane %v3948, 2
        %v4002 = vsel %vm2275, %v3999, %v4001
        %v4003 = vrot.slane %v3949, 2
        %v4004 = vrot.slane %v3950, 2
        %v4005 = vsel %vm2275, %v4003, %v4004
        %v4006 = vrot.slane %v3951, 2
        %v4007 = vsel %vm2275, %v4004, %v4006
        %v4008 = vrot.slane %v3952, 2
        %v4009 = vrot.slane %v3953, 2
        %v4010 = vsel %vm2275, %v4008, %v4009
        %v4011 = vrot.slane %v3954, 2
        %v4012 = vsel %vm2275, %v4009, %v4011
        %v4013 = vrot.slane %v3955, 2
        %v4014 = vrot.slane %v3956, 2
        %v4015 = vsel %vm2275, %v4013, %v4014
        %v4016 = vrot.slane %v3957, 2
        %v4017 = vsel %vm2275, %v4014, %v4016
        %v4018 = vrot.slane %v3958, 2
        %v4019 = vrot.slane %v3959, 2
        %v4020 = vsel %vm2275, %v4018, %v4019
        %v4021 = vrot.slane %v3960, 2
        %v4022 = vsel %vm2275, %v4019, %v4021
        %v4023 = vrot.slane %v3961, 2
        %v4024 = vrot.slane %v3962, 2
        %v4025 = vsel %vm2275, %v4023, %v4024
        %v4026 = vrot.slane %v3963, 2
        %v4027 = vsel %vm2275, %v4024, %v4026
        %v4044 = vadd.f32 %v3919, %v3990
        %v4045 = vadd.f32 %v3920, %v3992
        %v4046 = vadd.f32 %v3921, %v3995
        %v4047 = vadd.f32 %v3922, %v3997
        %v4048 = vadd.f32 %v3923, %v4000
        %v4049 = vadd.f32 %v3924, %v4002
        %v4050 = vadd.f32 %v3925, %v4005
        %v4051 = vadd.f32 %v3926, %v4007
        %v4052 = vadd.f32 %v3927, %v4010
        %v4053 = vadd.f32 %v3928, %v4012
        %v4054 = vadd.f32 %v3929, %v4015
        %v4055 = vadd.f32 %v3930, %v4017
        %v4056 = vadd.f32 %v3931, %v4020
        %v4057 = vadd.f32 %v3932, %v4022
        %v4058 = vadd.f32 %v3933, %v4025
        %v4059 = vadd.f32 %v3934, %v4027
        %v4060 = vld [vmem:[%s4 + $0x12] sm:$0x1]
        %v4061 = vlaneseq
        %v4062 = vshrl.u32 %v4061, 7
        %v4063 = vsub.s32 0, %v4062
        %v4064 = vrot.slane %v4060, %v4063
        %v4065 = vmul.f32 %v3766, %v4064
        %v4066 = vmul.f32 %v3767, %v4064
        %v4067 = vmul.f32 %v3803, %v4064
        %v4068 = vmul.f32 %v3768, %v4064
        %v4069 = vmul.f32 %v3769, %v4064
        %v4070 = vmul.f32 %v3804, %v4064
        %v4071 = vmul.f32 %v3770, %v4064
        %v4072 = vmul.f32 %v3771, %v4064
        %v4073 = vmul.f32 %v3805, %v4064
        %v4074 = vmul.f32 %v3772, %v4064
        %v4075 = vmul.f32 %v3773, %v4064
        %v4076 = vmul.f32 %v3806, %v4064
        %v4077 = vmul.f32 %v3774, %v4064
        %v4078 = vmul.f32 %v3775, %v4064
        %v4079 = vmul.f32 %v3807, %v4064
        %v4080 = vmul.f32 %v3776, %v4064
        %v4081 = vmul.f32 %v3777, %v4064
        %v4082 = vmul.f32 %v3808, %v4064
        %v4083 = vmul.f32 %v3778, %v4064
        %v4084 = vmul.f32 %v3779, %v4064
        %v4085 = vmul.f32 %v3809, %v4064
        %v4086 = vmul.f32 %v3780, %v4064
        %v4087 = vmul.f32 %v3781, %v4064
        %v4088 = vmul.f32 %v3810, %v4064
        %v4113 = vrot.slane %v4065, 3
        %v4114 = vrot.slane %v4066, 3
        %v4115 = vsel %vm2401, %v4113, %v4114
        %v4116 = vrot.slane %v4067, 3
        %v4117 = vsel %vm2401, %v4114, %v4116
        %v4118 = vrot.slane %v4068, 3
        %v4119 = vrot.slane %v4069, 3
        %v4120 = vsel %vm2401, %v4118, %v4119
        %v4121 = vrot.slane %v4070, 3
        %v4122 = vsel %vm2401, %v4119, %v4121
        %v4123 = vrot.slane %v4071, 3
        %v4124 = vrot.slane %v4072, 3
        %v4125 = vsel %vm2401, %v4123, %v4124
        %v4126 = vrot.slane %v4073, 3
        %v4127 = vsel %vm2401, %v4124, %v4126
        %v4128 = vrot.slane %v4074, 3
        %v4129 = vrot.slane %v4075, 3
        %v4130 = vsel %vm2401, %v4128, %v4129
        %v4131 = vrot.slane %v4076, 3
        %v4132 = vsel %vm2401, %v4129, %v4131
        %v4133 = vrot.slane %v4077, 3
        %v4134 = vrot.slane %v4078, 3
        %v4135 = vsel %vm2401, %v4133, %v4134
        %v4136 = vrot.slane %v4079, 3
        %v4137 = vsel %vm2401, %v4134, %v4136
        %v4138 = vrot.slane %v4080, 3
        %v4139 = vrot.slane %v4081, 3
        %v4140 = vsel %vm2401, %v4138, %v4139
        %v4141 = vrot.slane %v4082, 3
        %v4142 = vsel %vm2401, %v4139, %v4141
        %v4143 = vrot.slane %v4083, 3
        %v4144 = vrot.slane %v4084, 3
        %v4145 = vsel %vm2401, %v4143, %v4144
        %v4146 = vrot.slane %v4085, 3
        %v4147 = vsel %vm2401, %v4144, %v4146
        %v4148 = vrot.slane %v4086, 3
        %v4149 = vrot.slane %v4087, 3
        %v4150 = vsel %vm2401, %v4148, %v4149
        %v4151 = vrot.slane %v4088, 3
        %v4152 = vsel %vm2401, %v4149, %v4151
        %v4169 = vadd.f32 %v4044, %v4115
        %v4170 = vadd.f32 %v4045, %v4117
        %v4171 = vadd.f32 %v4046, %v4120
        %v4172 = vadd.f32 %v4047, %v4122
        %v4173 = vadd.f32 %v4048, %v4125
        %v4174 = vadd.f32 %v4049, %v4127
        %v4175 = vadd.f32 %v4050, %v4130
        %v4176 = vadd.f32 %v4051, %v4132
        %v4177 = vadd.f32 %v4052, %v4135
        %v4178 = vadd.f32 %v4053, %v4137
        %v4179 = vadd.f32 %v4054, %v4140
        %v4180 = vadd.f32 %v4055, %v4142
        %v4181 = vadd.f32 %v4056, %v4145
        %v4182 = vadd.f32 %v4057, %v4147
        %v4183 = vadd.f32 %v4058, %v4150
        %v4184 = vadd.f32 %v4059, %v4152
        %v4185 = vld [vmem:[%s4 + $0x13] sm:$0x1]
        %v4186 = vlaneseq
        %v4187 = vshrl.u32 %v4186, 7
        %v4188 = vsub.s32 0, %v4187
        %v4189 = vrot.slane %v4185, %v4188
        %v4190 = vmul.f32 %v3766, %v4189
        %v4191 = vmul.f32 %v3767, %v4189
        %v4192 = vmul.f32 %v3803, %v4189
        %v4193 = vmul.f32 %v3768, %v4189
        %v4194 = vmul.f32 %v3769, %v4189
        %v4195 = vmul.f32 %v3804, %v4189
        %v4196 = vmul.f32 %v3770, %v4189
        %v4197 = vmul.f32 %v3771, %v4189
        %v4198 = vmul.f32 %v3805, %v4189
        %v4199 = vmul.f32 %v3772, %v4189
        %v4200 = vmul.f32 %v3773, %v4189
        %v4201 = vmul.f32 %v3806, %v4189
        %v4202 = vmul.f32 %v3774, %v4189
        %v4203 = vmul.f32 %v3775, %v4189
        %v4204 = vmul.f32 %v3807, %v4189
        %v4205 = vmul.f32 %v3776, %v4189
        %v4206 = vmul.f32 %v3777, %v4189
        %v4207 = vmul.f32 %v3808, %v4189
        %v4208 = vmul.f32 %v3778, %v4189
        %v4209 = vmul.f32 %v3779, %v4189
        %v4210 = vmul.f32 %v3809, %v4189
        %v4211 = vmul.f32 %v3780, %v4189
        %v4212 = vmul.f32 %v3781, %v4189
        %v4213 = vmul.f32 %v3810, %v4189
        %v4238 = vrot.slane %v4190, 4
        %v4239 = vrot.slane %v4191, 4
        %v4240 = vsel %vm2527, %v4238, %v4239
        %v4241 = vrot.slane %v4192, 4
        %v4242 = vsel %vm2527, %v4239, %v4241
        %v4243 = vrot.slane %v4193, 4
        %v4244 = vrot.slane %v4194, 4
        %v4245 = vsel %vm2527, %v4243, %v4244
        %v4246 = vrot.slane %v4195, 4
        %v4247 = vsel %vm2527, %v4244, %v4246
        %v4248 = vrot.slane %v4196, 4
        %v4249 = vrot.slane %v4197, 4
        %v4250 = vsel %vm2527, %v4248, %v4249
        %v4251 = vrot.slane %v4198, 4
        %v4252 = vsel %vm2527, %v4249, %v4251
        %v4253 = vrot.slane %v4199, 4
        %v4254 = vrot.slane %v4200, 4
        %v4255 = vsel %vm2527, %v4253, %v4254
        %v4256 = vrot.slane %v4201, 4
        %v4257 = vsel %vm2527, %v4254, %v4256
        %v4258 = vrot.slane %v4202, 4
        %v4259 = vrot.slane %v4203, 4
        %v4260 = vsel %vm2527, %v4258, %v4259
        %v4261 = vrot.slane %v4204, 4
        %v4262 = vsel %vm2527, %v4259, %v4261
        %v4263 = vrot.slane %v4205, 4
        %v4264 = vrot.slane %v4206, 4
        %v4265 = vsel %vm2527, %v4263, %v4264
        %v4266 = vrot.slane %v4207, 4
        %v4267 = vsel %vm2527, %v4264, %v4266
        %v4268 = vrot.slane %v4208, 4
        %v4269 = vrot.slane %v4209, 4
        %v4270 = vsel %vm2527, %v4268, %v4269
        %v4271 = vrot.slane %v4210, 4
        %v4272 = vsel %vm2527, %v4269, %v4271
        %v4273 = vrot.slane %v4211, 4
        %v4274 = vrot.slane %v4212, 4
        %v4275 = vsel %vm2527, %v4273, %v4274
        %v4276 = vrot.slane %v4213, 4
        %v4277 = vsel %vm2527, %v4274, %v4276
        %v4294 = vadd.f32 %v4169, %v4240
        %v4295 = vadd.f32 %v4170, %v4242
        %v4296 = vadd.f32 %v4171, %v4245
        %v4297 = vadd.f32 %v4172, %v4247
        %v4298 = vadd.f32 %v4173, %v4250
        %v4299 = vadd.f32 %v4174, %v4252
        %v4300 = vadd.f32 %v4175, %v4255
        %v4301 = vadd.f32 %v4176, %v4257
        %v4302 = vadd.f32 %v4177, %v4260
        %v4303 = vadd.f32 %v4178, %v4262
        %v4304 = vadd.f32 %v4179, %v4265
        %v4305 = vadd.f32 %v4180, %v4267
        %v4306 = vadd.f32 %v4181, %v4270
        %v4307 = vadd.f32 %v4182, %v4272
        %v4308 = vadd.f32 %v4183, %v4275
        %v4309 = vadd.f32 %v4184, %v4277
        %s4310 = scalar_lea.vmem [#allocation2], 48
        %v4311 = vld [vmem:[%s4310] sm:$0xf]
        %v4312 = vld [vmem:[%s4310 + $0x4] sm:$0xf]
        %v4313 = vld [vmem:[%s4310 + $0x8] sm:$0x3]
        %v4314 = vld [vmem:[%s4310 + $0xc] sm:$0xf]
        %v4315 = vld [vmem:[%s4310 + $0x10] sm:$0xf]
        %v4316 = vld [vmem:[%s4310 + $0x14] sm:$0x3]
        %v4317 = vld [vmem:[%s4310 + $0x18] sm:$0xf]
        %v4318 = vld [vmem:[%s4310 + $0x1c] sm:$0xf]
        %v4319 = vld [vmem:[%s4310 + $0x20] sm:$0x3]
        %v4320 = vld [vmem:[%s4310 + $0x24] sm:$0xf]
        %v4321 = vld [vmem:[%s4310 + $0x28] sm:$0xf]
        %v4322 = vld [vmem:[%s4310 + $0x2c] sm:$0x3]
        %v4323 = vld [vmem:[%s4310 + $0x30] sm:$0xf]
        %v4324 = vld [vmem:[%s4310 + $0x34] sm:$0xf]
        %v4325 = vld [vmem:[%s4310 + $0x38] sm:$0x3]
        %v4326 = vld [vmem:[%s4310 + $0x3c] sm:$0xf]
        %v4327 = vld [vmem:[%s4310 + $0x40] sm:$0xf]
        %v4328 = vld [vmem:[%s4310 + $0x44] sm:$0x3]
        %v4329 = vld [vmem:[%s4310 + $0x48] sm:$0xf]
        %v4330 = vld [vmem:[%s4310 + $0x4c] sm:$0xf]
        %v4331 = vld [vmem:[%s4310 + $0x50] sm:$0x3]
        %v4332 = vld [vmem:[%s4310 + $0x54] sm:$0xf]
        %v4333 = vld [vmem:[%s4310 + $0x58] sm:$0xf]
        %v4334 = vld [vmem:[%s4310 + $0x5c] sm:$0x3]
        %v4335 = vld [vmem:[%s4 + $0x14] sm:$0x1]
        %v4336 = vunpack.c.l.bf16 %v4311
        %v4337 = vunpack.c.l.bf16 %v4312
        %v4338 = vunpack.c.l.bf16 %v4314
        %v4339 = vunpack.c.l.bf16 %v4315
        %v4340 = vunpack.c.l.bf16 %v4317
        %v4341 = vunpack.c.l.bf16 %v4318
        %v4342 = vunpack.c.l.bf16 %v4320
        %v4343 = vunpack.c.l.bf16 %v4321
        %v4344 = vunpack.c.l.bf16 %v4323
        %v4345 = vunpack.c.l.bf16 %v4324
        %v4346 = vunpack.c.l.bf16 %v4326
        %v4347 = vunpack.c.l.bf16 %v4327
        %v4348 = vunpack.c.l.bf16 %v4329
        %v4349 = vunpack.c.l.bf16 %v4330
        %v4350 = vunpack.c.l.bf16 %v4332
        %v4351 = vunpack.c.l.bf16 %v4333
        %v4352 = vlaneseq
        %v4353 = vshrl.u32 %v4352, 7
        %v4354 = vsub.s32 0, %v4353
        %v4355 = vrot.slane %v4335, %v4354
        %v4356 = vmul.f32 %v4336, %v4355
        %v4357 = vmul.f32 %v4337, %v4355
        %v4358 = vmul.f32 %v4338, %v4355
        %v4359 = vmul.f32 %v4339, %v4355
        %v4360 = vmul.f32 %v4340, %v4355
        %v4361 = vmul.f32 %v4341, %v4355
        %v4362 = vmul.f32 %v4342, %v4355
        %v4363 = vmul.f32 %v4343, %v4355
        %v4364 = vmul.f32 %v4344, %v4355
        %v4365 = vmul.f32 %v4345, %v4355
        %v4366 = vmul.f32 %v4346, %v4355
        %v4367 = vmul.f32 %v4347, %v4355
        %v4368 = vmul.f32 %v4348, %v4355
        %v4369 = vmul.f32 %v4349, %v4355
        %v4370 = vmul.f32 %v4350, %v4355
        %v4371 = vmul.f32 %v4351, %v4355
        %v4372 = vld [vmem:[%s4 + $0x15] sm:$0x1]
        %v4373 = vunpack.c.l.bf16 %v4313
        %v4374 = vunpack.c.l.bf16 %v4316
        %v4375 = vunpack.c.l.bf16 %v4319
        %v4376 = vunpack.c.l.bf16 %v4322
        %v4377 = vunpack.c.l.bf16 %v4325
        %v4378 = vunpack.c.l.bf16 %v4328
        %v4379 = vunpack.c.l.bf16 %v4331
        %v4380 = vunpack.c.l.bf16 %v4334
        %v4381 = vlaneseq
        %v4382 = vshrl.u32 %v4381, 7
        %v4383 = vsub.s32 0, %v4382
        %v4384 = vrot.slane %v4372, %v4383
        %v4385 = vmul.f32 %v4336, %v4384
        %v4386 = vmul.f32 %v4337, %v4384
        %v4387 = vmul.f32 %v4373, %v4384
        %v4388 = vmul.f32 %v4338, %v4384
        %v4389 = vmul.f32 %v4339, %v4384
        %v4390 = vmul.f32 %v4374, %v4384
        %v4391 = vmul.f32 %v4340, %v4384
        %v4392 = vmul.f32 %v4341, %v4384
        %v4393 = vmul.f32 %v4375, %v4384
        %v4394 = vmul.f32 %v4342, %v4384
        %v4395 = vmul.f32 %v4343, %v4384
        %v4396 = vmul.f32 %v4376, %v4384
        %v4397 = vmul.f32 %v4344, %v4384
        %v4398 = vmul.f32 %v4345, %v4384
        %v4399 = vmul.f32 %v4377, %v4384
        %v4400 = vmul.f32 %v4346, %v4384
        %v4401 = vmul.f32 %v4347, %v4384
        %v4402 = vmul.f32 %v4378, %v4384
        %v4403 = vmul.f32 %v4348, %v4384
        %v4404 = vmul.f32 %v4349, %v4384
        %v4405 = vmul.f32 %v4379, %v4384
        %v4406 = vmul.f32 %v4350, %v4384
        %v4407 = vmul.f32 %v4351, %v4384
        %v4408 = vmul.f32 %v4380, %v4384
        %v4433 = vrot.slane %v4385, 1
        %v4434 = vrot.slane %v4386, 1
        %v4435 = vsel %vm2149, %v4433, %v4434
        %v4436 = vrot.slane %v4387, 1
        %v4437 = vsel %vm2149, %v4434, %v4436
        %v4438 = vrot.slane %v4388, 1
        %v4439 = vrot.slane %v4389, 1
        %v4440 = vsel %vm2149, %v4438, %v4439
        %v4441 = vrot.slane %v4390, 1
        %v4442 = vsel %vm2149, %v4439, %v4441
        %v4443 = vrot.slane %v4391, 1
        %v4444 = vrot.slane %v4392, 1
        %v4445 = vsel %vm2149, %v4443, %v4444
        %v4446 = vrot.slane %v4393, 1
        %v4447 = vsel %vm2149, %v4444, %v4446
        %v4448 = vrot.slane %v4394, 1
        %v4449 = vrot.slane %v4395, 1
        %v4450 = vsel %vm2149, %v4448, %v4449
        %v4451 = vrot.slane %v4396, 1
        %v4452 = vsel %vm2149, %v4449, %v4451
        %v4453 = vrot.slane %v4397, 1
        %v4454 = vrot.slane %v4398, 1
        %v4455 = vsel %vm2149, %v4453, %v4454
        %v4456 = vrot.slane %v4399, 1
        %v4457 = vsel %vm2149, %v4454, %v4456
        %v4458 = vrot.slane %v4400, 1
        %v4459 = vrot.slane %v4401, 1
        %v4460 = vsel %vm2149, %v4458, %v4459
        %v4461 = vrot.slane %v4402, 1
        %v4462 = vsel %vm2149, %v4459, %v4461
        %v4463 = vrot.slane %v4403, 1
        %v4464 = vrot.slane %v4404, 1
        %v4465 = vsel %vm2149, %v4463, %v4464
        %v4466 = vrot.slane %v4405, 1
        %v4467 = vsel %vm2149, %v4464, %v4466
        %v4468 = vrot.slane %v4406, 1
        %v4469 = vrot.slane %v4407, 1
        %v4470 = vsel %vm2149, %v4468, %v4469
        %v4471 = vrot.slane %v4408, 1
        %v4472 = vsel %vm2149, %v4469, %v4471
        %v4489 = vadd.f32 %v4356, %v4435
        %v4490 = vadd.f32 %v4357, %v4437
        %v4491 = vadd.f32 %v4358, %v4440
        %v4492 = vadd.f32 %v4359, %v4442
        %v4493 = vadd.f32 %v4360, %v4445
        %v4494 = vadd.f32 %v4361, %v4447
        %v4495 = vadd.f32 %v4362, %v4450
        %v4496 = vadd.f32 %v4363, %v4452
        %v4497 = vadd.f32 %v4364, %v4455
        %v4498 = vadd.f32 %v4365, %v4457
        %v4499 = vadd.f32 %v4366, %v4460
        %v4500 = vadd.f32 %v4367, %v4462
        %v4501 = vadd.f32 %v4368, %v4465
        %v4502 = vadd.f32 %v4369, %v4467
        %v4503 = vadd.f32 %v4370, %v4470
        %v4504 = vadd.f32 %v4371, %v4472
        %v4505 = vld [vmem:[%s4 + $0x16] sm:$0x1]
        %v4506 = vlaneseq
        %v4507 = vshrl.u32 %v4506, 7
        %v4508 = vsub.s32 0, %v4507
        %v4509 = vrot.slane %v4505, %v4508
        %v4510 = vmul.f32 %v4336, %v4509
        %v4511 = vmul.f32 %v4337, %v4509
        %v4512 = vmul.f32 %v4373, %v4509
        %v4513 = vmul.f32 %v4338, %v4509
        %v4514 = vmul.f32 %v4339, %v4509
        %v4515 = vmul.f32 %v4374, %v4509
        %v4516 = vmul.f32 %v4340, %v4509
        %v4517 = vmul.f32 %v4341, %v4509
        %v4518 = vmul.f32 %v4375, %v4509
        %v4519 = vmul.f32 %v4342, %v4509
        %v4520 = vmul.f32 %v4343, %v4509
        %v4521 = vmul.f32 %v4376, %v4509
        %v4522 = vmul.f32 %v4344, %v4509
        %v4523 = vmul.f32 %v4345, %v4509
        %v4524 = vmul.f32 %v4377, %v4509
        %v4525 = vmul.f32 %v4346, %v4509
        %v4526 = vmul.f32 %v4347, %v4509
        %v4527 = vmul.f32 %v4378, %v4509
        %v4528 = vmul.f32 %v4348, %v4509
        %v4529 = vmul.f32 %v4349, %v4509
        %v4530 = vmul.f32 %v4379, %v4509
        %v4531 = vmul.f32 %v4350, %v4509
        %v4532 = vmul.f32 %v4351, %v4509
        %v4533 = vmul.f32 %v4380, %v4509
        %v4558 = vrot.slane %v4510, 2
        %v4559 = vrot.slane %v4511, 2
        %v4560 = vsel %vm2275, %v4558, %v4559
        %v4561 = vrot.slane %v4512, 2
        %v4562 = vsel %vm2275, %v4559, %v4561
        %v4563 = vrot.slane %v4513, 2
        %v4564 = vrot.slane %v4514, 2
        %v4565 = vsel %vm2275, %v4563, %v4564
        %v4566 = vrot.slane %v4515, 2
        %v4567 = vsel %vm2275, %v4564, %v4566
        %v4568 = vrot.slane %v4516, 2
        %v4569 = vrot.slane %v4517, 2
        %v4570 = vsel %vm2275, %v4568, %v4569
        %v4571 = vrot.slane %v4518, 2
        %v4572 = vsel %vm2275, %v4569, %v4571
        %v4573 = vrot.slane %v4519, 2
        %v4574 = vrot.slane %v4520, 2
        %v4575 = vsel %vm2275, %v4573, %v4574
        %v4576 = vrot.slane %v4521, 2
        %v4577 = vsel %vm2275, %v4574, %v4576
        %v4578 = vrot.slane %v4522, 2
        %v4579 = vrot.slane %v4523, 2
        %v4580 = vsel %vm2275, %v4578, %v4579
        %v4581 = vrot.slane %v4524, 2
        %v4582 = vsel %vm2275, %v4579, %v4581
        %v4583 = vrot.slane %v4525, 2
        %v4584 = vrot.slane %v4526, 2
        %v4585 = vsel %vm2275, %v4583, %v4584
        %v4586 = vrot.slane %v4527, 2
        %v4587 = vsel %vm2275, %v4584, %v4586
        %v4588 = vrot.slane %v4528, 2
        %v4589 = vrot.slane %v4529, 2
        %v4590 = vsel %vm2275, %v4588, %v4589
        %v4591 = vrot.slane %v4530, 2
        %v4592 = vsel %vm2275, %v4589, %v4591
        %v4593 = vrot.slane %v4531, 2
        %v4594 = vrot.slane %v4532, 2
        %v4595 = vsel %vm2275, %v4593, %v4594
        %v4596 = vrot.slane %v4533, 2
        %v4597 = vsel %vm2275, %v4594, %v4596
        %v4614 = vadd.f32 %v4489, %v4560
        %v4615 = vadd.f32 %v4490, %v4562
        %v4616 = vadd.f32 %v4491, %v4565
        %v4617 = vadd.f32 %v4492, %v4567
        %v4618 = vadd.f32 %v4493, %v4570
        %v4619 = vadd.f32 %v4494, %v4572
        %v4620 = vadd.f32 %v4495, %v4575
        %v4621 = vadd.f32 %v4496, %v4577
        %v4622 = vadd.f32 %v4497, %v4580
        %v4623 = vadd.f32 %v4498, %v4582
        %v4624 = vadd.f32 %v4499, %v4585
        %v4625 = vadd.f32 %v4500, %v4587
        %v4626 = vadd.f32 %v4501, %v4590
        %v4627 = vadd.f32 %v4502, %v4592
        %v4628 = vadd.f32 %v4503, %v4595
        %v4629 = vadd.f32 %v4504, %v4597
        %v4630 = vld [vmem:[%s4 + $0x17] sm:$0x1]
        %v4631 = vlaneseq
        %v4632 = vshrl.u32 %v4631, 7
        %v4633 = vsub.s32 0, %v4632
        %v4634 = vrot.slane %v4630, %v4633
        %v4635 = vmul.f32 %v4336, %v4634
        %v4636 = vmul.f32 %v4337, %v4634
        %v4637 = vmul.f32 %v4373, %v4634
        %v4638 = vmul.f32 %v4338, %v4634
        %v4639 = vmul.f32 %v4339, %v4634
        %v4640 = vmul.f32 %v4374, %v4634
        %v4641 = vmul.f32 %v4340, %v4634
        %v4642 = vmul.f32 %v4341, %v4634
        %v4643 = vmul.f32 %v4375, %v4634
        %v4644 = vmul.f32 %v4342, %v4634
        %v4645 = vmul.f32 %v4343, %v4634
        %v4646 = vmul.f32 %v4376, %v4634
        %v4647 = vmul.f32 %v4344, %v4634
        %v4648 = vmul.f32 %v4345, %v4634
        %v4649 = vmul.f32 %v4377, %v4634
        %v4650 = vmul.f32 %v4346, %v4634
        %v4651 = vmul.f32 %v4347, %v4634
        %v4652 = vmul.f32 %v4378, %v4634
        %v4653 = vmul.f32 %v4348, %v4634
        %v4654 = vmul.f32 %v4349, %v4634
        %v4655 = vmul.f32 %v4379, %v4634
        %v4656 = vmul.f32 %v4350, %v4634
        %v4657 = vmul.f32 %v4351, %v4634
        %v4658 = vmul.f32 %v4380, %v4634
        %v4683 = vrot.slane %v4635, 3
        %v4684 = vrot.slane %v4636, 3
        %v4685 = vsel %vm2401, %v4683, %v4684
        %v4686 = vrot.slane %v4637, 3
        %v4687 = vsel %vm2401, %v4684, %v4686
        %v4688 = vrot.slane %v4638, 3
        %v4689 = vrot.slane %v4639, 3
        %v4690 = vsel %vm2401, %v4688, %v4689
        %v4691 = vrot.slane %v4640, 3
        %v4692 = vsel %vm2401, %v4689, %v4691
        %v4693 = vrot.slane %v4641, 3
        %v4694 = vrot.slane %v4642, 3
        %v4695 = vsel %vm2401, %v4693, %v4694
        %v4696 = vrot.slane %v4643, 3
        %v4697 = vsel %vm2401, %v4694, %v4696
        %v4698 = vrot.slane %v4644, 3
        %v4699 = vrot.slane %v4645, 3
        %v4700 = vsel %vm2401, %v4698, %v4699
        %v4701 = vrot.slane %v4646, 3
        %v4702 = vsel %vm2401, %v4699, %v4701
        %v4703 = vrot.slane %v4647, 3
        %v4704 = vrot.slane %v4648, 3
        %v4705 = vsel %vm2401, %v4703, %v4704
        %v4706 = vrot.slane %v4649, 3
        %v4707 = vsel %vm2401, %v4704, %v4706
        %v4708 = vrot.slane %v4650, 3
        %v4709 = vrot.slane %v4651, 3
        %v4710 = vsel %vm2401, %v4708, %v4709
        %v4711 = vrot.slane %v4652, 3
        %v4712 = vsel %vm2401, %v4709, %v4711
        %v4713 = vrot.slane %v4653, 3
        %v4714 = vrot.slane %v4654, 3
        %v4715 = vsel %vm2401, %v4713, %v4714
        %v4716 = vrot.slane %v4655, 3
        %v4717 = vsel %vm2401, %v4714, %v4716
        %v4718 = vrot.slane %v4656, 3
        %v4719 = vrot.slane %v4657, 3
        %v4720 = vsel %vm2401, %v4718, %v4719
        %v4721 = vrot.slane %v4658, 3
        %v4722 = vsel %vm2401, %v4719, %v4721
        %v4739 = vadd.f32 %v4614, %v4685
        %v4740 = vadd.f32 %v4615, %v4687
        %v4741 = vadd.f32 %v4616, %v4690
        %v4742 = vadd.f32 %v4617, %v4692
        %v4743 = vadd.f32 %v4618, %v4695
        %v4744 = vadd.f32 %v4619, %v4697
        %v4745 = vadd.f32 %v4620, %v4700
        %v4746 = vadd.f32 %v4621, %v4702
        %v4747 = vadd.f32 %v4622, %v4705
        %v4748 = vadd.f32 %v4623, %v4707
        %v4749 = vadd.f32 %v4624, %v4710
        %v4750 = vadd.f32 %v4625, %v4712
        %v4751 = vadd.f32 %v4626, %v4715
        %v4752 = vadd.f32 %v4627, %v4717
        %v4753 = vadd.f32 %v4628, %v4720
        %v4754 = vadd.f32 %v4629, %v4722
        %v4755 = vld [vmem:[%s4 + $0x18] sm:$0x1]
        %v4756 = vlaneseq
        %v4757 = vshrl.u32 %v4756, 7
        %v4758 = vsub.s32 0, %v4757
        %v4759 = vrot.slane %v4755, %v4758
        %v4760 = vmul.f32 %v4336, %v4759
        %v4761 = vmul.f32 %v4337, %v4759
        %v4762 = vmul.f32 %v4373, %v4759
        %v4763 = vmul.f32 %v4338, %v4759
        %v4764 = vmul.f32 %v4339, %v4759
        %v4765 = vmul.f32 %v4374, %v4759
        %v4766 = vmul.f32 %v4340, %v4759
        %v4767 = vmul.f32 %v4341, %v4759
        %v4768 = vmul.f32 %v4375, %v4759
        %v4769 = vmul.f32 %v4342, %v4759
        %v4770 = vmul.f32 %v4343, %v4759
        %v4771 = vmul.f32 %v4376, %v4759
        %v4772 = vmul.f32 %v4344, %v4759
        %v4773 = vmul.f32 %v4345, %v4759
        %v4774 = vmul.f32 %v4377, %v4759
        %v4775 = vmul.f32 %v4346, %v4759
        %v4776 = vmul.f32 %v4347, %v4759
        %v4777 = vmul.f32 %v4378, %v4759
        %v4778 = vmul.f32 %v4348, %v4759
        %v4779 = vmul.f32 %v4349, %v4759
        %v4780 = vmul.f32 %v4379, %v4759
        %v4781 = vmul.f32 %v4350, %v4759
        %v4782 = vmul.f32 %v4351, %v4759
        %v4783 = vmul.f32 %v4380, %v4759
        %v4808 = vrot.slane %v4760, 4
        %v4809 = vrot.slane %v4761, 4
        %v4810 = vsel %vm2527, %v4808, %v4809
        %v4811 = vrot.slane %v4762, 4
        %v4812 = vsel %vm2527, %v4809, %v4811
        %v4813 = vrot.slane %v4763, 4
        %v4814 = vrot.slane %v4764, 4
        %v4815 = vsel %vm2527, %v4813, %v4814
        %v4816 = vrot.slane %v4765, 4
        %v4817 = vsel %vm2527, %v4814, %v4816
        %v4818 = vrot.slane %v4766, 4
        %v4819 = vrot.slane %v4767, 4
        %v4820 = vsel %vm2527, %v4818, %v4819
        %v4821 = vrot.slane %v4768, 4
        %v4822 = vsel %vm2527, %v4819, %v4821
        %v4823 = vrot.slane %v4769, 4
        %v4824 = vrot.slane %v4770, 4
        %v4825 = vsel %vm2527, %v4823, %v4824
        %v4826 = vrot.slane %v4771, 4
        %v4827 = vsel %vm2527, %v4824, %v4826
        %v4828 = vrot.slane %v4772, 4
        %v4829 = vrot.slane %v4773, 4
        %v4830 = vsel %vm2527, %v4828, %v4829
        %v4831 = vrot.slane %v4774, 4
        %v4832 = vsel %vm2527, %v4829, %v4831
        %v4833 = vrot.slane %v4775, 4
        %v4834 = vrot.slane %v4776, 4
        %v4835 = vsel %vm2527, %v4833, %v4834
        %v4836 = vrot.slane %v4777, 4
        %v4837 = vsel %vm2527, %v4834, %v4836
        %v4838 = vrot.slane %v4778, 4
        %v4839 = vrot.slane %v4779, 4
        %v4840 = vsel %vm2527, %v4838, %v4839
        %v4841 = vrot.slane %v4780, 4
        %v4842 = vsel %vm2527, %v4839, %v4841
        %v4843 = vrot.slane %v4781, 4
        %v4844 = vrot.slane %v4782, 4
        %v4845 = vsel %vm2527, %v4843, %v4844
        %v4846 = vrot.slane %v4783, 4
        %v4847 = vsel %vm2527, %v4844, %v4846
        %v4864 = vadd.f32 %v4739, %v4810
        %v4865 = vadd.f32 %v4740, %v4812
        %v4866 = vadd.f32 %v4741, %v4815
        %v4867 = vadd.f32 %v4742, %v4817
        %v4868 = vadd.f32 %v4743, %v4820
        %v4869 = vadd.f32 %v4744, %v4822
        %v4870 = vadd.f32 %v4745, %v4825
        %v4871 = vadd.f32 %v4746, %v4827
        %v4872 = vadd.f32 %v4747, %v4830
        %v4873 = vadd.f32 %v4748, %v4832
        %v4874 = vadd.f32 %v4749, %v4835
        %v4875 = vadd.f32 %v4750, %v4837
        %v4876 = vadd.f32 %v4751, %v4840
        %v4877 = vadd.f32 %v4752, %v4842
        %v4878 = vadd.f32 %v4753, %v4845
        %v4879 = vadd.f32 %v4754, %v4847
        %v4880 = vadd.f32 %v2584, %v3154
        %v4881 = vadd.f32 %v2585, %v3155
        %v4882 = vadd.f32 %v2586, %v3156
        %v4883 = vadd.f32 %v2587, %v3157
        %v4884 = vadd.f32 %v2588, %v3158
        %v4885 = vadd.f32 %v2589, %v3159
        %v4886 = vadd.f32 %v2590, %v3160
        %v4887 = vadd.f32 %v2591, %v3161
        %v4888 = vadd.f32 %v2592, %v3162
        %v4889 = vadd.f32 %v2593, %v3163
        %v4890 = vadd.f32 %v2594, %v3164
        %v4891 = vadd.f32 %v2595, %v3165
        %v4892 = vadd.f32 %v2596, %v3166
        %v4893 = vadd.f32 %v2597, %v3167
        %v4894 = vadd.f32 %v2598, %v3168
        %v4895 = vadd.f32 %v2599, %v3169
        %v4896 = vadd.f32 %v3724, %v4294
        %v4897 = vadd.f32 %v3725, %v4295
        %v4898 = vadd.f32 %v3726, %v4296
        %v4899 = vadd.f32 %v3727, %v4297
        %v4900 = vadd.f32 %v3728, %v4298
        %v4901 = vadd.f32 %v3729, %v4299
        %v4902 = vadd.f32 %v3730, %v4300
        %v4903 = vadd.f32 %v3731, %v4301
        %v4904 = vadd.f32 %v3732, %v4302
        %v4905 = vadd.f32 %v3733, %v4303
        %v4906 = vadd.f32 %v3734, %v4304
        %v4907 = vadd.f32 %v3735, %v4305
        %v4908 = vadd.f32 %v3736, %v4306
        %v4909 = vadd.f32 %v3737, %v4307
        %v4910 = vadd.f32 %v3738, %v4308
        %v4911 = vadd.f32 %v3739, %v4309
        %v4912 = vadd.f32 %v4880, %v4896
        %v4913 = vadd.f32 %v4881, %v4897
        %v4914 = vadd.f32 %v4882, %v4898
        %v4915 = vadd.f32 %v4883, %v4899
        %v4916 = vadd.f32 %v4884, %v4900
        %v4917 = vadd.f32 %v4885, %v4901
        %v4918 = vadd.f32 %v4886, %v4902
        %v4919 = vadd.f32 %v4887, %v4903
        %v4920 = vadd.f32 %v4888, %v4904
        %v4921 = vadd.f32 %v4889, %v4905
        %v4922 = vadd.f32 %v4890, %v4906
        %v4923 = vadd.f32 %v4891, %v4907
        %v4924 = vadd.f32 %v4892, %v4908
        %v4925 = vadd.f32 %v4893, %v4909
        %v4926 = vadd.f32 %v4894, %v4910
        %v4927 = vadd.f32 %v4895, %v4911
        %v4928 = vadd.f32 %v4912, %v4864
        %v4929 = vadd.f32 %v4913, %v4865
        %v4930 = vadd.f32 %v4914, %v4866
        %v4931 = vadd.f32 %v4915, %v4867
        %v4932 = vadd.f32 %v4916, %v4868
        %v4933 = vadd.f32 %v4917, %v4869
        %v4934 = vadd.f32 %v4918, %v4870
        %v4935 = vadd.f32 %v4919, %v4871
        %v4936 = vadd.f32 %v4920, %v4872
        %v4937 = vadd.f32 %v4921, %v4873
        %v4938 = vadd.f32 %v4922, %v4874
        %v4939 = vadd.f32 %v4923, %v4875
        %v4940 = vadd.f32 %v4924, %v4876
        %v4941 = vadd.f32 %v4925, %v4877
        %v4942 = vadd.f32 %v4926, %v4878
        %v4943 = vadd.f32 %v4927, %v4879
        %v4944 = vld [vmem:[%s5] sm:$0x1]
        %v4946 = vlaneseq
        %v4947 = vshrl.u32 %v4946, 7
        %v4948 = vsub.s32 0, %v4947
        %v4949 = vrot.slane %v4944, %v4948
        %v4951 = vadd.f32 %v4928, %v4949
        %v4952 = vadd.f32 %v4929, %v4949
        %v4953 = vadd.f32 %v4930, %v4949
        %v4954 = vadd.f32 %v4931, %v4949
        %v4955 = vadd.f32 %v4932, %v4949
        %v4956 = vadd.f32 %v4933, %v4949
        %v4957 = vadd.f32 %v4934, %v4949
        %v4958 = vadd.f32 %v4935, %v4949
        %v4959 = vadd.f32 %v4936, %v4949
        %v4960 = vadd.f32 %v4937, %v4949
        %v4961 = vadd.f32 %v4938, %v4949
        %v4962 = vadd.f32 %v4939, %v4949
        %v4963 = vadd.f32 %v4940, %v4949
        %v4964 = vadd.f32 %v4941, %v4949
        %v4965 = vadd.f32 %v4942, %v4949
        %v4966 = vadd.f32 %v4943, %v4949
        %v4967 = vsub.f32 0.0, %v4951
        %v4968 = vsub.f32 0.0, %v4952
        %v4969 = vsub.f32 0.0, %v4953
        %v4970 = vsub.f32 0.0, %v4954
        %v4971 = vsub.f32 0.0, %v4955
        %v4972 = vsub.f32 0.0, %v4956
        %v4973 = vsub.f32 0.0, %v4957
        %v4974 = vsub.f32 0.0, %v4958
        %v4975 = vsub.f32 0.0, %v4959
        %v4976 = vsub.f32 0.0, %v4960
        %v4977 = vsub.f32 0.0, %v4961
        %v4978 = vsub.f32 0.0, %v4962
        %v4979 = vsub.f32 0.0, %v4963
        %v4980 = vsub.f32 0.0, %v4964
        %v4981 = vsub.f32 0.0, %v4965
        %v4982 = vsub.f32 0.0, %v4966
        %v4983 = vmul.f32 %v4967, 1.442695
        %v4984 = vpow.pop %v4983
        %v4985 = vmul.f32 %v4968, 1.442695
        %v4986 = vpow.pop %v4985
        %v4987 = vmul.f32 %v4969, 1.442695
        %v4988 = vpow.pop %v4987
        %v4989 = vmul.f32 %v4970, 1.442695
        %v4990 = vpow.pop %v4989
        %v4991 = vmul.f32 %v4971, 1.442695
        %v4992 = vpow.pop %v4991
        %v4993 = vmul.f32 %v4972, 1.442695
        %v4994 = vpow.pop %v4993
        %v4995 = vmul.f32 %v4973, 1.442695
        %v4996 = vpow.pop %v4995
        %v4997 = vmul.f32 %v4974, 1.442695
        %v4998 = vpow.pop %v4997
        %v4999 = vmul.f32 %v4975, 1.442695
        %v5000 = vpow.pop %v4999
        %v5001 = vmul.f32 %v4976, 1.442695
        %v5002 = vpow.pop %v5001
        %v5003 = vmul.f32 %v4977, 1.442695
        %v5004 = vpow.pop %v5003
        %v5005 = vmul.f32 %v4978, 1.442695
        %v5006 = vpow.pop %v5005
        %v5007 = vmul.f32 %v4979, 1.442695
        %v5008 = vpow.pop %v5007
        %v5009 = vmul.f32 %v4980, 1.442695
        %v5010 = vpow.pop %v5009
        %v5011 = vmul.f32 %v4981, 1.442695
        %v5012 = vpow.pop %v5011
        %v5013 = vmul.f32 %v4982, 1.442695
        %v5014 = vpow.pop %v5013
        %v5015 = vadd.f32 %v4984, 1.0
        %v5016 = vadd.f32 %v4986, 1.0
        %v5017 = vadd.f32 %v4988, 1.0
        %v5018 = vadd.f32 %v4990, 1.0
        %v5019 = vadd.f32 %v4992, 1.0
        %v5020 = vadd.f32 %v4994, 1.0
        %v5021 = vadd.f32 %v4996, 1.0
        %v5022 = vadd.f32 %v4998, 1.0
        %v5023 = vadd.f32 %v5000, 1.0
        %v5024 = vadd.f32 %v5002, 1.0
        %v5025 = vadd.f32 %v5004, 1.0
        %v5026 = vadd.f32 %v5006, 1.0
        %v5027 = vadd.f32 %v5008, 1.0
        %v5028 = vadd.f32 %v5010, 1.0
        %v5029 = vadd.f32 %v5012, 1.0
        %v5030 = vadd.f32 %v5014, 1.0
        %v5031 = vrcp.pop %v5015
        %v5032 = vrcp.pop %v5016
        %v5033 = vrcp.pop %v5017
        %v5034 = vrcp.pop %v5018
        %v5035 = vrcp.pop %v5019
        %v5036 = vrcp.pop %v5020
        %v5037 = vrcp.pop %v5021
        %v5038 = vrcp.pop %v5022
        %v5039 = vrcp.pop %v5023
        %v5040 = vrcp.pop %v5024
        %v5041 = vrcp.pop %v5025
        %v5042 = vrcp.pop %v5026
        %v5043 = vrcp.pop %v5027
        %v5044 = vrcp.pop %v5028
        %v5045 = vrcp.pop %v5029
        %v5046 = vrcp.pop %v5030
        %v5047 = vmul.f32 %v4951, %v5031
        %v5048 = vmul.f32 %v4952, %v5032
        %v5049 = vmul.f32 %v4953, %v5033
        %v5050 = vmul.f32 %v4954, %v5034
        %v5051 = vmul.f32 %v4955, %v5035
        %v5052 = vmul.f32 %v4956, %v5036
        %v5053 = vmul.f32 %v4957, %v5037
        %v5054 = vmul.f32 %v4958, %v5038
        %v5055 = vmul.f32 %v4959, %v5039
        %v5056 = vmul.f32 %v4960, %v5040
        %v5057 = vmul.f32 %v4961, %v5041
        %v5058 = vmul.f32 %v4962, %v5042
        %v5059 = vmul.f32 %v4963, %v5043
        %v5060 = vmul.f32 %v4964, %v5044
        %v5061 = vmul.f32 %v4965, %v5045
        %v5062 = vmul.f32 %v4966, %v5046
        %v5063 = vld [vmem:[%s3170] sm:$0xe]
        %v5064 = vld [vmem:[%s3170 + $0x8] sm:$0x1]
        %v5065 = vld [vmem:[%s3170 + $0xc] sm:$0xe]
        %v5066 = vld [vmem:[%s3170 + $0x14] sm:$0x1]
        %v5067 = vld [vmem:[%s3170 + $0x18] sm:$0xe]
        %v5068 = vld [vmem:[%s3170 + $0x20] sm:$0x1]
        %v5069 = vld [vmem:[%s3170 + $0x24] sm:$0xe]
        %v5070 = vld [vmem:[%s3170 + $0x2c] sm:$0x1]
        %v5071 = vld [vmem:[%s3170 + $0x30] sm:$0xe]
        %v5072 = vld [vmem:[%s3170 + $0x38] sm:$0x1]
        %v5073 = vld [vmem:[%s3170 + $0x3c] sm:$0xe]
        %v5074 = vld [vmem:[%s3170 + $0x44] sm:$0x1]
        %v5075 = vld [vmem:[%s3170 + $0x48] sm:$0xe]
        %v5076 = vld [vmem:[%s3170 + $0x50] sm:$0x1]
        %v5077 = vld [vmem:[%s3170 + $0x54] sm:$0xe]
        %v5078 = vld [vmem:[%s3170 + $0x5c] sm:$0x1]
        %vm5103 = vcmask 1042432
        %vm5104 = vcmask 1046532
        %vm5105 = vmor %vm5103, %vm5104
        %v5106 = vrot.slane %v5063, 5
        %v5107 = vrot.slane %v5106, 4
        %v5108 = vrot.slane %v3172, 5
        %v5109 = vsel %vm5105, %v5107, %v5108
        %v5110 = vrot.slane %v5108, 4
        %v5111 = vrot.slane %v5064, 5
        %v5112 = vsel %vm5105, %v5110, %v5111
        %v5113 = vrot.slane %v5065, 5
        %v5114 = vrot.slane %v5113, 4
        %v5115 = vrot.slane %v3175, 5
        %v5116 = vsel %vm5105, %v5114, %v5115
        %v5117 = vrot.slane %v5115, 4
        %v5118 = vrot.slane %v5066, 5
        %v5119 = vsel %vm5105, %v5117, %v5118
        %v5120 = vrot.slane %v5067, 5
        %v5121 = vrot.slane %v5120, 4
        %v5122 = vrot.slane %v3178, 5
        %v5123 = vsel %vm5105, %v5121, %v5122
        %v5124 = vrot.slane %v5122, 4
        %v5125 = vrot.slane %v5068, 5
        %v5126 = vsel %vm5105, %v5124, %v5125
        %v5127 = vrot.slane %v5069, 5
        %v5128 = vrot.slane %v5127, 4
        %v5129 = vrot.slane %v3181, 5
        %v5130 = vsel %vm5105, %v5128, %v5129
        %v5131 = vrot.slane %v5129, 4
        %v5132 = vrot.slane %v5070, 5
        %v5133 = vsel %vm5105, %v5131, %v5132
        %v5134 = vrot.slane %v5071, 5
        %v5135 = vrot.slane %v5134, 4
        %v5136 = vrot.slane %v3184, 5
        %v5137 = vsel %vm5105, %v5135, %v5136
        %v5138 = vrot.slane %v5136, 4
        %v5139 = vrot.slane %v5072, 5
        %v5140 = vsel %vm5105, %v5138, %v5139
        %v5141 = vrot.slane %v5073, 5
        %v5142 = vrot.slane %v5141, 4
        %v5143 = vrot.slane %v3187, 5
        %v5144 = vsel %vm5105, %v5142, %v5143
        %v5145 = vrot.slane %v5143, 4
        %v5146 = vrot.slane %v5074, 5
        %v5147 = vsel %vm5105, %v5145, %v5146
        %v5148 = vrot.slane %v5075, 5
        %v5149 = vrot.slane %v5148, 4
        %v5150 = vrot.slane %v3190, 5
        %v5151 = vsel %vm5105, %v5149, %v5150
        %v5152 = vrot.slane %v5150, 4
        %v5153 = vrot.slane %v5076, 5
        %v5154 = vsel %vm5105, %v5152, %v5153
        %v5155 = vrot.slane %v5077, 5
        %v5156 = vrot.slane %v5155, 4
        %v5157 = vrot.slane %v3193, 5
        %v5158 = vsel %vm5105, %v5156, %v5157
        %v5159 = vrot.slane %v5157, 4
        %v5160 = vrot.slane %v5078, 5
        %v5161 = vsel %vm5105, %v5159, %v5160
        %5178 = vst [vmem:[%s324] sm:$0xf] %v5109
        %5179 = vst [vmem:[%s324 + $0x8] sm:$0xf] %v5112
        %5180 = vst [vmem:[%s324 + $0x10] sm:$0xf] %v5116
        %5181 = vst [vmem:[%s324 + $0x18] sm:$0xf] %v5119
        %5182 = vst [vmem:[%s324 + $0x20] sm:$0xf] %v5123
        %5183 = vst [vmem:[%s324 + $0x28] sm:$0xf] %v5126
        %5184 = vst [vmem:[%s324 + $0x30] sm:$0xf] %v5130
        %5185 = vst [vmem:[%s324 + $0x38] sm:$0xf] %v5133
        %5186 = vst [vmem:[%s324 + $0x40] sm:$0xf] %v5137
        %5187 = vst [vmem:[%s324 + $0x48] sm:$0xf] %v5140
        %5188 = vst [vmem:[%s324 + $0x50] sm:$0xf] %v5144
        %5189 = vst [vmem:[%s324 + $0x58] sm:$0xf] %v5147
        %5190 = vst [vmem:[%s324 + $0x60] sm:$0xf] %v5151
        %5191 = vst [vmem:[%s324 + $0x68] sm:$0xf] %v5154
        %5192 = vst [vmem:[%s324 + $0x70] sm:$0xf] %v5158
        %5193 = vst [vmem:[%s324 + $0x78] sm:$0xf] %v5161
        %v5194 = vpack.c.bf16 %v5048, %v5047
        %v5195 = vpack.c.bf16 %v5050, %v5049
        %v5196 = vpack.c.bf16 %v5052, %v5051
        %v5197 = vpack.c.bf16 %v5054, %v5053
        %v5198 = vpack.c.bf16 %v5056, %v5055
        %v5199 = vpack.c.bf16 %v5058, %v5057
        %v5200 = vpack.c.bf16 %v5060, %v5059
        %v5201 = vpack.c.bf16 %v5062, %v5061
        %v5210 = vunpack.c.l.b16 %v5194
        %v5211 = vunpack.c.h.b16 %v5194
        %v5212 = vunpack.c.l.b16 %v5195
        %v5213 = vunpack.c.h.b16 %v5195
        %v5214 = vunpack.c.l.b16 %v5196
        %v5215 = vunpack.c.h.b16 %v5196
        %v5216 = vunpack.c.l.b16 %v5197
        %v5217 = vunpack.c.h.b16 %v5197
        %v5218 = vunpack.c.l.b16 %v5198
        %v5219 = vunpack.c.h.b16 %v5198
        %v5220 = vunpack.c.l.b16 %v5199
        %v5221 = vunpack.c.h.b16 %v5199
        %v5222 = vunpack.c.l.b16 %v5200
        %v5223 = vunpack.c.h.b16 %v5200
        %v5224 = vunpack.c.l.b16 %v5201
        %v5225 = vunpack.c.h.b16 %v5201
        %v5226 = vpack.c.b16 %v5210, %v5210
        %v5227 = vpack.c.b16 %v5211, %v5211
        %v5228 = vpack.c.b16 %v5212, %v5212
        %v5229 = vpack.c.b16 %v5213, %v5213
        %v5230 = vpack.c.b16 %v5214, %v5214
        %v5231 = vpack.c.b16 %v5215, %v5215
        %v5232 = vpack.c.b16 %v5216, %v5216
        %v5233 = vpack.c.b16 %v5217, %v5217
        %v5234 = vpack.c.b16 %v5218, %v5218
        %v5235 = vpack.c.b16 %v5219, %v5219
        %v5236 = vpack.c.b16 %v5220, %v5220
        %v5237 = vpack.c.b16 %v5221, %v5221
        %v5238 = vpack.c.b16 %v5222, %v5222
        %v5239 = vpack.c.b16 %v5223, %v5223
        %v5240 = vpack.c.b16 %v5224, %v5224
        %v5241 = vpack.c.b16 %v5225, %v5225
        %5258 = vst [vmem:[%s324 + $0x4] sm:$0xf] %v5226
        %5259 = vst [vmem:[%s324 + $0xc] sm:$0xf] %v5227
        %5260 = vst [vmem:[%s324 + $0x14] sm:$0xf] %v5228
        %5261 = vst [vmem:[%s324 + $0x1c] sm:$0xf] %v5229
        %5262 = vst [vmem:[%s324 + $0x24] sm:$0xf] %v5230
        %5263 = vst [vmem:[%s324 + $0x2c] sm:$0xf] %v5231
        %5264 = vst [vmem:[%s324 + $0x34] sm:$0xf] %v5232
        %5265 = vst [vmem:[%s324 + $0x3c] sm:$0xf] %v5233
        %5266 = vst [vmem:[%s324 + $0x44] sm:$0xf] %v5234
        %5267 = vst [vmem:[%s324 + $0x4c] sm:$0xf] %v5235
        %5268 = vst [vmem:[%s324 + $0x54] sm:$0xf] %v5236
        %5269 = vst [vmem:[%s324 + $0x5c] sm:$0xf] %v5237
        %5270 = vst [vmem:[%s324 + $0x64] sm:$0xf] %v5238
        %5271 = vst [vmem:[%s324 + $0x6c] sm:$0xf] %v5239
        %5272 = vst [vmem:[%s324 + $0x74] sm:$0xf] %v5240
        %5273 = vst [vmem:[%s324 + $0x7c] sm:$0xf] %v5241
        %s5274 = sand.u32 %s186, 1
        %s5275 = scalar_lea.sflag [#allocation4], %s5274
        %s5276 = sand.u32 %s186, 1
        %s5277 = smul.addr %s5276, 128
        %s5278 = scalar_lea.vmem [#allocation3], %s5277
        // Predicated region
        $region45: #{tpu_custom_call.1} parent=43 // pred_check
          %p5279 = pneg %p196
        $region46: #{tpu_custom_call.1} parent=43 // pred_check_branch
          %5281 = sbr.rel (%p5279) target = $region48
        $region47: #{tpu_custom_call.1} parent=43 // pred_region
          %s5282 = smul.u32 8, %s25
          %s5284 = ssub.s32 2048, 2048
          %5285 = vsyncadd %s5275, %s5284
          %s5286 = smul.addr %s5282, 4
          %s5287 = smul.addr %s24, 64
          %s5288 = sadd.s32 %s5286, %s5287
          %s5289 = smul.addr %s5288, 64
          %s5290 = scalar_lea.hbm %s6, %s5289
          %s5291 = sshll.u32 %s5278, 4
          %s5292 = int_to_ptr.vmem [resolvable:$true] %s5291
          %5297 = dma.vmem_to_hbm [thread:$0]  %s5292, 2048, %s5290, %s5275, 128, 128, 8
        $region48: #{tpu_custom_call.1} parent=43 // pred_fallthru
          _
      $region44: #{tpu_custom_call.1} parent=5 // pred_fallthru
        _
      %p5298 = scmp.le.s32.totalorder 2, %s15
      // Predicated region
      $region49: #{tpu_custom_call.1} parent=5 // pred_check
        %p5299 = pneg %p5298
      $region50: #{tpu_custom_call.1} parent=5 // pred_check_branch
        %5301 = sbr.rel (%p5299) target = $region52
      $region51: #{tpu_custom_call.1} parent=5 // pred_region
        %s5302 = ssub.s32 %s15, 2
        // Predicated region
        $region53: #{tpu_custom_call.1} parent=51 // pred_check
          %p5303 = pneg %p202
        $region54: #{tpu_custom_call.1} parent=51 // pred_check_branch
          %5305 = sbr.rel (%p5303) target = $region56
        $region55: #{tpu_custom_call.1} parent=51 // pred_region
          %s5306 = sand.u32 %s187, 1
          %s5307 = scalar_lea.sflag [#allocation4], %s5306
          %s5308 = sand.u32 %s187, 1
          %s5309 = smul.addr %s5308, 128
          %s5310 = scalar_lea.vmem [#allocation3], %s5309
          %5311 = dma.done %s5307, 2048
        $region56: #{tpu_custom_call.1} parent=51 // pred_fallthru
          _
      $region52: #{tpu_custom_call.1} parent=5 // pred_fallthru
        _
    $region6: #{tpu_custom_call.1} parent=1 // loop_footer
      %s19 = sadd.s32 1, %s15
    $region7: #{tpu_custom_call.1} parent=1 // loop_footer_branch
      %14 = sbr.rel target = $region3
    $region8: #{tpu_custom_call.1} parent=1 // loop_exit
      _
    %5312 = vsyncpa [#allocation4], 1
    %s5313 = scalar_lea.sflag [#allocation4], 1
    %5314 = vsyncpa %s5313, 1

</llo_original>
